<compile_context>
chip_gen: v6e
topology: v6e:2x2x1
jax: 0.10.0
libtpu: 0.0.40
codegen_flags: <defaults>
</compile_context>

<pallas_src>
import functools

import jax
import jax.numpy as jnp
from jax.experimental import pallas as pl
from jax.experimental.pallas import tpu as pltpu


def _agg_kernel(x_ref, wq_ref, wkv_ref, wp_ref, bp_ref, segt_ref, o_ref, *,
                n_valid, approx_recip):
    tb, n, c = x_ref.shape                 # n may include host-side padding
    nh = segt_ref.shape[0]
    cdt = wq_ref.dtype                     # MXU compute dtype

    x3 = x_ref[...]                        # (TB, N, C) in compute dtype
    x2 = x3.reshape(tb * n, c)             # layout-free: n % 8 == 0 by host padding
    x0 = x3[:, 0, :]                       # (TB, C) class tokens (in-kernel slice)

    segt = segt_ref[...]                   # (H, C) f32, 0/1 head indicators

    # ---- projections: full-width MXU matmuls, f32 accumulation ------------
    q = jnp.dot(x0, wq_ref[...], preferred_element_type=jnp.float32)   # (TB, C)
    kv = jnp.dot(x2, wkv_ref[...], preferred_element_type=jnp.float32) # (TB*N, 2C)
    k = kv[:, :c].reshape(tb, n, c).astype(cdt)                        # (TB, N, C)
    v = kv[:, c:].reshape(tb, n, c).astype(cdt)                        # (TB, N, C)

    # ---- per-head class-attention logits (q folded into the head mask) ----
    # qseg[b,h,c] = q[b,c] if channel c belongs to head h else 0.
    qseg = (q[:, None, :] * segt[None, :, :]).astype(cdt)              # (TB, H, C)
    logits = jnp.einsum('bhc,bnc->bhn', qseg, k,
                        preferred_element_type=jnp.float32)            # (TB, H, N)

    if n != n_valid:                       # static: mask host-side token padding
        tok = jax.lax.broadcasted_iota(jnp.int32, logits.shape, 2)
        logits = jnp.where(tok < n_valid, logits, jnp.float32(-1e30))

    # ---- numerically stable softmax over tokens; normalization deferred ---
    m = jnp.max(logits, axis=2, keepdims=True)                         # (TB, H, 1)
    e = jnp.exp(logits - m)                                            # (TB, H, N)
    denom = jnp.sum(e, axis=2)                                         # (TB, H)

    # Token reduction on the MXU: tmp[b,h,c] = sum_n e[b,h,n] * v[b,n,c].
    tmp = jnp.einsum('bhn,bnc->bhc', e.astype(cdt), v,
                     preferred_element_type=jnp.float32)               # (TB, H, C)

    # Deferred 1/sum + per-head channel pick (tiny: H << N).
    inv = pl.reciprocal(denom, approx=approx_recip)                    # (TB, H)
    x_cls = jnp.sum(tmp * (inv[:, :, None] * segt[None, :, :]), axis=1)  # (TB, C)

    # ---- output projection (with bias) -------------------------------------
    y = jnp.dot(x_cls.astype(wp_ref.dtype), wp_ref[...],
                preferred_element_type=jnp.float32) + bp_ref[...]
    o_ref[...] = y.astype(o_ref.dtype)


def _vmem_budget():
    """Generation-aware scoped-VMEM limit (bytes)."""
    try:
        cap = int(pltpu.get_tpu_info().vmem_capacity_bytes)
    except Exception:
        cap = 64 * 1024 * 1024            # conservative: v7x per-core VMEM
    # ~3/4 of physical: 96 MiB on v5e/v6e (128 MiB), 48 MiB on v7x (64 MiB).
    return max(32 * 1024 * 1024, (cap * 3) // 4)


def _choose_tb(batch, n_pad, c, isz, vmem_limit, weight_bytes):
    """Largest sublane(8)-aligned batch tile that fits the per-step VMEM
    footprint and keeps >= 2 grid steps when the batch allows (v7x: 2 TCs)."""
    # Per batch-row footprint of one grid step (bytes), roughly:
    #   x tile (double-buffered input):        2 * n * c * isz
    #   kv f32 temporary + k/v in cdt:         n * c * (8 + 2*isz)
    #   logits / e / tmp / output:             small; covered by the slack term
    per_row = n_pad * c * (4 * isz + 8) + 16 * c
    avail = vmem_limit - weight_bytes - (4 << 20)          # 4 MiB misc slack
    cap = max(8, (avail // per_row) // 8 * 8) if avail > per_row else 8
    bpad = ((batch + 7) // 8) * 8
    if bpad >= 16:                                         # >= 2 grid steps
        cap = min(cap, max(8, (bpad // 2) // 8 * 8))
    return int(max(8, min(cap, bpad)))


def learned_aggregation(x, wq, wk, wv, wp, bp, *, num_heads,
                        compute_dtype=None, tb=None, approx_recip=False):
    """x: (B, N, C). Returns (B, 1, C) matching the PyTorch module."""
    B, N, C = x.shape
    assert C % num_heads == 0, "C must be divisible by num_heads"
    head_dim = C // num_heads
    scale = head_dim ** (-0.5)
    out_dtype = x.dtype

    if compute_dtype is None:
        compute_dtype = x.dtype
    cdt = jnp.dtype(compute_dtype)

    # Host-side prep: fused K/V weight, q-scale folded into Wq, 0/1 head map.
    wkv = jnp.concatenate([wk, wv], axis=1)                           # (C, 2C)
    wq_s = wq * scale                                                 # (C, C)
    segt = (jnp.arange(C)[None, :] // head_dim
            == jnp.arange(num_heads)[:, None]).astype(jnp.float32)   # (H, C)

    # Pad tokens to a sublane multiple -> in-kernel flatten is layout-free.
    n_pad = ((N + 7) // 8) * 8

    vmem_limit = _vmem_budget()
    weight_bytes = (4 * C * C) * cdt.itemsize * 2 + (C + num_heads * C) * 4 * 2
    if tb is None:
        tb = _choose_tb(B, n_pad, C, cdt.itemsize, vmem_limit, weight_bytes)
    tb = max(8, ((int(tb) + 7) // 8) * 8)
    b_pad = ((B + tb - 1) // tb) * tb

    x_c = x.astype(cdt)
    if b_pad != B or n_pad != N:
        x_c = jnp.pad(x_c, ((0, b_pad - B), (0, n_pad - N), (0, 0)))

    args = (x_c, wq_s.astype(cdt), wkv.astype(cdt), wp.astype(cdt),
            bp.astype(jnp.float32).reshape(1, C), segt)

    kernel = functools.partial(_agg_kernel, n_valid=N, approx_recip=approx_recip)

    def build(single_buffer_weights):
        def const(shape):
            kw = {"pipeline_mode": pl.Buffered(1)} if single_buffer_weights else {}
            return pl.BlockSpec(shape, lambda b: (0, 0), **kw)

        return pl.pallas_call(
            kernel,
            out_shape=jax.ShapeDtypeStruct((b_pad, C), out_dtype),
            grid_spec=pltpu.PrefetchScalarGridSpec(
                num_scalar_prefetch=0,
                grid=(b_pad // tb,),
                in_specs=[
                    pl.BlockSpec((tb, n_pad, C), lambda b: (b, 0, 0)),  # x tile
                    const((C, C)),               # Wq (scale folded in)
                    const((C, 2 * C)),           # Wkv (fused)
                    const((C, C)),               # Wp
                    const((1, C)),               # proj bias
                    const((num_heads, C)),       # head indicator (0/1)
                ],
                out_specs=pl.BlockSpec((tb, C), lambda b: (b, 0)),      # lane-dense
            ),
            compiler_params=pltpu.CompilerParams(
                dimension_semantics=("parallel",),
                vmem_limit_bytes=vmem_limit,
            ),
        )

    try:
        out2d = build(True)(*args)
    except Exception:
        # Fallback if this JAX build rejects pipeline_mode=pl.Buffered(1).
        out2d = build(False)(*args)

    return out2d[:B].reshape(B, 1, C)


def reference(x, wq, wk, wv, wp, bp, *, num_heads):
    """Pure-JAX reference mirroring the PyTorch forward."""
    B, N, C = x.shape
    hd = C // num_heads
    scale = hd ** (-0.5)
    q = (x[:, 0] @ wq).reshape(B, 1, num_heads, hd).transpose(0, 2, 1, 3) * scale
    k = (x @ wk).reshape(B, N, num_heads, hd).transpose(0, 2, 1, 3)
    v = (x @ wv).reshape(B, N, num_heads, hd).transpose(0, 2, 1, 3)
    attn = jnp.einsum('bhqd,bhkd->bhqk', q, k)
    attn = jax.nn.softmax(attn, axis=-1)
    x_cls = jnp.einsum('bhqk,bhkd->bhqd', attn, v).transpose(0, 2, 1, 3).reshape(B, 1, C)
    return x_cls @ wp + bp[None, :, :]


if __name__ == "__main__":
    def run_case(B, N, C, num_heads, key):
        kx, kq, kk, kvk, kp, kb = jax.random.split(key, 6)
        x = jax.random.normal(kx, (B, N, C), dtype=jnp.float32)
        wq = 0.02 * jax.random.normal(kq, (C, C), dtype=jnp.float32)
        wk = 0.02 * jax.random.normal(kk, (C, C), dtype=jnp.float32)
        wv = 0.02 * jax.random.normal(kvk, (C, C), dtype=jnp.float32)
        wp = 0.02 * jax.random.normal(kp, (C, C), dtype=jnp.float32)
        bp = 0.02 * jax.random.normal(kb, (1, C), dtype=jnp.float32)

        ref = reference(x, wq, wk, wv, wp, bp, num_heads=num_heads)

        # f32 path: must match the reference tightly.
        out = learned_aggregation(x, wq, wk, wv, wp, bp, num_heads=num_heads)
        out = jax.block_until_ready(out)
        assert out.shape == (B, 1, C)
        assert jnp.allclose(out, ref, atol=1e-4, rtol=1e-4), "f32 mismatch"

        # bf16 MXU-operand path (recommended on v6e/v7x): f32 accumulation.
        out_bf = learned_aggregation(x, wq, wk, wv, wp, bp, num_heads=num_heads,
                                     compute_dtype=jnp.bfloat16)
        out_bf = jax.block_until_ready(out_bf)
        assert out_bf.shape == (B, 1, C)
        assert jnp.allclose(out_bf.astype(jnp.float32), ref,
                            atol=3e-2, rtol=3e-2), "bf16 mismatch"

    key = jax.random.PRNGKey(0)
    k1, k2 = jax.random.split(key)
    run_case(8, 16, 128, 4, k1)    # lane-aligned shapes
    run_case(6, 13, 32, 2, k2)     # odd B/N: exercises batch/token padding + mask
    print("KERNEL_OK")
</pallas_src>

<mosaic_0001>
module attributes {stable_mosaic.version = 11 : i64} {
  func.func @_agg_kernel(%arg0: i32, %arg1: memref<8x16x128xf32, #tpu.memory_space<vmem>>, %arg2: memref<128x128xf32, #tpu.memory_space<vmem>>, %arg3: memref<128x256xf32, #tpu.memory_space<vmem>>, %arg4: memref<128x128xf32, #tpu.memory_space<vmem>>, %arg5: memref<1x128xf32, #tpu.memory_space<vmem>>, %arg6: memref<4x128xf32, #tpu.memory_space<vmem>>, %arg7: memref<8x128xf32, #tpu.memory_space<vmem>>) attributes {dimension_semantics = [#tpu.dimension_semantics<parallel>], iteration_bounds = array<i64: 1>, scalar_prefetch = 0 : i64, scratch_operands = 0 : i64, tpu.core_type = #tpu.core_type<tc>, window_params = [{transform_indices = @transform_0, window_bounds = array<i64: 8, 16, 128>}, {pipeline_mode = #tpu.pipeline_mode<synchronous>, transform_indices = @transform_1, window_bounds = array<i64: 128, 128>}, {pipeline_mode = #tpu.pipeline_mode<synchronous>, transform_indices = @transform_2, window_bounds = array<i64: 128, 256>}, {pipeline_mode = #tpu.pipeline_mode<synchronous>, transform_indices = @transform_3, window_bounds = array<i64: 128, 128>}, {pipeline_mode = #tpu.pipeline_mode<synchronous>, transform_indices = @transform_4, window_bounds = array<i64: 1, 128>}, {pipeline_mode = #tpu.pipeline_mode<synchronous>, transform_indices = @transform_5, window_bounds = array<i64: 4, 128>}, {transform_indices = @transform_6, window_bounds = array<i64: 8, 128>}]} {
    %c0 = arith.constant 0 : index
    %c0_0 = arith.constant 0 : index
    %c0_1 = arith.constant 0 : index
    %0 = vector.load %arg1[%c0, %c0_0, %c0_1] : memref<8x16x128xf32, #tpu.memory_space<vmem>>, vector<8x16x128xf32>
    %1 = vector.shape_cast %0 : vector<8x16x128xf32> to vector<128x128xf32>
    %2 = vector.extract_strided_slice %0 {offsets = [0, 0, 0], sizes = [8, 1, 128], strides = [1, 1, 1]} : vector<8x16x128xf32> to vector<8x1x128xf32>
    %3 = vector.shape_cast %2 : vector<8x1x128xf32> to vector<8x128xf32>
    %c0_2 = arith.constant 0 : index
    %c0_3 = arith.constant 0 : index
    %4 = vector.load %arg6[%c0_2, %c0_3] : memref<4x128xf32, #tpu.memory_space<vmem>>, vector<4x128xf32>
    %c0_4 = arith.constant 0 : index
    %c0_5 = arith.constant 0 : index
    %5 = vector.load %arg2[%c0_4, %c0_5] : memref<128x128xf32, #tpu.memory_space<vmem>>, vector<128x128xf32>
    %cst = arith.constant dense<0.000000e+00> : vector<8x128xf32>
    %6 = tpu.matmul %3, %5, %cst {dimension_numbers = #tpu.dot_dimension_numbers<[1], [0], [0], [1], [0, 0, 1, 1], [], []>} : vector<8x128xf32>, vector<128x128xf32>, vector<8x128xf32> -> vector<8x128xf32>
    %c0_6 = arith.constant 0 : index
    %c0_7 = arith.constant 0 : index
    %7 = vector.load %arg3[%c0_6, %c0_7] : memref<128x256xf32, #tpu.memory_space<vmem>>, vector<128x256xf32>
    %cst_8 = arith.constant dense<0.000000e+00> : vector<128x256xf32>
    %8 = tpu.matmul %1, %7, %cst_8 {dimension_numbers = #tpu.dot_dimension_numbers<[1], [0], [0], [1], [0, 0, 1, 1], [], []>} : vector<128x128xf32>, vector<128x256xf32>, vector<128x256xf32> -> vector<128x256xf32>
    %9 = vector.extract_strided_slice %8 {offsets = [0, 0], sizes = [128, 128], strides = [1, 1]} : vector<128x256xf32> to vector<128x128xf32>
    %10 = vector.shape_cast %9 : vector<128x128xf32> to vector<8x16x128xf32>
    %11 = vector.extract_strided_slice %8 {offsets = [0, 128], sizes = [128, 128], strides = [1, 1]} : vector<128x256xf32> to vector<128x128xf32>
    %12 = vector.shape_cast %11 : vector<128x128xf32> to vector<8x16x128xf32>
    %13 = vector.shape_cast %6 : vector<8x128xf32> to vector<8x1x128xf32>
    %14 = vector.shape_cast %4 : vector<4x128xf32> to vector<1x4x128xf32>
    %15 = vector.broadcast %13 : vector<8x1x128xf32> to vector<8x4x128xf32>
    %16 = vector.broadcast %14 : vector<1x4x128xf32> to vector<8x4x128xf32>
    %17 = arith.mulf %15, %16 : vector<8x4x128xf32>
    "tpu.trace_start"() <{level = 10 : i32, message = "bhc,bnc->bhn"}> : () -> ()
    %cst_9 = arith.constant dense<0.000000e+00> : vector<8x4x16xf32>
    %18 = tpu.matmul %17, %10, %cst_9 {dimension_numbers = #tpu.dot_dimension_numbers<[2], [2], [1], [1], [0, 0, 0, 1, 1, 1], [0], [0]>} : vector<8x4x128xf32>, vector<8x16x128xf32>, vector<8x4x16xf32> -> vector<8x4x16xf32>
    "tpu.trace_stop"() : () -> ()
    %cst_10 = arith.constant dense<0xFF800000> : vector<8x4xf32>
    %19 = vector.multi_reduction <maximumf>, %18, %cst_10 [2] : vector<8x4x16xf32> to vector<8x4xf32>
    %20 = vector.shape_cast %19 : vector<8x4xf32> to vector<8x4x1xf32>
    %21 = vector.broadcast %20 : vector<8x4x1xf32> to vector<8x4x16xf32>
    %22 = arith.subf %18, %21 : vector<8x4x16xf32>
    %23 = math.exp %22 : vector<8x4x16xf32>
    %cst_11 = arith.constant dense<0.000000e+00> : vector<8x4xf32>
    %24 = vector.multi_reduction <add>, %23, %cst_11 [2] : vector<8x4x16xf32> to vector<8x4xf32>
    "tpu.trace_start"() <{level = 10 : i32, message = "bhn,bnc->bhc"}> : () -> ()
    %cst_12 = arith.constant dense<0.000000e+00> : vector<8x4x128xf32>
    %25 = tpu.matmul %23, %12, %cst_12 {dimension_numbers = #tpu.dot_dimension_numbers<[2], [1], [1], [2], [0, 0, 0, 1, 1, 2], [0], [0]>} : vector<8x4x16xf32>, vector<8x16x128xf32>, vector<8x4x128xf32> -> vector<8x4x128xf32>
    "tpu.trace_stop"() : () -> ()
    %26 = tpu.reciprocal %24 : vector<8x4xf32> -> vector<8x4xf32>
    %27 = vector.shape_cast %26 : vector<8x4xf32> to vector<8x4x1xf32>
    %28 = vector.shape_cast %4 : vector<4x128xf32> to vector<1x4x128xf32>
    %29 = vector.broadcast %27 : vector<8x4x1xf32> to vector<8x4x128xf32>
    %30 = vector.broadcast %28 : vector<1x4x128xf32> to vector<8x4x128xf32>
    %31 = arith.mulf %29, %30 : vector<8x4x128xf32>
    %32 = arith.mulf %25, %31 : vector<8x4x128xf32>
    %cst_13 = arith.constant dense<0.000000e+00> : vector<8x128xf32>
    %33 = vector.multi_reduction <add>, %32, %cst_13 [1] : vector<8x4x128xf32> to vector<8x128xf32>
    %c0_14 = arith.constant 0 : index
    %c0_15 = arith.constant 0 : index
    %34 = vector.load %arg4[%c0_14, %c0_15] : memref<128x128xf32, #tpu.memory_space<vmem>>, vector<128x128xf32>
    %cst_16 = arith.constant dense<0.000000e+00> : vector<8x128xf32>
    %35 = tpu.matmul %33, %34, %cst_16 {dimension_numbers = #tpu.dot_dimension_numbers<[1], [0], [0], [1], [0, 0, 1, 1], [], []>} : vector<8x128xf32>, vector<128x128xf32>, vector<8x128xf32> -> vector<8x128xf32>
    %c0_17 = arith.constant 0 : index
    %c0_18 = arith.constant 0 : index
    %36 = vector.load %arg5[%c0_17, %c0_18] : memref<1x128xf32, #tpu.memory_space<vmem>>, vector<1x128xf32>
    %37 = vector.broadcast %36 : vector<1x128xf32> to vector<8x128xf32>
    %38 = arith.addf %35, %37 : vector<8x128xf32>
    %c0_19 = arith.constant 0 : index
    %c0_20 = arith.constant 0 : index
    %39 = vector.load %arg7[%c0_19, %c0_20] : memref<8x128xf32, #tpu.memory_space<vmem>>, vector<8x128xf32>
    tpu.vector_store %arg7[%c0_19, %c0_20], %38 {strides = array<i32>} : memref<8x128xf32, #tpu.memory_space<vmem>>, vector<8x128xf32>,
    return
  }
  func.func @transform_0(%arg0: i32) -> (i32, i32, i32) {
    %c0_i32 = arith.constant 0 : i32
    %c0_i32_0 = arith.constant 0 : i32
    %c0_i32_1 = arith.constant 0 : i32
    return %arg0, %c0_i32, %c0_i32_0 : i32, i32, i32
  }
  func.func @transform_1(%arg0: i32) -> (i32, i32) {
    %c0_i32 = arith.constant 0 : i32
    %c0_i32_0 = arith.constant 0 : i32
    %c0_i32_1 = arith.constant 0 : i32
    return %c0_i32, %c0_i32_0 : i32, i32
  }
  func.func @transform_2(%arg0: i32) -> (i32, i32) {
    %c0_i32 = arith.constant 0 : i32
    %c0_i32_0 = arith.constant 0 : i32
    %c0_i32_1 = arith.constant 0 : i32
    return %c0_i32, %c0_i32_0 : i32, i32
  }
  func.func @transform_3(%arg0: i32) -> (i32, i32) {
    %c0_i32 = arith.constant 0 : i32
    %c0_i32_0 = arith.constant 0 : i32
    %c0_i32_1 = arith.constant 0 : i32
    return %c0_i32, %c0_i32_0 : i32, i32
  }
  func.func @transform_4(%arg0: i32) -> (i32, i32) {
    %c0_i32 = arith.constant 0 : i32
    %c0_i32_0 = arith.constant 0 : i32
    %c0_i32_1 = arith.constant 0 : i32
    return %c0_i32, %c0_i32_0 : i32, i32
  }
  func.func @transform_5(%arg0: i32) -> (i32, i32) {
    %c0_i32 = arith.constant 0 : i32
    %c0_i32_0 = arith.constant 0 : i32
    %c0_i32_1 = arith.constant 0 : i32
    return %c0_i32, %c0_i32_0 : i32, i32
  }
  func.func @transform_6(%arg0: i32) -> (i32, i32) {
    %c0_i32 = arith.constant 0 : i32
    %c0_i32_0 = arith.constant 0 : i32
    return %arg0, %c0_i32 : i32, i32
  }
}

module attributes {stable_mosaic.version = 11 : i64} {
  func.func @_agg_kernel(%arg0: i32, %arg1: memref<8x16x128xf32, #tpu.memory_space<vmem>>, %arg2: memref<128x128xf32, #tpu.memory_space<vmem>>, %arg3: memref<128x256xf32, #tpu.memory_space<vmem>>, %arg4: memref<128x128xf32, #tpu.memory_space<vmem>>, %arg5: memref<1x128xf32, #tpu.memory_space<vmem>>, %arg6: memref<4x128xf32, #tpu.memory_space<vmem>>, %arg7: memref<8x128xf32, #tpu.memory_space<vmem>>) attributes {dimension_semantics = [#tpu.dimension_semantics<parallel>], iteration_bounds = array<i64: 1>, scalar_prefetch = 0 : i64, scratch_operands = 0 : i64, tpu.core_type = #tpu.core_type<tc>, window_params = [{transform_indices = @transform_0, window_bounds = array<i64: 8, 16, 128>}, {pipeline_mode = #tpu.pipeline_mode<synchronous>, transform_indices = @transform_1, window_bounds = array<i64: 128, 128>}, {pipeline_mode = #tpu.pipeline_mode<synchronous>, transform_indices = @transform_2, window_bounds = array<i64: 128, 256>}, {pipeline_mode = #tpu.pipeline_mode<synchronous>, transform_indices = @transform_3, window_bounds = array<i64: 128, 128>}, {pipeline_mode = #tpu.pipeline_mode<synchronous>, transform_indices = @transform_4, window_bounds = array<i64: 1, 128>}, {pipeline_mode = #tpu.pipeline_mode<synchronous>, transform_indices = @transform_5, window_bounds = array<i64: 4, 128>}, {transform_indices = @transform_6, window_bounds = array<i64: 8, 128>}]} {
    %c0 = arith.constant 0 : index
    %c0_0 = arith.constant 0 : index
    %c0_1 = arith.constant 0 : index
    %0 = vector.load %arg1[%c0, %c0_0, %c0_1] : memref<8x16x128xf32, #tpu.memory_space<vmem>>, vector<8x16x128xf32>
    %1 = vector.shape_cast %0 : vector<8x16x128xf32> to vector<128x128xf32>
    %2 = vector.extract_strided_slice %0 {offsets = [0, 0, 0], sizes = [8, 1, 128], strides = [1, 1, 1]} : vector<8x16x128xf32> to vector<8x1x128xf32>
    %3 = vector.shape_cast %2 : vector<8x1x128xf32> to vector<8x128xf32>
    %c0_2 = arith.constant 0 : index
    %c0_3 = arith.constant 0 : index
    %4 = vector.load %arg6[%c0_2, %c0_3] : memref<4x128xf32, #tpu.memory_space<vmem>>, vector<4x128xf32>
    %c0_4 = arith.constant 0 : index
    %c0_5 = arith.constant 0 : index
    %5 = vector.load %arg2[%c0_4, %c0_5] : memref<128x128xf32, #tpu.memory_space<vmem>>, vector<128x128xf32>
    %cst = arith.constant dense<0.000000e+00> : vector<8x128xf32>
    %6 = tpu.matmul %3, %5, %cst {dimension_numbers = #tpu.dot_dimension_numbers<[1], [0], [0], [1], [0, 0, 1, 1], [], []>} : vector<8x128xf32>, vector<128x128xf32>, vector<8x128xf32> -> vector<8x128xf32>
    %c0_6 = arith.constant 0 : index
    %c0_7 = arith.constant 0 : index
    %7 = vector.load %arg3[%c0_6, %c0_7] : memref<128x256xf32, #tpu.memory_space<vmem>>, vector<128x256xf32>
    %cst_8 = arith.constant dense<0.000000e+00> : vector<128x256xf32>
    %8 = tpu.matmul %1, %7, %cst_8 {dimension_numbers = #tpu.dot_dimension_numbers<[1], [0], [0], [1], [0, 0, 1, 1], [], []>} : vector<128x128xf32>, vector<128x256xf32>, vector<128x256xf32> -> vector<128x256xf32>
    %9 = vector.extract_strided_slice %8 {offsets = [0, 0], sizes = [128, 128], strides = [1, 1]} : vector<128x256xf32> to vector<128x128xf32>
    %10 = vector.shape_cast %9 : vector<128x128xf32> to vector<8x16x128xf32>
    %11 = vector.extract_strided_slice %8 {offsets = [0, 128], sizes = [128, 128], strides = [1, 1]} : vector<128x256xf32> to vector<128x128xf32>
    %12 = vector.shape_cast %11 : vector<128x128xf32> to vector<8x16x128xf32>
    %13 = vector.shape_cast %6 : vector<8x128xf32> to vector<8x1x128xf32>
    %14 = vector.shape_cast %4 : vector<4x128xf32> to vector<1x4x128xf32>
    %15 = vector.broadcast %13 : vector<8x1x128xf32> to vector<8x4x128xf32>
    %16 = vector.broadcast %14 : vector<1x4x128xf32> to vector<8x4x128xf32>
    %17 = arith.mulf %15, %16 : vector<8x4x128xf32>
    "tpu.trace_start"() <{level = 10 : i32, message = "bhc,bnc->bhn"}> : () -> ()
    %cst_9 = arith.constant dense<0.000000e+00> : vector<8x4x16xf32>
    %18 = tpu.matmul %17, %10, %cst_9 {dimension_numbers = #tpu.dot_dimension_numbers<[2], [2], [1], [1], [0, 0, 0, 1, 1, 1], [0], [0]>} : vector<8x4x128xf32>, vector<8x16x128xf32>, vector<8x4x16xf32> -> vector<8x4x16xf32>
    "tpu.trace_stop"() : () -> ()
    %cst_10 = arith.constant dense<0xFF800000> : vector<8x4xf32>
    %19 = vector.multi_reduction <maximumf>, %18, %cst_10 [2] : vector<8x4x16xf32> to vector<8x4xf32>
    %20 = vector.shape_cast %19 : vector<8x4xf32> to vector<8x4x1xf32>
    %21 = vector.broadcast %20 : vector<8x4x1xf32> to vector<8x4x16xf32>
    %22 = arith.subf %18, %21 : vector<8x4x16xf32>
    %23 = math.exp %22 : vector<8x4x16xf32>
    %cst_11 = arith.constant dense<0.000000e+00> : vector<8x4xf32>
    %24 = vector.multi_reduction <add>, %23, %cst_11 [2] : vector<8x4x16xf32> to vector<8x4xf32>
    "tpu.trace_start"() <{level = 10 : i32, message = "bhn,bnc->bhc"}> : () -> ()
    %cst_12 = arith.constant dense<0.000000e+00> : vector<8x4x128xf32>
    %25 = tpu.matmul %23, %12, %cst_12 {dimension_numbers = #tpu.dot_dimension_numbers<[2], [1], [1], [2], [0, 0, 0, 1, 1, 2], [0], [0]>} : vector<8x4x16xf32>, vector<8x16x128xf32>, vector<8x4x128xf32> -> vector<8x4x128xf32>
    "tpu.trace_stop"() : () -> ()
    %26 = tpu.reciprocal %24 : vector<8x4xf32> -> vector<8x4xf32>
    %27 = vector.shape_cast %26 : vector<8x4xf32> to vector<8x4x1xf32>
    %28 = vector.shape_cast %4 : vector<4x128xf32> to vector<1x4x128xf32>
    %29 = vector.broadcast %27 : vector<8x4x1xf32> to vector<8x4x128xf32>
    %30 = vector.broadcast %28 : vector<1x4x128xf32> to vector<8x4x128xf32>
    %31 = arith.mulf %29, %30 : vector<8x4x128xf32>
    %32 = arith.mulf %25, %31 : vector<8x4x128xf32>
    %cst_13 = arith.constant dense<0.000000e+00> : vector<8x128xf32>
    %33 = vector.multi_reduction <add>, %32, %cst_13 [1] : vector<8x4x128xf32> to vector<8x128xf32>
    %c0_14 = arith.constant 0 : index
    %c0_15 = arith.constant 0 : index
    %34 = vector.load %arg4[%c0_14, %c0_15] : memref<128x128xf32, #tpu.memory_space<vmem>>, vector<128x128xf32>
    %cst_16 = arith.constant dense<0.000000e+00> : vector<8x128xf32>
    %35 = tpu.matmul %33, %34, %cst_16 {dimension_numbers = #tpu.dot_dimension_numbers<[1], [0], [0], [1], [0, 0, 1, 1], [], []>} : vector<8x128xf32>, vector<128x128xf32>, vector<8x128xf32> -> vector<8x128xf32>
    %c0_17 = arith.constant 0 : index
    %c0_18 = arith.constant 0 : index
    %36 = vector.load %arg5[%c0_17, %c0_18] : memref<1x128xf32, #tpu.memory_space<vmem>>, vector<1x128xf32>
    %37 = vector.broadcast %36 : vector<1x128xf32> to vector<8x128xf32>
    %38 = arith.addf %35, %37 : vector<8x128xf32>
    %c0_19 = arith.constant 0 : index
    %c0_20 = arith.constant 0 : index
    %39 = vector.load %arg7[%c0_19, %c0_20] : memref<8x128xf32, #tpu.memory_space<vmem>>, vector<8x128xf32>
    tpu.vector_store %arg7[%c0_19, %c0_20], %38 {strides = array<i32>} : memref<8x128xf32, #tpu.memory_space<vmem>>, vector<8x128xf32>,
    return
  }
  func.func @transform_0(%arg0: i32) -> (i32, i32, i32) {
    %c0_i32 = arith.constant 0 : i32
    %c0_i32_0 = arith.constant 0 : i32
    %c0_i32_1 = arith.constant 0 : i32
    return %arg0, %c0_i32, %c0_i32_0 : i32, i32, i32
  }
  func.func @transform_1(%arg0: i32) -> (i32, i32) {
    %c0_i32 = arith.constant 0 : i32
    %c0_i32_0 = arith.constant 0 : i32
    %c0_i32_1 = arith.constant 0 : i32
    return %c0_i32, %c0_i32_0 : i32, i32
  }
  func.func @transform_2(%arg0: i32) -> (i32, i32) {
    %c0_i32 = arith.constant 0 : i32
    %c0_i32_0 = arith.constant 0 : i32
    %c0_i32_1 = arith.constant 0 : i32
    return %c0_i32, %c0_i32_0 : i32, i32
  }
  func.func @transform_3(%arg0: i32) -> (i32, i32) {
    %c0_i32 = arith.constant 0 : i32
    %c0_i32_0 = arith.constant 0 : i32
    %c0_i32_1 = arith.constant 0 : i32
    return %c0_i32, %c0_i32_0 : i32, i32
  }
  func.func @transform_4(%arg0: i32) -> (i32, i32) {
    %c0_i32 = arith.constant 0 : i32
    %c0_i32_0 = arith.constant 0 : i32
    %c0_i32_1 = arith.constant 0 : i32
    return %c0_i32, %c0_i32_0 : i32, i32
  }
  func.func @transform_5(%arg0: i32) -> (i32, i32) {
    %c0_i32 = arith.constant 0 : i32
    %c0_i32_0 = arith.constant 0 : i32
    %c0_i32_1 = arith.constant 0 : i32
    return %c0_i32, %c0_i32_0 : i32, i32
  }
  func.func @transform_6(%arg0: i32) -> (i32, i32) {
    %c0_i32 = arith.constant 0 : i32
    %c0_i32_0 = arith.constant 0 : i32
    return %arg0, %c0_i32 : i32, i32
  }
}

</mosaic_0001>

<llo_original>
// kernel: tpu_custom_call.1
$region0: #{tpu_custom_call.1}
  #allocation0 [shape = 'u32[]', space=smem, size = 0x4, offset = 0x4, fixed_abs, tag = 'smem constant byte address 0x4 - core index']
  #allocation1 [shape = 'u32[144,128]{1,0:T(1,128)}', space=vmem, size = 0x12000, scoped, tag = 'internal scratch']
  %s0 = inlined_call_operand.hbm [shape: f32[8,16,128], index: 0, kind: input, shape index: {}]
  %s1 = inlined_call_operand.hbm [shape: f32[128,128], index: 1, kind: input, shape index: {}]
  %s2 = inlined_call_operand.hbm [shape: f32[128,256], index: 2, kind: input, shape index: {}]
  %s3 = inlined_call_operand.hbm [shape: f32[128,128], index: 3, kind: input, shape index: {}]
  %s4 = inlined_call_operand.vmem [shape: f32[1,128], index: 4, kind: input, shape index: {}]
  %s5 = inlined_call_operand.vmem [shape: f32[4,128], index: 5, kind: input, shape index: {}]
  %s6 = inlined_call_operand.hbm [shape: f32[8,128], index: 6, kind: output, shape index: {}]
  %s7 = sld [smem:[#allocation0]]
  $region50: #{tpu_custom_call.1} parent=0
    _
  %s9 = ssub.s32 1, %s7
  %s10 = scalar_select 0, %s9, %s7
  $region1: #{tpu_custom_call.1} parent=0
    #allocation2 [shape = 'u8[65536]{0}', space=vmem, size = 0x10000, scoped, tag = 'input window, operand 0, single buffered']
    #allocation3 [shape = 's32[1]{0}', space=sflag, size = 0x4, scoped, tag = 'scoped memory for tpu_custom_call.1']
    #allocation4 [shape = 's32[1]{0}', space=sflag, size = 0x4, scoped, tag = 'scoped memory for tpu_custom_call.1']
    #allocation5 [shape = 'u8[65536]{0}', space=vmem, size = 0x10000, scoped, tag = 'input window, operand 1, single buffered']
    #allocation6 [shape = 's32[1]{0}', space=sflag, size = 0x4, scoped, tag = 'scoped memory for tpu_custom_call.1']
    #allocation7 [shape = 'u8[131072]{0}', space=vmem, size = 0x20000, scoped, tag = 'input window, operand 2, single buffered']
    #allocation8 [shape = 'u8[65536]{0}', space=vmem, size = 0x10000, scoped, tag = 'input window, operand 3, single buffered']
    #allocation9 [shape = 's32[1]{0}', space=sflag, size = 0x4, scoped, tag = 'scoped memory for tpu_custom_call.1']
    #allocation10 [shape = 'u8[4096]{0}', space=vmem, size = 0x1000, scoped, tag = 'output window, operand 0, single buffered']
    %11 = vsyncpa [#allocation3], 0
    %12 = vsyncpa [#allocation6], 0
    %13 = vsyncpa [#allocation9], 0
    %14 = vsyncpa [#allocation4], 0
    // Predicated region
    $region2: #{tpu_custom_call.1} parent=1 // pred_check
      _
    $region3: #{tpu_custom_call.1} parent=1 // pred_check_branch
      %16 = sbr.rel (0) target = $region5
    $region4: #{tpu_custom_call.1} parent=1 // pred_region
      %s18 = ssub.s32 2048, 2048
      %19 = vsyncadd [#allocation3], %s18
      %s20 = sshll.u32 [#allocation2], 4
      %s21 = int_to_ptr.vmem [resolvable:$true] %s20
      %26 = dma.hbm_to_vmem [thread:$0]  %s0, 2048, %s21, [#allocation3], 128, 128, 8
    $region5: #{tpu_custom_call.1} parent=1 // pred_fallthru
      _
    // Predicated region
    $region6: #{tpu_custom_call.1} parent=1 // pred_check
      _
    $region7: #{tpu_custom_call.1} parent=1 // pred_check_branch
      %28 = sbr.rel (0) target = $region9
    $region8: #{tpu_custom_call.1} parent=1 // pred_region
      %s30 = ssub.s32 2048, 2048
      %31 = vsyncadd [#allocation6], %s30
      %s32 = sshll.u32 [#allocation5], 4
      %s33 = int_to_ptr.vmem [resolvable:$true] %s32
      %38 = dma.hbm_to_vmem [thread:$0]  %s1, 2048, %s33, [#allocation6], 128, 128, 8
    $region9: #{tpu_custom_call.1} parent=1 // pred_fallthru
      _
    // Predicated region
    $region10: #{tpu_custom_call.1} parent=1 // pred_check
      _
    $region11: #{tpu_custom_call.1} parent=1 // pred_check_branch
      %40 = sbr.rel (0) target = $region13
    $region12: #{tpu_custom_call.1} parent=1 // pred_region
      %s42 = ssub.s32 4096, 4096
      %43 = vsyncadd [#allocation6], %s42
      %s44 = sshll.u32 [#allocation7], 4
      %s45 = int_to_ptr.vmem [resolvable:$true] %s44
      %50 = dma.hbm_to_vmem [thread:$0]  %s2, 4096, %s45, [#allocation6], 256, 256, 16
    $region13: #{tpu_custom_call.1} parent=1 // pred_fallthru
      _
    // Predicated region
    $region14: #{tpu_custom_call.1} parent=1 // pred_check
      _
    $region15: #{tpu_custom_call.1} parent=1 // pred_check_branch
      %52 = sbr.rel (0) target = $region17
    $region16: #{tpu_custom_call.1} parent=1 // pred_region
      %s54 = ssub.s32 2048, 2048
      %55 = vsyncadd [#allocation9], %s54
      %s56 = sshll.u32 [#allocation8], 4
      %s57 = int_to_ptr.vmem [resolvable:$true] %s56
      %62 = dma.hbm_to_vmem [thread:$0]  %s3, 2048, %s57, [#allocation9], 128, 128, 8
    $region17: #{tpu_custom_call.1} parent=1 // pred_fallthru
      _
    // Predicated region
    $region18: #{tpu_custom_call.1} parent=1 // pred_check
      _
    $region19: #{tpu_custom_call.1} parent=1 // pred_check_branch
      %64 = sbr.rel (0) target = $region21
    $region20: #{tpu_custom_call.1} parent=1 // pred_region
      _
    $region21: #{tpu_custom_call.1} parent=1 // pred_fallthru
      _
    // Predicated region
    $region22: #{tpu_custom_call.1} parent=1 // pred_check
      _
    $region23: #{tpu_custom_call.1} parent=1 // pred_check_branch
      %66 = sbr.rel (0) target = $region25
    $region24: #{tpu_custom_call.1} parent=1 // pred_region
      _
    $region25: #{tpu_custom_call.1} parent=1 // pred_fallthru
      _
    // Predicated region
    $region26: #{tpu_custom_call.1} parent=1 // pred_check
      _
    $region27: #{tpu_custom_call.1} parent=1 // pred_check_branch
      %68 = sbr.rel (0) target = $region29
    $region28: #{tpu_custom_call.1} parent=1 // pred_region
      %69 = dma.done [#allocation3], 2048
    $region29: #{tpu_custom_call.1} parent=1 // pred_fallthru
      _
    // Predicated region
    $region30: #{tpu_custom_call.1} parent=1 // pred_check
      _
    $region31: #{tpu_custom_call.1} parent=1 // pred_check_branch
      %71 = sbr.rel (0) target = $region33
    $region32: #{tpu_custom_call.1} parent=1 // pred_region
      %72 = dma.done [#allocation6], 2048
    $region33: #{tpu_custom_call.1} parent=1 // pred_fallthru
      _
    // Predicated region
    $region34: #{tpu_custom_call.1} parent=1 // pred_check
      _
    $region35: #{tpu_custom_call.1} parent=1 // pred_check_branch
      %74 = sbr.rel (0) target = $region37
    $region36: #{tpu_custom_call.1} parent=1 // pred_region
      %75 = dma.done [#allocation6], 4096
    $region37: #{tpu_custom_call.1} parent=1 // pred_fallthru
      _
    // Predicated region
    $region38: #{tpu_custom_call.1} parent=1 // pred_check
      _
    $region39: #{tpu_custom_call.1} parent=1 // pred_check_branch
      %77 = sbr.rel (0) target = $region41
    $region40: #{tpu_custom_call.1} parent=1 // pred_region
      %78 = dma.done [#allocation9], 2048
    $region41: #{tpu_custom_call.1} parent=1 // pred_fallthru
      _
    %v79 = vld [vmem:[#allocation2] sm:$0xff]
    %v80 = vld [vmem:[#allocation2 + $0x8] sm:$0xff]
    %v81 = vld [vmem:[#allocation2 + $0x10] sm:$0xff]
    %v82 = vld [vmem:[#allocation2 + $0x18] sm:$0xff]
    %v83 = vld [vmem:[#allocation2 + $0x20] sm:$0xff]
    %v84 = vld [vmem:[#allocation2 + $0x28] sm:$0xff]
    %v85 = vld [vmem:[#allocation2 + $0x30] sm:$0xff]
    %v86 = vld [vmem:[#allocation2 + $0x38] sm:$0xff]
    %v87 = vld [vmem:[#allocation2 + $0x40] sm:$0xff]
    %v88 = vld [vmem:[#allocation2 + $0x48] sm:$0xff]
    %v89 = vld [vmem:[#allocation2 + $0x50] sm:$0xff]
    %v90 = vld [vmem:[#allocation2 + $0x58] sm:$0xff]
    %v91 = vld [vmem:[#allocation2 + $0x60] sm:$0xff]
    %v92 = vld [vmem:[#allocation2 + $0x68] sm:$0xff]
    %v93 = vld [vmem:[#allocation2 + $0x70] sm:$0xff]
    %v94 = vld [vmem:[#allocation2 + $0x78] sm:$0xff]
    %v95 = vld [vmem:[%s5] sm:$0xf]
    %v96 = vld [vmem:[#allocation5] sm:$0xff]
    %v97 = vld [vmem:[#allocation5 + $0x8] sm:$0xff]
    %v98 = vld [vmem:[#allocation5 + $0x10] sm:$0xff]
    %v99 = vld [vmem:[#allocation5 + $0x18] sm:$0xff]
    %v100 = vld [vmem:[#allocation5 + $0x20] sm:$0xff]
    %v101 = vld [vmem:[#allocation5 + $0x28] sm:$0xff]
    %v102 = vld [vmem:[#allocation5 + $0x30] sm:$0xff]
    %v103 = vld [vmem:[#allocation5 + $0x38] sm:$0xff]
    %v104 = vld [vmem:[#allocation5 + $0x40] sm:$0xff]
    %v105 = vld [vmem:[#allocation5 + $0x48] sm:$0xff]
    %v106 = vld [vmem:[#allocation5 + $0x50] sm:$0xff]
    %v107 = vld [vmem:[#allocation5 + $0x58] sm:$0xff]
    %v108 = vld [vmem:[#allocation5 + $0x60] sm:$0xff]
    %v109 = vld [vmem:[#allocation5 + $0x68] sm:$0xff]
    %v110 = vld [vmem:[#allocation5 + $0x70] sm:$0xff]
    %v111 = vld [vmem:[#allocation5 + $0x78] sm:$0xff]
    %v120 = vrot.slane %v81, 7
    %vm121 = vcmask 1041409
    %v122 = vsel %vm121, %v120, %v79
    %v123 = vrot.slane %v83, 6
    %vm124 = vcmask 1042434
    %v125 = vsel %vm124, %v123, %v122
    %v126 = vrot.slane %v85, 5
    %vm127 = vcmask 1043459
    %v128 = vsel %vm127, %v126, %v125
    %v129 = vrot.slane %v87, 4
    %vm130 = vcmask 1044484
    %v131 = vsel %vm130, %v129, %v128
    %v132 = vrot.slane %v89, 3
    %vm133 = vcmask 1045509
    %v134 = vsel %vm133, %v132, %v131
    %v135 = vrot.slane %v91, 2
    %vm136 = vcmask 1046534
    %v137 = vsel %vm136, %v135, %v134
    %v138 = vrot.slane %v93, 1
    %vm139 = vcmask 1047559
    %v140 = vsel %vm139, %v138, %v137
    %142 = vmatprep.subr.mxu0 0.0
    %143 = vmatpush1.msra.mxu0 %v111
    %144 = vmatprep.subr.mxu0 0.0
    %145 = vmatpush1.msra.mxu0 %v110
    %146 = vmatprep.subr.mxu0 0.0
    %147 = vmatpush1.msra.mxu0 %v109
    %148 = vmatprep.subr.mxu0 0.0
    %149 = vmatpush1.msra.mxu0 %v108
    %150 = vmatprep.subr.mxu0 0.0
    %151 = vmatpush1.msra.mxu0 %v107
    %152 = vmatprep.subr.mxu0 0.0
    %153 = vmatpush1.msra.mxu0 %v106
    %154 = vmatprep.subr.mxu0 0.0
    %155 = vmatpush1.msra.mxu0 %v105
    %156 = vmatprep.subr.mxu0 0.0
    %157 = vmatpush1.msra.mxu0 %v104
    %158 = vmatprep.subr.mxu0 0.0
    %159 = vmatpush1.msra.mxu0 %v103
    %160 = vmatprep.subr.mxu0 0.0
    %161 = vmatpush1.msra.mxu0 %v102
    %162 = vmatprep.subr.mxu0 0.0
    %163 = vmatpush1.msra.mxu0 %v101
    %164 = vmatprep.subr.mxu0 0.0
    %165 = vmatpush1.msra.mxu0 %v100
    %166 = vmatprep.subr.mxu0 0.0
    %167 = vmatpush1.msra.mxu0 %v99
    %168 = vmatprep.subr.mxu0 0.0
    %169 = vmatpush1.msra.mxu0 %v98
    %170 = vmatprep.subr.mxu0 0.0
    %171 = vmatpush1.msra.mxu0 %v97
    %172 = vmatprep.subr.mxu0 0.0
    %173 = vmatpush1.msra.mxu0 %v96
    %174 = vmatprep.subr.mxu0 0.0
    %175 = vmatpush2.msra.mxu0 0.0
    %176 = vmatprep.subr.mxu0 0.0
    %177 = vmatpush2.msra.mxu0 0.0
    %178 = vmatprep.subr.mxu0 0.0
    %179 = vmatpush2.msra.mxu0 0.0
    %180 = vmatprep.subr.mxu0 0.0
    %181 = vmatpush2.msra.mxu0 0.0
    %182 = vmatprep.subr.mxu0 0.0
    %183 = vmatpush2.msra.mxu0 0.0
    %184 = vmatprep.subr.mxu0 0.0
    %185 = vmatpush2.msra.mxu0 0.0
    %186 = vmatprep.subr.mxu0 0.0
    %187 = vmatpush2.msra.mxu0 0.0
    %188 = vmatprep.subr.mxu0 0.0
    %189 = vmatpush2.msra.mxu0 0.0
    %190 = vmatprep.subr.mxu0 0.0
    %191 = vmatpush2.msra.mxu0 0.0
    %192 = vmatprep.subr.mxu0 0.0
    %193 = vmatpush2.msra.mxu0 0.0
    %194 = vmatprep.subr.mxu0 0.0
    %195 = vmatpush2.msra.mxu0 0.0
    %196 = vmatprep.subr.mxu0 0.0
    %197 = vmatpush2.msra.mxu0 0.0
    %198 = vmatprep.subr.mxu0 0.0
    %199 = vmatpush2.msra.mxu0 0.0
    %200 = vmatprep.subr.mxu0 0.0
    %201 = vmatpush2.msra.mxu0 0.0
    %202 = vmatprep.subr.mxu0 0.0
    %203 = vmatpush2.msra.mxu0 0.0
    %204 = vmatprep.subr.mxu0 0.0
    %205 = vmatpush2.msra.mxu0 0.0
    %206 = vmatprep.mubr.f32.mxu0 0.0
    %207 = vmatmul.mubr.f32.gmra.mxu0 %v140
    %v208 = vpop.f32.mrf.mxu0
    %v209 = vadd.f32 0.0, %v208
    %v210 = vpop.f32.mrf.mxu0
    %211 = vdwg.mxu0
    %v212 = vld [vmem:[#allocation7] sm:$0xff]
    %v213 = vld [vmem:[#allocation7 + $0x8] sm:$0xff]
    %v214 = vld [vmem:[#allocation7 + $0x10] sm:$0xff]
    %v215 = vld [vmem:[#allocation7 + $0x18] sm:$0xff]
    %v216 = vld [vmem:[#allocation7 + $0x20] sm:$0xff]
    %v217 = vld [vmem:[#allocation7 + $0x28] sm:$0xff]
    %v218 = vld [vmem:[#allocation7 + $0x30] sm:$0xff]
    %v219 = vld [vmem:[#allocation7 + $0x38] sm:$0xff]
    %v220 = vld [vmem:[#allocation7 + $0x40] sm:$0xff]
    %v221 = vld [vmem:[#allocation7 + $0x48] sm:$0xff]
    %v222 = vld [vmem:[#allocation7 + $0x50] sm:$0xff]
    %v223 = vld [vmem:[#allocation7 + $0x58] sm:$0xff]
    %v224 = vld [vmem:[#allocation7 + $0x60] sm:$0xff]
    %v225 = vld [vmem:[#allocation7 + $0x68] sm:$0xff]
    %v226 = vld [vmem:[#allocation7 + $0x70] sm:$0xff]
    %v227 = vld [vmem:[#allocation7 + $0x78] sm:$0xff]
    %v228 = vld [vmem:[#allocation7 + $0x80] sm:$0xff]
    %v229 = vld [vmem:[#allocation7 + $0x88] sm:$0xff]
    %v230 = vld [vmem:[#allocation7 + $0x90] sm:$0xff]
    %v231 = vld [vmem:[#allocation7 + $0x98] sm:$0xff]
    %v232 = vld [vmem:[#allocation7 + $0xa0] sm:$0xff]
    %v233 = vld [vmem:[#allocation7 + $0xa8] sm:$0xff]
    %v234 = vld [vmem:[#allocation7 + $0xb0] sm:$0xff]
    %v235 = vld [vmem:[#allocation7 + $0xb8] sm:$0xff]
    %v236 = vld [vmem:[#allocation7 + $0xc0] sm:$0xff]
    %v237 = vld [vmem:[#allocation7 + $0xc8] sm:$0xff]
    %v238 = vld [vmem:[#allocation7 + $0xd0] sm:$0xff]
    %v239 = vld [vmem:[#allocation7 + $0xd8] sm:$0xff]
    %v240 = vld [vmem:[#allocation7 + $0xe0] sm:$0xff]
    %v241 = vld [vmem:[#allocation7 + $0xe8] sm:$0xff]
    %v242 = vld [vmem:[#allocation7 + $0xf0] sm:$0xff]
    %v243 = vld [vmem:[#allocation7 + $0xf8] sm:$0xff]
    %244 = vmatprep.subr.mxu0 %v243
    %245 = vmatpush1.msra.mxu0 %v242
    %246 = vmatprep.subr.mxu0 %v241
    %247 = vmatpush1.msra.mxu0 %v240
    %248 = vmatprep.subr.mxu0 %v239
    %249 = vmatpush1.msra.mxu0 %v238
    %250 = vmatprep.subr.mxu0 %v237
    %251 = vmatpush1.msra.mxu0 %v236
    %252 = vmatprep.subr.mxu0 %v235
    %253 = vmatpush1.msra.mxu0 %v234
    %254 = vmatprep.subr.mxu0 %v233
    %255 = vmatpush1.msra.mxu0 %v232
    %256 = vmatprep.subr.mxu0 %v231
    %257 = vmatpush1.msra.mxu0 %v230
    %258 = vmatprep.subr.mxu0 %v229
    %259 = vmatpush1.msra.mxu0 %v228
    %260 = vmatprep.subr.mxu0 %v227
    %261 = vmatpush1.msra.mxu0 %v226
    %262 = vmatprep.subr.mxu0 %v225
    %263 = vmatpush1.msra.mxu0 %v224
    %264 = vmatprep.subr.mxu0 %v223
    %265 = vmatpush1.msra.mxu0 %v222
    %266 = vmatprep.subr.mxu0 %v221
    %267 = vmatpush1.msra.mxu0 %v220
    %268 = vmatprep.subr.mxu0 %v219
    %269 = vmatpush1.msra.mxu0 %v218
    %270 = vmatprep.subr.mxu0 %v217
    %271 = vmatpush1.msra.mxu0 %v216
    %272 = vmatprep.subr.mxu0 %v215
    %273 = vmatpush1.msra.mxu0 %v214
    %274 = vmatprep.subr.mxu0 %v213
    %275 = vmatpush1.msra.mxu0 %v212
    %276 = vmatprep.subr.mxu0 0.0
    %277 = vmatpush2.msra.mxu0 0.0
    %278 = vmatprep.subr.mxu0 0.0
    %279 = vmatpush2.msra.mxu0 0.0
    %280 = vmatprep.subr.mxu0 0.0
    %281 = vmatpush2.msra.mxu0 0.0
    %282 = vmatprep.subr.mxu0 0.0
    %283 = vmatpush2.msra.mxu0 0.0
    %284 = vmatprep.subr.mxu0 0.0
    %285 = vmatpush2.msra.mxu0 0.0
    %286 = vmatprep.subr.mxu0 0.0
    %287 = vmatpush2.msra.mxu0 0.0
    %288 = vmatprep.subr.mxu0 0.0
    %289 = vmatpush2.msra.mxu0 0.0
    %290 = vmatprep.subr.mxu0 0.0
    %291 = vmatpush2.msra.mxu0 0.0
    %292 = vmatprep.subr.mxu0 0.0
    %293 = vmatpush2.msra.mxu0 0.0
    %294 = vmatprep.subr.mxu0 0.0
    %295 = vmatpush2.msra.mxu0 0.0
    %296 = vmatprep.subr.mxu0 0.0
    %297 = vmatpush2.msra.mxu0 0.0
    %298 = vmatprep.subr.mxu0 0.0
    %299 = vmatpush2.msra.mxu0 0.0
    %300 = vmatprep.subr.mxu0 0.0
    %301 = vmatpush2.msra.mxu0 0.0
    %302 = vmatprep.subr.mxu0 0.0
    %303 = vmatpush2.msra.mxu0 0.0
    %304 = vmatprep.subr.mxu0 0.0
    %305 = vmatpush2.msra.mxu0 0.0
    %306 = vmatprep.subr.mxu0 0.0
    %307 = vmatpush2.msra.mxu0 0.0
    %308 = vmatprep.mubr.f32.mxu0 0.0
    %309 = vmatmul.mubr.f32.gmra.mxu0 %v79
    %v310 = vpop.f32.mrf.mxu0
    %v311 = vadd.f32 0.0, %v310
    %v312 = vpop.f32.mrf.mxu0
    %v313 = vadd.f32 0.0, %v312
    %314 = vmatprep.mubr.f32.mxu0 0.0
    %315 = vmatmul.mubr.f32.gmra.mxu0 %v80
    %v316 = vpop.f32.mrf.mxu0
    %v317 = vadd.f32 0.0, %v316
    %v318 = vpop.f32.mrf.mxu0
    %v319 = vadd.f32 0.0, %v318
    %320 = vmatprep.mubr.f32.mxu0 0.0
    %321 = vmatmul.mubr.f32.gmra.mxu0 %v81
    %v322 = vpop.f32.mrf.mxu0
    %v323 = vadd.f32 0.0, %v322
    %v324 = vpop.f32.mrf.mxu0
    %v325 = vadd.f32 0.0, %v324
    %326 = vmatprep.mubr.f32.mxu0 0.0
    %327 = vmatmul.mubr.f32.gmra.mxu0 %v82
    %v328 = vpop.f32.mrf.mxu0
    %v329 = vadd.f32 0.0, %v328
    %v330 = vpop.f32.mrf.mxu0
    %v331 = vadd.f32 0.0, %v330
    %332 = vmatprep.mubr.f32.mxu0 0.0
    %333 = vmatmul.mubr.f32.gmra.mxu0 %v83
    %v334 = vpop.f32.mrf.mxu0
    %v335 = vadd.f32 0.0, %v334
    %v336 = vpop.f32.mrf.mxu0
    %v337 = vadd.f32 0.0, %v336
    %338 = vmatprep.mubr.f32.mxu0 0.0
    %339 = vmatmul.mubr.f32.gmra.mxu0 %v84
    %v340 = vpop.f32.mrf.mxu0
    %v341 = vadd.f32 0.0, %v340
    %v342 = vpop.f32.mrf.mxu0
    %v343 = vadd.f32 0.0, %v342
    %344 = vmatprep.mubr.f32.mxu0 0.0
    %345 = vmatmul.mubr.f32.gmra.mxu0 %v85
    %v346 = vpop.f32.mrf.mxu0
    %v347 = vadd.f32 0.0, %v346
    %v348 = vpop.f32.mrf.mxu0
    %v349 = vadd.f32 0.0, %v348
    %350 = vmatprep.mubr.f32.mxu0 0.0
    %351 = vmatmul.mubr.f32.gmra.mxu0 %v86
    %v352 = vpop.f32.mrf.mxu0
    %v353 = vadd.f32 0.0, %v352
    %v354 = vpop.f32.mrf.mxu0
    %v355 = vadd.f32 0.0, %v354
    %356 = vmatprep.mubr.f32.mxu0 0.0
    %357 = vmatmul.mubr.f32.gmra.mxu0 %v87
    %v358 = vpop.f32.mrf.mxu0
    %v359 = vadd.f32 0.0, %v358
    %v360 = vpop.f32.mrf.mxu0
    %v361 = vadd.f32 0.0, %v360
    %362 = vmatprep.mubr.f32.mxu0 0.0
    %363 = vmatmul.mubr.f32.gmra.mxu0 %v88
    %v364 = vpop.f32.mrf.mxu0
    %v365 = vadd.f32 0.0, %v364
    %v366 = vpop.f32.mrf.mxu0
    %v367 = vadd.f32 0.0, %v366
    %368 = vmatprep.mubr.f32.mxu0 0.0
    %369 = vmatmul.mubr.f32.gmra.mxu0 %v89
    %v370 = vpop.f32.mrf.mxu0
    %v371 = vadd.f32 0.0, %v370
    %v372 = vpop.f32.mrf.mxu0
    %v373 = vadd.f32 0.0, %v372
    %374 = vmatprep.mubr.f32.mxu0 0.0
    %375 = vmatmul.mubr.f32.gmra.mxu0 %v90
    %v376 = vpop.f32.mrf.mxu0
    %v377 = vadd.f32 0.0, %v376
    %v378 = vpop.f32.mrf.mxu0
    %v379 = vadd.f32 0.0, %v378
    %380 = vmatprep.mubr.f32.mxu0 0.0
    %381 = vmatmul.mubr.f32.gmra.mxu0 %v91
    %v382 = vpop.f32.mrf.mxu0
    %v383 = vadd.f32 0.0, %v382
    %v384 = vpop.f32.mrf.mxu0
    %v385 = vadd.f32 0.0, %v384
    %386 = vmatprep.mubr.f32.mxu0 0.0
    %387 = vmatmul.mubr.f32.gmra.mxu0 %v92
    %v388 = vpop.f32.mrf.mxu0
    %v389 = vadd.f32 0.0, %v388
    %v390 = vpop.f32.mrf.mxu0
    %v391 = vadd.f32 0.0, %v390
    %392 = vmatprep.mubr.f32.mxu0 0.0
    %393 = vmatmul.mubr.f32.gmra.mxu0 %v93
    %v394 = vpop.f32.mrf.mxu0
    %v395 = vadd.f32 0.0, %v394
    %v396 = vpop.f32.mrf.mxu0
    %v397 = vadd.f32 0.0, %v396
    %398 = vmatprep.mubr.f32.mxu0 0.0
    %399 = vmatmul.mubr.f32.gmra.mxu0 %v94
    %v400 = vpop.f32.mrf.mxu0
    %v401 = vadd.f32 0.0, %v400
    %v402 = vpop.f32.mrf.mxu0
    %v403 = vadd.f32 0.0, %v402
    %404 = vdwg.mxu0
    %v406 = vcombine.high %v209, %v209
    %v408 = vunpack.c.l.s4 1966171168
    %v409 = vunpack.c.0.s8 %v408
    %v410 = vlaneseq
    %v411 = vshrl.u32 %v410, 7
    %v412 = vsub.s32 %v409, %v411
    %v413 = vrot.slane %v209, %v412
    %v415 = vunpack.c.l.s4 1966171168
    %v416 = vunpack.c.0.s8 %v415
    %v417 = vlaneseq
    %v418 = vshrl.u32 %v417, 7
    %v419 = vsub.s32 %v416, %v418
    %v420 = vrot.slane %v406, %v419
    %v421 = vcombine.high %v413, %v413
    %v422 = vcombine.high %v420, %v420
    %v424 = vunpack.c.l.s4 1966171168
    %v425 = vunpack.c.0.s8 %v424
    %v426 = vlaneseq
    %v427 = vshrl.u32 %v426, 7
    %v428 = vsub.s32 %v425, %v427
    %v429 = vrot.slane %v413, %v428
    %v431 = vunpack.c.l.s4 1966171168
    %v432 = vunpack.c.0.s8 %v431
    %v433 = vlaneseq
    %v434 = vshrl.u32 %v433, 7
    %v435 = vsub.s32 %v432, %v434
    %v436 = vrot.slane %v420, %v435
    %v438 = vunpack.c.l.s4 1966171168
    %v439 = vunpack.c.0.s8 %v438
    %v440 = vlaneseq
    %v441 = vshrl.u32 %v440, 7
    %v442 = vsub.s32 %v439, %v441
    %v443 = vrot.slane %v421, %v442
    %v445 = vunpack.c.l.s4 1966171168
    %v446 = vunpack.c.0.s8 %v445
    %v447 = vlaneseq
    %v448 = vshrl.u32 %v447, 7
    %v449 = vsub.s32 %v446, %v448
    %v450 = vrot.slane %v422, %v449
    %v451 = vcombine.high %v429, %v429
    %v452 = vcombine.high %v436, %v436
    %v453 = vcombine.high %v443, %v443
    %v454 = vcombine.high %v450, %v450
    %v455 = vlaneseq
    %v456 = vshrl.u32 %v455, 7
    %v457 = vsub.s32 0, %v456
    %v458 = vrot.slane %v429, %v457
    %v459 = vlaneseq
    %v460 = vshrl.u32 %v459, 7
    %v461 = vsub.s32 0, %v460
    %v462 = vrot.slane %v443, %v461
    %v463 = vlaneseq
    %v464 = vshrl.u32 %v463, 7
    %v465 = vsub.s32 0, %v464
    %v466 = vrot.slane %v451, %v465
    %v467 = vlaneseq
    %v468 = vshrl.u32 %v467, 7
    %v469 = vsub.s32 0, %v468
    %v470 = vrot.slane %v453, %v469
    %v471 = vlaneseq
    %v472 = vshrl.u32 %v471, 7
    %v473 = vsub.s32 0, %v472
    %v474 = vrot.slane %v436, %v473
    %v475 = vlaneseq
    %v476 = vshrl.u32 %v475, 7
    %v477 = vsub.s32 0, %v476
    %v478 = vrot.slane %v450, %v477
    %v479 = vlaneseq
    %v480 = vshrl.u32 %v479, 7
    %v481 = vsub.s32 0, %v480
    %v482 = vrot.slane %v452, %v481
    %v483 = vlaneseq
    %v484 = vshrl.u32 %v483, 7
    %v485 = vsub.s32 0, %v484
    %v486 = vrot.slane %v454, %v485
    %v495 = vmul.f32 %v458, %v95
    %v496 = vmul.f32 %v462, %v95
    %v497 = vmul.f32 %v466, %v95
    %v498 = vmul.f32 %v470, %v95
    %v499 = vmul.f32 %v474, %v95
    %v500 = vmul.f32 %v478, %v95
    %v501 = vmul.f32 %v482, %v95
    %v502 = vmul.f32 %v486, %v95
    %503 = vmatprep.subr.mxu0 0.0
    %504 = vmatpush1.xpose.msra.mxu0 0.0
    %505 = vmatprep.subr.mxu0 0.0
    %506 = vmatpush1.xpose.msra.mxu0 0.0
    %507 = vmatprep.subr.mxu0 0.0
    %508 = vmatpush1.xpose.msra.mxu0 0.0
    %509 = vmatprep.subr.mxu0 0.0
    %510 = vmatpush1.xpose.msra.mxu0 0.0
    %511 = vmatprep.subr.mxu0 0.0
    %512 = vmatpush1.xpose.msra.mxu0 0.0
    %513 = vmatprep.subr.mxu0 0.0
    %514 = vmatpush1.xpose.msra.mxu0 0.0
    %515 = vmatprep.subr.mxu0 0.0
    %516 = vmatpush1.xpose.msra.mxu0 0.0
    %517 = vmatprep.subr.mxu0 0.0
    %518 = vmatpush1.xpose.msra.mxu0 0.0
    %519 = vmatprep.subr.mxu0 0.0
    %520 = vmatpush1.xpose.msra.mxu0 0.0
    %521 = vmatprep.subr.mxu0 0.0
    %522 = vmatpush1.xpose.msra.mxu0 0.0
    %523 = vmatprep.subr.mxu0 0.0
    %524 = vmatpush1.xpose.msra.mxu0 0.0
    %525 = vmatprep.subr.mxu0 0.0
    %526 = vmatpush1.xpose.msra.mxu0 0.0
    %527 = vmatprep.subr.mxu0 0.0
    %528 = vmatpush1.xpose.msra.mxu0 0.0
    %529 = vmatprep.subr.mxu0 0.0
    %530 = vmatpush1.xpose.msra.mxu0 0.0
    %531 = vmatprep.subr.mxu0 0.0
    %532 = vmatpush1.xpose.msra.mxu0 %v317
    %533 = vmatprep.subr.mxu0 0.0
    %534 = vmatpush1.xpose.msra.mxu0 %v311
    %535 = vmatprep.subr.mxu0 0.0
    %536 = vmatpush2.xpose.msra.mxu0 0.0
    %537 = vmatprep.subr.mxu0 0.0
    %538 = vmatpush2.xpose.msra.mxu0 0.0
    %539 = vmatprep.subr.mxu0 0.0
    %540 = vmatpush2.xpose.msra.mxu0 0.0
    %541 = vmatprep.subr.mxu0 0.0
    %542 = vmatpush2.xpose.msra.mxu0 0.0
    %543 = vmatprep.subr.mxu0 0.0
    %544 = vmatpush2.xpose.msra.mxu0 0.0
    %545 = vmatprep.subr.mxu0 0.0
    %546 = vmatpush2.xpose.msra.mxu0 0.0
    %547 = vmatprep.subr.mxu0 0.0
    %548 = vmatpush2.xpose.msra.mxu0 0.0
    %549 = vmatprep.subr.mxu0 0.0
    %550 = vmatpush2.xpose.msra.mxu0 0.0
    %551 = vmatprep.subr.mxu0 0.0
    %552 = vmatpush2.xpose.msra.mxu0 0.0
    %553 = vmatprep.subr.mxu0 0.0
    %554 = vmatpush2.xpose.msra.mxu0 0.0
    %555 = vmatprep.subr.mxu0 0.0
    %556 = vmatpush2.xpose.msra.mxu0 0.0
    %557 = vmatprep.subr.mxu0 0.0
    %558 = vmatpush2.xpose.msra.mxu0 0.0
    %559 = vmatprep.subr.mxu0 0.0
    %560 = vmatpush2.xpose.msra.mxu0 0.0
    %561 = vmatprep.subr.mxu0 0.0
    %562 = vmatpush2.xpose.msra.mxu0 0.0
    %563 = vmatprep.subr.mxu0 0.0
    %564 = vmatpush2.xpose.msra.mxu0 0.0
    %565 = vmatprep.subr.mxu0 0.0
    %566 = vmatpush2.xpose.msra.mxu0 0.0
    %567 = vmatprep.mubr.f32.mxu0 0.0
    %568 = vmatmul.mubr.f32.gmra.mxu0 %v495
    %v569 = vpop.f32.mrf.mxu0
    %v570 = vadd.f32 0.0, %v569
    %v571 = vpop.f32.mrf.mxu0
    %572 = vdwg.mxu0
    %573 = vmatprep.subr.mxu0 0.0
    %574 = vmatpush1.xpose.msra.mxu0 0.0
    %575 = vmatprep.subr.mxu0 0.0
    %576 = vmatpush1.xpose.msra.mxu0 0.0
    %577 = vmatprep.subr.mxu0 0.0
    %578 = vmatpush1.xpose.msra.mxu0 0.0
    %579 = vmatprep.subr.mxu0 0.0
    %580 = vmatpush1.xpose.msra.mxu0 0.0
    %581 = vmatprep.subr.mxu0 0.0
    %582 = vmatpush1.xpose.msra.mxu0 0.0
    %583 = vmatprep.subr.mxu0 0.0
    %584 = vmatpush1.xpose.msra.mxu0 0.0
    %585 = vmatprep.subr.mxu0 0.0
    %586 = vmatpush1.xpose.msra.mxu0 0.0
    %587 = vmatprep.subr.mxu0 0.0
    %588 = vmatpush1.xpose.msra.mxu0 0.0
    %589 = vmatprep.subr.mxu0 0.0
    %590 = vmatpush1.xpose.msra.mxu0 0.0
    %591 = vmatprep.subr.mxu0 0.0
    %592 = vmatpush1.xpose.msra.mxu0 0.0
    %593 = vmatprep.subr.mxu0 0.0
    %594 = vmatpush1.xpose.msra.mxu0 0.0
    %595 = vmatprep.subr.mxu0 0.0
    %596 = vmatpush1.xpose.msra.mxu0 0.0
    %597 = vmatprep.subr.mxu0 0.0
    %598 = vmatpush1.xpose.msra.mxu0 0.0
    %599 = vmatprep.subr.mxu0 0.0
    %600 = vmatpush1.xpose.msra.mxu0 0.0
    %601 = vmatprep.subr.mxu0 0.0
    %602 = vmatpush1.xpose.msra.mxu0 %v329
    %603 = vmatprep.subr.mxu0 0.0
    %604 = vmatpush1.xpose.msra.mxu0 %v323
    %605 = vmatprep.subr.mxu0 0.0
    %606 = vmatpush2.xpose.msra.mxu0 0.0
    %607 = vmatprep.subr.mxu0 0.0
    %608 = vmatpush2.xpose.msra.mxu0 0.0
    %609 = vmatprep.subr.mxu0 0.0
    %610 = vmatpush2.xpose.msra.mxu0 0.0
    %611 = vmatprep.subr.mxu0 0.0
    %612 = vmatpush2.xpose.msra.mxu0 0.0
    %613 = vmatprep.subr.mxu0 0.0
    %614 = vmatpush2.xpose.msra.mxu0 0.0
    %615 = vmatprep.subr.mxu0 0.0
    %616 = vmatpush2.xpose.msra.mxu0 0.0
    %617 = vmatprep.subr.mxu0 0.0
    %618 = vmatpush2.xpose.msra.mxu0 0.0
    %619 = vmatprep.subr.mxu0 0.0
    %620 = vmatpush2.xpose.msra.mxu0 0.0
    %621 = vmatprep.subr.mxu0 0.0
    %622 = vmatpush2.xpose.msra.mxu0 0.0
    %623 = vmatprep.subr.mxu0 0.0
    %624 = vmatpush2.xpose.msra.mxu0 0.0
    %625 = vmatprep.subr.mxu0 0.0
    %626 = vmatpush2.xpose.msra.mxu0 0.0
    %627 = vmatprep.subr.mxu0 0.0
    %628 = vmatpush2.xpose.msra.mxu0 0.0
    %629 = vmatprep.subr.mxu0 0.0
    %630 = vmatpush2.xpose.msra.mxu0 0.0
    %631 = vmatprep.subr.mxu0 0.0
    %632 = vmatpush2.xpose.msra.mxu0 0.0
    %633 = vmatprep.subr.mxu0 0.0
    %634 = vmatpush2.xpose.msra.mxu0 0.0
    %635 = vmatprep.subr.mxu0 0.0
    %636 = vmatpush2.xpose.msra.mxu0 0.0
    %637 = vmatprep.mubr.f32.mxu0 0.0
    %638 = vmatmul.mubr.f32.gmra.mxu0 %v496
    %v639 = vpop.f32.mrf.mxu0
    %v640 = vadd.f32 0.0, %v639
    %v641 = vpop.f32.mrf.mxu0
    %642 = vdwg.mxu0
    %643 = vmatprep.subr.mxu0 0.0
    %644 = vmatpush1.xpose.msra.mxu0 0.0
    %645 = vmatprep.subr.mxu0 0.0
    %646 = vmatpush1.xpose.msra.mxu0 0.0
    %647 = vmatprep.subr.mxu0 0.0
    %648 = vmatpush1.xpose.msra.mxu0 0.0
    %649 = vmatprep.subr.mxu0 0.0
    %650 = vmatpush1.xpose.msra.mxu0 0.0
    %651 = vmatprep.subr.mxu0 0.0
    %652 = vmatpush1.xpose.msra.mxu0 0.0
    %653 = vmatprep.subr.mxu0 0.0
    %654 = vmatpush1.xpose.msra.mxu0 0.0
    %655 = vmatprep.subr.mxu0 0.0
    %656 = vmatpush1.xpose.msra.mxu0 0.0
    %657 = vmatprep.subr.mxu0 0.0
    %658 = vmatpush1.xpose.msra.mxu0 0.0
    %659 = vmatprep.subr.mxu0 0.0
    %660 = vmatpush1.xpose.msra.mxu0 0.0
    %661 = vmatprep.subr.mxu0 0.0
    %662 = vmatpush1.xpose.msra.mxu0 0.0
    %663 = vmatprep.subr.mxu0 0.0
    %664 = vmatpush1.xpose.msra.mxu0 0.0
    %665 = vmatprep.subr.mxu0 0.0
    %666 = vmatpush1.xpose.msra.mxu0 0.0
    %667 = vmatprep.subr.mxu0 0.0
    %668 = vmatpush1.xpose.msra.mxu0 0.0
    %669 = vmatprep.subr.mxu0 0.0
    %670 = vmatpush1.xpose.msra.mxu0 0.0
    %671 = vmatprep.subr.mxu0 0.0
    %672 = vmatpush1.xpose.msra.mxu0 %v341
    %673 = vmatprep.subr.mxu0 0.0
    %674 = vmatpush1.xpose.msra.mxu0 %v335
    %675 = vmatprep.subr.mxu0 0.0
    %676 = vmatpush2.xpose.msra.mxu0 0.0
    %677 = vmatprep.subr.mxu0 0.0
    %678 = vmatpush2.xpose.msra.mxu0 0.0
    %679 = vmatprep.subr.mxu0 0.0
    %680 = vmatpush2.xpose.msra.mxu0 0.0
    %681 = vmatprep.subr.mxu0 0.0
    %682 = vmatpush2.xpose.msra.mxu0 0.0
    %683 = vmatprep.subr.mxu0 0.0
    %684 = vmatpush2.xpose.msra.mxu0 0.0
    %685 = vmatprep.subr.mxu0 0.0
    %686 = vmatpush2.xpose.msra.mxu0 0.0
    %687 = vmatprep.subr.mxu0 0.0
    %688 = vmatpush2.xpose.msra.mxu0 0.0
    %689 = vmatprep.subr.mxu0 0.0
    %690 = vmatpush2.xpose.msra.mxu0 0.0
    %691 = vmatprep.subr.mxu0 0.0
    %692 = vmatpush2.xpose.msra.mxu0 0.0
    %693 = vmatprep.subr.mxu0 0.0
    %694 = vmatpush2.xpose.msra.mxu0 0.0
    %695 = vmatprep.subr.mxu0 0.0
    %696 = vmatpush2.xpose.msra.mxu0 0.0
    %697 = vmatprep.subr.mxu0 0.0
    %698 = vmatpush2.xpose.msra.mxu0 0.0
    %699 = vmatprep.subr.mxu0 0.0
    %700 = vmatpush2.xpose.msra.mxu0 0.0
    %701 = vmatprep.subr.mxu0 0.0
    %702 = vmatpush2.xpose.msra.mxu0 0.0
    %703 = vmatprep.subr.mxu0 0.0
    %704 = vmatpush2.xpose.msra.mxu0 0.0
    %705 = vmatprep.subr.mxu0 0.0
    %706 = vmatpush2.xpose.msra.mxu0 0.0
    %707 = vmatprep.mubr.f32.mxu0 0.0
    %708 = vmatmul.mubr.f32.gmra.mxu0 %v497
    %v709 = vpop.f32.mrf.mxu0
    %v710 = vadd.f32 0.0, %v709
    %v711 = vpop.f32.mrf.mxu0
    %712 = vdwg.mxu0
    %713 = vmatprep.subr.mxu0 0.0
    %714 = vmatpush1.xpose.msra.mxu0 0.0
    %715 = vmatprep.subr.mxu0 0.0
    %716 = vmatpush1.xpose.msra.mxu0 0.0
    %717 = vmatprep.subr.mxu0 0.0
    %718 = vmatpush1.xpose.msra.mxu0 0.0
    %719 = vmatprep.subr.mxu0 0.0
    %720 = vmatpush1.xpose.msra.mxu0 0.0
    %721 = vmatprep.subr.mxu0 0.0
    %722 = vmatpush1.xpose.msra.mxu0 0.0
    %723 = vmatprep.subr.mxu0 0.0
    %724 = vmatpush1.xpose.msra.mxu0 0.0
    %725 = vmatprep.subr.mxu0 0.0
    %726 = vmatpush1.xpose.msra.mxu0 0.0
    %727 = vmatprep.subr.mxu0 0.0
    %728 = vmatpush1.xpose.msra.mxu0 0.0
    %729 = vmatprep.subr.mxu0 0.0
    %730 = vmatpush1.xpose.msra.mxu0 0.0
    %731 = vmatprep.subr.mxu0 0.0
    %732 = vmatpush1.xpose.msra.mxu0 0.0
    %733 = vmatprep.subr.mxu0 0.0
    %734 = vmatpush1.xpose.msra.mxu0 0.0
    %735 = vmatprep.subr.mxu0 0.0
    %736 = vmatpush1.xpose.msra.mxu0 0.0
    %737 = vmatprep.subr.mxu0 0.0
    %738 = vmatpush1.xpose.msra.mxu0 0.0
    %739 = vmatprep.subr.mxu0 0.0
    %740 = vmatpush1.xpose.msra.mxu0 0.0
    %741 = vmatprep.subr.mxu0 0.0
    %742 = vmatpush1.xpose.msra.mxu0 %v353
    %743 = vmatprep.subr.mxu0 0.0
    %744 = vmatpush1.xpose.msra.mxu0 %v347
    %745 = vmatprep.subr.mxu0 0.0
    %746 = vmatpush2.xpose.msra.mxu0 0.0
    %747 = vmatprep.subr.mxu0 0.0
    %748 = vmatpush2.xpose.msra.mxu0 0.0
    %749 = vmatprep.subr.mxu0 0.0
    %750 = vmatpush2.xpose.msra.mxu0 0.0
    %751 = vmatprep.subr.mxu0 0.0
    %752 = vmatpush2.xpose.msra.mxu0 0.0
    %753 = vmatprep.subr.mxu0 0.0
    %754 = vmatpush2.xpose.msra.mxu0 0.0
    %755 = vmatprep.subr.mxu0 0.0
    %756 = vmatpush2.xpose.msra.mxu0 0.0
    %757 = vmatprep.subr.mxu0 0.0
    %758 = vmatpush2.xpose.msra.mxu0 0.0
    %759 = vmatprep.subr.mxu0 0.0
    %760 = vmatpush2.xpose.msra.mxu0 0.0
    %761 = vmatprep.subr.mxu0 0.0
    %762 = vmatpush2.xpose.msra.mxu0 0.0
    %763 = vmatprep.subr.mxu0 0.0
    %764 = vmatpush2.xpose.msra.mxu0 0.0
    %765 = vmatprep.subr.mxu0 0.0
    %766 = vmatpush2.xpose.msra.mxu0 0.0
    %767 = vmatprep.subr.mxu0 0.0
    %768 = vmatpush2.xpose.msra.mxu0 0.0
    %769 = vmatprep.subr.mxu0 0.0
    %770 = vmatpush2.xpose.msra.mxu0 0.0
    %771 = vmatprep.subr.mxu0 0.0
    %772 = vmatpush2.xpose.msra.mxu0 0.0
    %773 = vmatprep.subr.mxu0 0.0
    %774 = vmatpush2.xpose.msra.mxu0 0.0
    %775 = vmatprep.subr.mxu0 0.0
    %776 = vmatpush2.xpose.msra.mxu0 0.0
    %777 = vmatprep.mubr.f32.mxu0 0.0
    %778 = vmatmul.mubr.f32.gmra.mxu0 %v498
    %v779 = vpop.f32.mrf.mxu0
    %v780 = vadd.f32 0.0, %v779
    %v781 = vpop.f32.mrf.mxu0
    %782 = vdwg.mxu0
    %783 = vmatprep.subr.mxu0 0.0
    %784 = vmatpush1.xpose.msra.mxu0 0.0
    %785 = vmatprep.subr.mxu0 0.0
    %786 = vmatpush1.xpose.msra.mxu0 0.0
    %787 = vmatprep.subr.mxu0 0.0
    %788 = vmatpush1.xpose.msra.mxu0 0.0
    %789 = vmatprep.subr.mxu0 0.0
    %790 = vmatpush1.xpose.msra.mxu0 0.0
    %791 = vmatprep.subr.mxu0 0.0
    %792 = vmatpush1.xpose.msra.mxu0 0.0
    %793 = vmatprep.subr.mxu0 0.0
    %794 = vmatpush1.xpose.msra.mxu0 0.0
    %795 = vmatprep.subr.mxu0 0.0
    %796 = vmatpush1.xpose.msra.mxu0 0.0
    %797 = vmatprep.subr.mxu0 0.0
    %798 = vmatpush1.xpose.msra.mxu0 0.0
    %799 = vmatprep.subr.mxu0 0.0
    %800 = vmatpush1.xpose.msra.mxu0 0.0
    %801 = vmatprep.subr.mxu0 0.0
    %802 = vmatpush1.xpose.msra.mxu0 0.0
    %803 = vmatprep.subr.mxu0 0.0
    %804 = vmatpush1.xpose.msra.mxu0 0.0
    %805 = vmatprep.subr.mxu0 0.0
    %806 = vmatpush1.xpose.msra.mxu0 0.0
    %807 = vmatprep.subr.mxu0 0.0
    %808 = vmatpush1.xpose.msra.mxu0 0.0
    %809 = vmatprep.subr.mxu0 0.0
    %810 = vmatpush1.xpose.msra.mxu0 0.0
    %811 = vmatprep.subr.mxu0 0.0
    %812 = vmatpush1.xpose.msra.mxu0 %v365
    %813 = vmatprep.subr.mxu0 0.0
    %814 = vmatpush1.xpose.msra.mxu0 %v359
    %815 = vmatprep.subr.mxu0 0.0
    %816 = vmatpush2.xpose.msra.mxu0 0.0
    %817 = vmatprep.subr.mxu0 0.0
    %818 = vmatpush2.xpose.msra.mxu0 0.0
    %819 = vmatprep.subr.mxu0 0.0
    %820 = vmatpush2.xpose.msra.mxu0 0.0
    %821 = vmatprep.subr.mxu0 0.0
    %822 = vmatpush2.xpose.msra.mxu0 0.0
    %823 = vmatprep.subr.mxu0 0.0
    %824 = vmatpush2.xpose.msra.mxu0 0.0
    %825 = vmatprep.subr.mxu0 0.0
    %826 = vmatpush2.xpose.msra.mxu0 0.0
    %827 = vmatprep.subr.mxu0 0.0
    %828 = vmatpush2.xpose.msra.mxu0 0.0
    %829 = vmatprep.subr.mxu0 0.0
    %830 = vmatpush2.xpose.msra.mxu0 0.0
    %831 = vmatprep.subr.mxu0 0.0
    %832 = vmatpush2.xpose.msra.mxu0 0.0
    %833 = vmatprep.subr.mxu0 0.0
    %834 = vmatpush2.xpose.msra.mxu0 0.0
    %835 = vmatprep.subr.mxu0 0.0
    %836 = vmatpush2.xpose.msra.mxu0 0.0
    %837 = vmatprep.subr.mxu0 0.0
    %838 = vmatpush2.xpose.msra.mxu0 0.0
    %839 = vmatprep.subr.mxu0 0.0
    %840 = vmatpush2.xpose.msra.mxu0 0.0
    %841 = vmatprep.subr.mxu0 0.0
    %842 = vmatpush2.xpose.msra.mxu0 0.0
    %843 = vmatprep.subr.mxu0 0.0
    %844 = vmatpush2.xpose.msra.mxu0 0.0
    %845 = vmatprep.subr.mxu0 0.0
    %846 = vmatpush2.xpose.msra.mxu0 0.0
    %847 = vmatprep.mubr.f32.mxu0 0.0
    %848 = vmatmul.mubr.f32.gmra.mxu0 %v499
    %v849 = vpop.f32.mrf.mxu0
    %v850 = vadd.f32 0.0, %v849
    %v851 = vpop.f32.mrf.mxu0
    %852 = vdwg.mxu0
    %853 = vmatprep.subr.mxu0 0.0
    %854 = vmatpush1.xpose.msra.mxu0 0.0
    %855 = vmatprep.subr.mxu0 0.0
    %856 = vmatpush1.xpose.msra.mxu0 0.0
    %857 = vmatprep.subr.mxu0 0.0
    %858 = vmatpush1.xpose.msra.mxu0 0.0
    %859 = vmatprep.subr.mxu0 0.0
    %860 = vmatpush1.xpose.msra.mxu0 0.0
    %861 = vmatprep.subr.mxu0 0.0
    %862 = vmatpush1.xpose.msra.mxu0 0.0
    %863 = vmatprep.subr.mxu0 0.0
    %864 = vmatpush1.xpose.msra.mxu0 0.0
    %865 = vmatprep.subr.mxu0 0.0
    %866 = vmatpush1.xpose.msra.mxu0 0.0
    %867 = vmatprep.subr.mxu0 0.0
    %868 = vmatpush1.xpose.msra.mxu0 0.0
    %869 = vmatprep.subr.mxu0 0.0
    %870 = vmatpush1.xpose.msra.mxu0 0.0
    %871 = vmatprep.subr.mxu0 0.0
    %872 = vmatpush1.xpose.msra.mxu0 0.0
    %873 = vmatprep.subr.mxu0 0.0
    %874 = vmatpush1.xpose.msra.mxu0 0.0
    %875 = vmatprep.subr.mxu0 0.0
    %876 = vmatpush1.xpose.msra.mxu0 0.0
    %877 = vmatprep.subr.mxu0 0.0
    %878 = vmatpush1.xpose.msra.mxu0 0.0
    %879 = vmatprep.subr.mxu0 0.0
    %880 = vmatpush1.xpose.msra.mxu0 0.0
    %881 = vmatprep.subr.mxu0 0.0
    %882 = vmatpush1.xpose.msra.mxu0 %v377
    %883 = vmatprep.subr.mxu0 0.0
    %884 = vmatpush1.xpose.msra.mxu0 %v371
    %885 = vmatprep.subr.mxu0 0.0
    %886 = vmatpush2.xpose.msra.mxu0 0.0
    %887 = vmatprep.subr.mxu0 0.0
    %888 = vmatpush2.xpose.msra.mxu0 0.0
    %889 = vmatprep.subr.mxu0 0.0
    %890 = vmatpush2.xpose.msra.mxu0 0.0
    %891 = vmatprep.subr.mxu0 0.0
    %892 = vmatpush2.xpose.msra.mxu0 0.0
    %893 = vmatprep.subr.mxu0 0.0
    %894 = vmatpush2.xpose.msra.mxu0 0.0
    %895 = vmatprep.subr.mxu0 0.0
    %896 = vmatpush2.xpose.msra.mxu0 0.0
    %897 = vmatprep.subr.mxu0 0.0
    %898 = vmatpush2.xpose.msra.mxu0 0.0
    %899 = vmatprep.subr.mxu0 0.0
    %900 = vmatpush2.xpose.msra.mxu0 0.0
    %901 = vmatprep.subr.mxu0 0.0
    %902 = vmatpush2.xpose.msra.mxu0 0.0
    %903 = vmatprep.subr.mxu0 0.0
    %904 = vmatpush2.xpose.msra.mxu0 0.0
    %905 = vmatprep.subr.mxu0 0.0
    %906 = vmatpush2.xpose.msra.mxu0 0.0
    %907 = vmatprep.subr.mxu0 0.0
    %908 = vmatpush2.xpose.msra.mxu0 0.0
    %909 = vmatprep.subr.mxu0 0.0
    %910 = vmatpush2.xpose.msra.mxu0 0.0
    %911 = vmatprep.subr.mxu0 0.0
    %912 = vmatpush2.xpose.msra.mxu0 0.0
    %913 = vmatprep.subr.mxu0 0.0
    %914 = vmatpush2.xpose.msra.mxu0 0.0
    %915 = vmatprep.subr.mxu0 0.0
    %916 = vmatpush2.xpose.msra.mxu0 0.0
    %917 = vmatprep.mubr.f32.mxu0 0.0
    %918 = vmatmul.mubr.f32.gmra.mxu0 %v500
    %v919 = vpop.f32.mrf.mxu0
    %v920 = vadd.f32 0.0, %v919
    %v921 = vpop.f32.mrf.mxu0
    %922 = vdwg.mxu0
    %923 = vmatprep.subr.mxu0 0.0
    %924 = vmatpush1.xpose.msra.mxu0 0.0
    %925 = vmatprep.subr.mxu0 0.0
    %926 = vmatpush1.xpose.msra.mxu0 0.0
    %927 = vmatprep.subr.mxu0 0.0
    %928 = vmatpush1.xpose.msra.mxu0 0.0
    %929 = vmatprep.subr.mxu0 0.0
    %930 = vmatpush1.xpose.msra.mxu0 0.0
    %931 = vmatprep.subr.mxu0 0.0
    %932 = vmatpush1.xpose.msra.mxu0 0.0
    %933 = vmatprep.subr.mxu0 0.0
    %934 = vmatpush1.xpose.msra.mxu0 0.0
    %935 = vmatprep.subr.mxu0 0.0
    %936 = vmatpush1.xpose.msra.mxu0 0.0
    %937 = vmatprep.subr.mxu0 0.0
    %938 = vmatpush1.xpose.msra.mxu0 0.0
    %939 = vmatprep.subr.mxu0 0.0
    %940 = vmatpush1.xpose.msra.mxu0 0.0
    %941 = vmatprep.subr.mxu0 0.0
    %942 = vmatpush1.xpose.msra.mxu0 0.0
    %943 = vmatprep.subr.mxu0 0.0
    %944 = vmatpush1.xpose.msra.mxu0 0.0
    %945 = vmatprep.subr.mxu0 0.0
    %946 = vmatpush1.xpose.msra.mxu0 0.0
    %947 = vmatprep.subr.mxu0 0.0
    %948 = vmatpush1.xpose.msra.mxu0 0.0
    %949 = vmatprep.subr.mxu0 0.0
    %950 = vmatpush1.xpose.msra.mxu0 0.0
    %951 = vmatprep.subr.mxu0 0.0
    %952 = vmatpush1.xpose.msra.mxu0 %v389
    %953 = vmatprep.subr.mxu0 0.0
    %954 = vmatpush1.xpose.msra.mxu0 %v383
    %955 = vmatprep.subr.mxu0 0.0
    %956 = vmatpush2.xpose.msra.mxu0 0.0
    %957 = vmatprep.subr.mxu0 0.0
    %958 = vmatpush2.xpose.msra.mxu0 0.0
    %959 = vmatprep.subr.mxu0 0.0
    %960 = vmatpush2.xpose.msra.mxu0 0.0
    %961 = vmatprep.subr.mxu0 0.0
    %962 = vmatpush2.xpose.msra.mxu0 0.0
    %963 = vmatprep.subr.mxu0 0.0
    %964 = vmatpush2.xpose.msra.mxu0 0.0
    %965 = vmatprep.subr.mxu0 0.0
    %966 = vmatpush2.xpose.msra.mxu0 0.0
    %967 = vmatprep.subr.mxu0 0.0
    %968 = vmatpush2.xpose.msra.mxu0 0.0
    %969 = vmatprep.subr.mxu0 0.0
    %970 = vmatpush2.xpose.msra.mxu0 0.0
    %971 = vmatprep.subr.mxu0 0.0
    %972 = vmatpush2.xpose.msra.mxu0 0.0
    %973 = vmatprep.subr.mxu0 0.0
    %974 = vmatpush2.xpose.msra.mxu0 0.0
    %975 = vmatprep.subr.mxu0 0.0
    %976 = vmatpush2.xpose.msra.mxu0 0.0
    %977 = vmatprep.subr.mxu0 0.0
    %978 = vmatpush2.xpose.msra.mxu0 0.0
    %979 = vmatprep.subr.mxu0 0.0
    %980 = vmatpush2.xpose.msra.mxu0 0.0
    %981 = vmatprep.subr.mxu0 0.0
    %982 = vmatpush2.xpose.msra.mxu0 0.0
    %983 = vmatprep.subr.mxu0 0.0
    %984 = vmatpush2.xpose.msra.mxu0 0.0
    %985 = vmatprep.subr.mxu0 0.0
    %986 = vmatpush2.xpose.msra.mxu0 0.0
    %987 = vmatprep.mubr.f32.mxu0 0.0
    %988 = vmatmul.mubr.f32.gmra.mxu0 %v501
    %v989 = vpop.f32.mrf.mxu0
    %v990 = vadd.f32 0.0, %v989
    %v991 = vpop.f32.mrf.mxu0
    %992 = vdwg.mxu0
    %993 = vmatprep.subr.mxu0 0.0
    %994 = vmatpush1.xpose.msra.mxu0 0.0
    %995 = vmatprep.subr.mxu0 0.0
    %996 = vmatpush1.xpose.msra.mxu0 0.0
    %997 = vmatprep.subr.mxu0 0.0
    %998 = vmatpush1.xpose.msra.mxu0 0.0
    %999 = vmatprep.subr.mxu0 0.0
    %1000 = vmatpush1.xpose.msra.mxu0 0.0
    %1001 = vmatprep.subr.mxu0 0.0
    %1002 = vmatpush1.xpose.msra.mxu0 0.0
    %1003 = vmatprep.subr.mxu0 0.0
    %1004 = vmatpush1.xpose.msra.mxu0 0.0
    %1005 = vmatprep.subr.mxu0 0.0
    %1006 = vmatpush1.xpose.msra.mxu0 0.0
    %1007 = vmatprep.subr.mxu0 0.0
    %1008 = vmatpush1.xpose.msra.mxu0 0.0
    %1009 = vmatprep.subr.mxu0 0.0
    %1010 = vmatpush1.xpose.msra.mxu0 0.0
    %1011 = vmatprep.subr.mxu0 0.0
    %1012 = vmatpush1.xpose.msra.mxu0 0.0
    %1013 = vmatprep.subr.mxu0 0.0
    %1014 = vmatpush1.xpose.msra.mxu0 0.0
    %1015 = vmatprep.subr.mxu0 0.0
    %1016 = vmatpush1.xpose.msra.mxu0 0.0
    %1017 = vmatprep.subr.mxu0 0.0
    %1018 = vmatpush1.xpose.msra.mxu0 0.0
    %1019 = vmatprep.subr.mxu0 0.0
    %1020 = vmatpush1.xpose.msra.mxu0 0.0
    %1021 = vmatprep.subr.mxu0 0.0
    %1022 = vmatpush1.xpose.msra.mxu0 %v401
    %1023 = vmatprep.subr.mxu0 0.0
    %1024 = vmatpush1.xpose.msra.mxu0 %v395
    %1025 = vmatprep.subr.mxu0 0.0
    %1026 = vmatpush2.xpose.msra.mxu0 0.0
    %1027 = vmatprep.subr.mxu0 0.0
    %1028 = vmatpush2.xpose.msra.mxu0 0.0
    %1029 = vmatprep.subr.mxu0 0.0
    %1030 = vmatpush2.xpose.msra.mxu0 0.0
    %1031 = vmatprep.subr.mxu0 0.0
    %1032 = vmatpush2.xpose.msra.mxu0 0.0
    %1033 = vmatprep.subr.mxu0 0.0
    %1034 = vmatpush2.xpose.msra.mxu0 0.0
    %1035 = vmatprep.subr.mxu0 0.0
    %1036 = vmatpush2.xpose.msra.mxu0 0.0
    %1037 = vmatprep.subr.mxu0 0.0
    %1038 = vmatpush2.xpose.msra.mxu0 0.0
    %1039 = vmatprep.subr.mxu0 0.0
    %1040 = vmatpush2.xpose.msra.mxu0 0.0
    %1041 = vmatprep.subr.mxu0 0.0
    %1042 = vmatpush2.xpose.msra.mxu0 0.0
    %1043 = vmatprep.subr.mxu0 0.0
    %1044 = vmatpush2.xpose.msra.mxu0 0.0
    %1045 = vmatprep.subr.mxu0 0.0
    %1046 = vmatpush2.xpose.msra.mxu0 0.0
    %1047 = vmatprep.subr.mxu0 0.0
    %1048 = vmatpush2.xpose.msra.mxu0 0.0
    %1049 = vmatprep.subr.mxu0 0.0
    %1050 = vmatpush2.xpose.msra.mxu0 0.0
    %1051 = vmatprep.subr.mxu0 0.0
    %1052 = vmatpush2.xpose.msra.mxu0 0.0
    %1053 = vmatprep.subr.mxu0 0.0
    %1054 = vmatpush2.xpose.msra.mxu0 0.0
    %1055 = vmatprep.subr.mxu0 0.0
    %1056 = vmatpush2.xpose.msra.mxu0 0.0
    %1057 = vmatprep.mubr.f32.mxu0 0.0
    %1058 = vmatmul.mubr.f32.gmra.mxu0 %v502
    %v1059 = vpop.f32.mrf.mxu0
    %v1060 = vadd.f32 0.0, %v1059
    %v1061 = vpop.f32.mrf.mxu0
    %1062 = vdwg.mxu0
    %vm1063 = vcmask 125952
    %v1064 = vsel %vm1063, %v570, -inf
    %1065 = vmax.xlane.f32.xlu0 %v1064
    %v1066 = vpop.xlane.xlu0 %1065
    %v1067 = vsel %vm1063, %v640, -inf
    %1068 = vmax.xlane.f32.xlu0 %v1067
    %v1069 = vpop.xlane.xlu0 %1068
    %v1070 = vsel %vm1063, %v710, -inf
    %1071 = vmax.xlane.f32.xlu0 %v1070
    %v1072 = vpop.xlane.xlu0 %1071
    %v1073 = vsel %vm1063, %v780, -inf
    %1074 = vmax.xlane.f32.xlu0 %v1073
    %v1075 = vpop.xlane.xlu0 %1074
    %v1076 = vsel %vm1063, %v850, -inf
    %1077 = vmax.xlane.f32.xlu0 %v1076
    %v1078 = vpop.xlane.xlu0 %1077
    %v1079 = vsel %vm1063, %v920, -inf
    %1080 = vmax.xlane.f32.xlu0 %v1079
    %v1081 = vpop.xlane.xlu0 %1080
    %v1082 = vsel %vm1063, %v990, -inf
    %1083 = vmax.xlane.f32.xlu0 %v1082
    %v1084 = vpop.xlane.xlu0 %1083
    %v1085 = vsel %vm1063, %v1060, -inf
    %1086 = vmax.xlane.f32.xlu0 %v1085
    %v1087 = vpop.xlane.xlu0 %1086
    %v1088 = vsub.f32 %v570, %v1066
    %v1089 = vsub.f32 %v640, %v1069
    %v1090 = vsub.f32 %v710, %v1072
    %v1091 = vsub.f32 %v780, %v1075
    %v1092 = vsub.f32 %v850, %v1078
    %v1093 = vsub.f32 %v920, %v1081
    %v1094 = vsub.f32 %v990, %v1084
    %v1095 = vsub.f32 %v1060, %v1087
    %v1096 = vmul.f32 %v1088, 1.442695
    %v1097 = vpow.pop %v1096
    %v1098 = vmul.f32 %v1089, 1.442695
    %v1099 = vpow.pop %v1098
    %v1100 = vmul.f32 %v1090, 1.442695
    %v1101 = vpow.pop %v1100
    %v1102 = vmul.f32 %v1091, 1.442695
    %v1103 = vpow.pop %v1102
    %v1104 = vmul.f32 %v1092, 1.442695
    %v1105 = vpow.pop %v1104
    %v1106 = vmul.f32 %v1093, 1.442695
    %v1107 = vpow.pop %v1106
    %v1108 = vmul.f32 %v1094, 1.442695
    %v1109 = vpow.pop %v1108
    %v1110 = vmul.f32 %v1095, 1.442695
    %v1111 = vpow.pop %v1110
    %v1112 = vsel %vm1063, %v1097, 0.0
    %1113 = vadd.xlane.f32.xlu0 %v1112
    %v1114 = vpop.xlane.xlu0 %1113
    %v1115 = vsel %vm1063, %v1099, 0.0
    %1116 = vadd.xlane.f32.xlu0 %v1115
    %v1117 = vpop.xlane.xlu0 %1116
    %v1118 = vsel %vm1063, %v1101, 0.0
    %1119 = vadd.xlane.f32.xlu0 %v1118
    %v1120 = vpop.xlane.xlu0 %1119
    %v1121 = vsel %vm1063, %v1103, 0.0
    %1122 = vadd.xlane.f32.xlu0 %v1121
    %v1123 = vpop.xlane.xlu0 %1122
    %v1124 = vsel %vm1063, %v1105, 0.0
    %1125 = vadd.xlane.f32.xlu0 %v1124
    %v1126 = vpop.xlane.xlu0 %1125
    %v1127 = vsel %vm1063, %v1107, 0.0
    %1128 = vadd.xlane.f32.xlu0 %v1127
    %v1129 = vpop.xlane.xlu0 %1128
    %v1130 = vsel %vm1063, %v1109, 0.0
    %1131 = vadd.xlane.f32.xlu0 %v1130
    %v1132 = vpop.xlane.xlu0 %1131
    %v1133 = vsel %vm1063, %v1111, 0.0
    %1134 = vadd.xlane.f32.xlu0 %v1133
    %v1135 = vpop.xlane.xlu0 %1134
    %vm1136 = vcmask 130048
    %v1138 = vsel %vm1136, %v1097, 0
    %1140 = vmatprep.subr.mxu0 0.0
    %1141 = vmatpush1.msra.mxu0 0.0
    %1142 = vmatprep.subr.mxu0 0.0
    %1143 = vmatpush1.msra.mxu0 0.0
    %1144 = vmatprep.subr.mxu0 0.0
    %1145 = vmatpush1.msra.mxu0 0.0
    %1146 = vmatprep.subr.mxu0 0.0
    %1147 = vmatpush1.msra.mxu0 0.0
    %1148 = vmatprep.subr.mxu0 0.0
    %1149 = vmatpush1.msra.mxu0 0.0
    %1150 = vmatprep.subr.mxu0 0.0
    %1151 = vmatpush1.msra.mxu0 0.0
    %1152 = vmatprep.subr.mxu0 0.0
    %1153 = vmatpush1.msra.mxu0 0.0
    %1154 = vmatprep.subr.mxu0 0.0
    %1155 = vmatpush1.msra.mxu0 0.0
    %1156 = vmatprep.subr.mxu0 0.0
    %1157 = vmatpush1.msra.mxu0 0.0
    %1158 = vmatprep.subr.mxu0 0.0
    %1159 = vmatpush1.msra.mxu0 0.0
    %1160 = vmatprep.subr.mxu0 0.0
    %1161 = vmatpush1.msra.mxu0 0.0
    %1162 = vmatprep.subr.mxu0 0.0
    %1163 = vmatpush1.msra.mxu0 0.0
    %1164 = vmatprep.subr.mxu0 0.0
    %1165 = vmatpush1.msra.mxu0 0.0
    %1166 = vmatprep.subr.mxu0 0.0
    %1167 = vmatpush1.msra.mxu0 0.0
    %1168 = vmatprep.subr.mxu0 0.0
    %1169 = vmatpush1.msra.mxu0 %v319
    %1170 = vmatprep.subr.mxu0 0.0
    %1171 = vmatpush1.msra.mxu0 %v313
    %1172 = vmatprep.subr.mxu0 0.0
    %1173 = vmatpush2.msra.mxu0 0.0
    %1174 = vmatprep.subr.mxu0 0.0
    %1175 = vmatpush2.msra.mxu0 0.0
    %1176 = vmatprep.subr.mxu0 0.0
    %1177 = vmatpush2.msra.mxu0 0.0
    %1178 = vmatprep.subr.mxu0 0.0
    %1179 = vmatpush2.msra.mxu0 0.0
    %1180 = vmatprep.subr.mxu0 0.0
    %1181 = vmatpush2.msra.mxu0 0.0
    %1182 = vmatprep.subr.mxu0 0.0
    %1183 = vmatpush2.msra.mxu0 0.0
    %1184 = vmatprep.subr.mxu0 0.0
    %1185 = vmatpush2.msra.mxu0 0.0
    %1186 = vmatprep.subr.mxu0 0.0
    %1187 = vmatpush2.msra.mxu0 0.0
    %1188 = vmatprep.subr.mxu0 0.0
    %1189 = vmatpush2.msra.mxu0 0.0
    %1190 = vmatprep.subr.mxu0 0.0
    %1191 = vmatpush2.msra.mxu0 0.0
    %1192 = vmatprep.subr.mxu0 0.0
    %1193 = vmatpush2.msra.mxu0 0.0
    %1194 = vmatprep.subr.mxu0 0.0
    %1195 = vmatpush2.msra.mxu0 0.0
    %1196 = vmatprep.subr.mxu0 0.0
    %1197 = vmatpush2.msra.mxu0 0.0
    %1198 = vmatprep.subr.mxu0 0.0
    %1199 = vmatpush2.msra.mxu0 0.0
    %1200 = vmatprep.subr.mxu0 0.0
    %1201 = vmatpush2.msra.mxu0 0.0
    %1202 = vmatprep.subr.mxu0 0.0
    %1203 = vmatpush2.msra.mxu0 0.0
    %1204 = vmatprep.mubr.f32.mxu0 0.0
    %1205 = vmatmul.mubr.f32.gmra.mxu0 %v1138
    %v1206 = vpop.f32.mrf.mxu0
    %v1207 = vadd.f32 0.0, %v1206
    %v1208 = vpop.f32.mrf.mxu0
    %1209 = vdwg.mxu0
    %v1211 = vsel %vm1136, %v1099, 0
    %1213 = vmatprep.subr.mxu0 0.0
    %1214 = vmatpush1.msra.mxu0 0.0
    %1215 = vmatprep.subr.mxu0 0.0
    %1216 = vmatpush1.msra.mxu0 0.0
    %1217 = vmatprep.subr.mxu0 0.0
    %1218 = vmatpush1.msra.mxu0 0.0
    %1219 = vmatprep.subr.mxu0 0.0
    %1220 = vmatpush1.msra.mxu0 0.0
    %1221 = vmatprep.subr.mxu0 0.0
    %1222 = vmatpush1.msra.mxu0 0.0
    %1223 = vmatprep.subr.mxu0 0.0
    %1224 = vmatpush1.msra.mxu0 0.0
    %1225 = vmatprep.subr.mxu0 0.0
    %1226 = vmatpush1.msra.mxu0 0.0
    %1227 = vmatprep.subr.mxu0 0.0
    %1228 = vmatpush1.msra.mxu0 0.0
    %1229 = vmatprep.subr.mxu0 0.0
    %1230 = vmatpush1.msra.mxu0 0.0
    %1231 = vmatprep.subr.mxu0 0.0
    %1232 = vmatpush1.msra.mxu0 0.0
    %1233 = vmatprep.subr.mxu0 0.0
    %1234 = vmatpush1.msra.mxu0 0.0
    %1235 = vmatprep.subr.mxu0 0.0
    %1236 = vmatpush1.msra.mxu0 0.0
    %1237 = vmatprep.subr.mxu0 0.0
    %1238 = vmatpush1.msra.mxu0 0.0
    %1239 = vmatprep.subr.mxu0 0.0
    %1240 = vmatpush1.msra.mxu0 0.0
    %1241 = vmatprep.subr.mxu0 0.0
    %1242 = vmatpush1.msra.mxu0 %v331
    %1243 = vmatprep.subr.mxu0 0.0
    %1244 = vmatpush1.msra.mxu0 %v325
    %1245 = vmatprep.subr.mxu0 0.0
    %1246 = vmatpush2.msra.mxu0 0.0
    %1247 = vmatprep.subr.mxu0 0.0
    %1248 = vmatpush2.msra.mxu0 0.0
    %1249 = vmatprep.subr.mxu0 0.0
    %1250 = vmatpush2.msra.mxu0 0.0
    %1251 = vmatprep.subr.mxu0 0.0
    %1252 = vmatpush2.msra.mxu0 0.0
    %1253 = vmatprep.subr.mxu0 0.0
    %1254 = vmatpush2.msra.mxu0 0.0
    %1255 = vmatprep.subr.mxu0 0.0
    %1256 = vmatpush2.msra.mxu0 0.0
    %1257 = vmatprep.subr.mxu0 0.0
    %1258 = vmatpush2.msra.mxu0 0.0
    %1259 = vmatprep.subr.mxu0 0.0
    %1260 = vmatpush2.msra.mxu0 0.0
    %1261 = vmatprep.subr.mxu0 0.0
    %1262 = vmatpush2.msra.mxu0 0.0
    %1263 = vmatprep.subr.mxu0 0.0
    %1264 = vmatpush2.msra.mxu0 0.0
    %1265 = vmatprep.subr.mxu0 0.0
    %1266 = vmatpush2.msra.mxu0 0.0
    %1267 = vmatprep.subr.mxu0 0.0
    %1268 = vmatpush2.msra.mxu0 0.0
    %1269 = vmatprep.subr.mxu0 0.0
    %1270 = vmatpush2.msra.mxu0 0.0
    %1271 = vmatprep.subr.mxu0 0.0
    %1272 = vmatpush2.msra.mxu0 0.0
    %1273 = vmatprep.subr.mxu0 0.0
    %1274 = vmatpush2.msra.mxu0 0.0
    %1275 = vmatprep.subr.mxu0 0.0
    %1276 = vmatpush2.msra.mxu0 0.0
    %1277 = vmatprep.mubr.f32.mxu0 0.0
    %1278 = vmatmul.mubr.f32.gmra.mxu0 %v1211
    %v1279 = vpop.f32.mrf.mxu0
    %v1280 = vadd.f32 0.0, %v1279
    %v1281 = vpop.f32.mrf.mxu0
    %1282 = vdwg.mxu0
    %v1284 = vsel %vm1136, %v1101, 0
    %1286 = vmatprep.subr.mxu0 0.0
    %1287 = vmatpush1.msra.mxu0 0.0
    %1288 = vmatprep.subr.mxu0 0.0
    %1289 = vmatpush1.msra.mxu0 0.0
    %1290 = vmatprep.subr.mxu0 0.0
    %1291 = vmatpush1.msra.mxu0 0.0
    %1292 = vmatprep.subr.mxu0 0.0
    %1293 = vmatpush1.msra.mxu0 0.0
    %1294 = vmatprep.subr.mxu0 0.0
    %1295 = vmatpush1.msra.mxu0 0.0
    %1296 = vmatprep.subr.mxu0 0.0
    %1297 = vmatpush1.msra.mxu0 0.0
    %1298 = vmatprep.subr.mxu0 0.0
    %1299 = vmatpush1.msra.mxu0 0.0
    %1300 = vmatprep.subr.mxu0 0.0
    %1301 = vmatpush1.msra.mxu0 0.0
    %1302 = vmatprep.subr.mxu0 0.0
    %1303 = vmatpush1.msra.mxu0 0.0
    %1304 = vmatprep.subr.mxu0 0.0
    %1305 = vmatpush1.msra.mxu0 0.0
    %1306 = vmatprep.subr.mxu0 0.0
    %1307 = vmatpush1.msra.mxu0 0.0
    %1308 = vmatprep.subr.mxu0 0.0
    %1309 = vmatpush1.msra.mxu0 0.0
    %1310 = vmatprep.subr.mxu0 0.0
    %1311 = vmatpush1.msra.mxu0 0.0
    %1312 = vmatprep.subr.mxu0 0.0
    %1313 = vmatpush1.msra.mxu0 0.0
    %1314 = vmatprep.subr.mxu0 0.0
    %1315 = vmatpush1.msra.mxu0 %v343
    %1316 = vmatprep.subr.mxu0 0.0
    %1317 = vmatpush1.msra.mxu0 %v337
    %1318 = vmatprep.subr.mxu0 0.0
    %1319 = vmatpush2.msra.mxu0 0.0
    %1320 = vmatprep.subr.mxu0 0.0
    %1321 = vmatpush2.msra.mxu0 0.0
    %1322 = vmatprep.subr.mxu0 0.0
    %1323 = vmatpush2.msra.mxu0 0.0
    %1324 = vmatprep.subr.mxu0 0.0
    %1325 = vmatpush2.msra.mxu0 0.0
    %1326 = vmatprep.subr.mxu0 0.0
    %1327 = vmatpush2.msra.mxu0 0.0
    %1328 = vmatprep.subr.mxu0 0.0
    %1329 = vmatpush2.msra.mxu0 0.0
    %1330 = vmatprep.subr.mxu0 0.0
    %1331 = vmatpush2.msra.mxu0 0.0
    %1332 = vmatprep.subr.mxu0 0.0
    %1333 = vmatpush2.msra.mxu0 0.0
    %1334 = vmatprep.subr.mxu0 0.0
    %1335 = vmatpush2.msra.mxu0 0.0
    %1336 = vmatprep.subr.mxu0 0.0
    %1337 = vmatpush2.msra.mxu0 0.0
    %1338 = vmatprep.subr.mxu0 0.0
    %1339 = vmatpush2.msra.mxu0 0.0
    %1340 = vmatprep.subr.mxu0 0.0
    %1341 = vmatpush2.msra.mxu0 0.0
    %1342 = vmatprep.subr.mxu0 0.0
    %1343 = vmatpush2.msra.mxu0 0.0
    %1344 = vmatprep.subr.mxu0 0.0
    %1345 = vmatpush2.msra.mxu0 0.0
    %1346 = vmatprep.subr.mxu0 0.0
    %1347 = vmatpush2.msra.mxu0 0.0
    %1348 = vmatprep.subr.mxu0 0.0
    %1349 = vmatpush2.msra.mxu0 0.0
    %1350 = vmatprep.mubr.f32.mxu0 0.0
    %1351 = vmatmul.mubr.f32.gmra.mxu0 %v1284
    %v1352 = vpop.f32.mrf.mxu0
    %v1353 = vadd.f32 0.0, %v1352
    %v1354 = vpop.f32.mrf.mxu0
    %1355 = vdwg.mxu0
    %v1357 = vsel %vm1136, %v1103, 0
    %1359 = vmatprep.subr.mxu0 0.0
    %1360 = vmatpush1.msra.mxu0 0.0
    %1361 = vmatprep.subr.mxu0 0.0
    %1362 = vmatpush1.msra.mxu0 0.0
    %1363 = vmatprep.subr.mxu0 0.0
    %1364 = vmatpush1.msra.mxu0 0.0
    %1365 = vmatprep.subr.mxu0 0.0
    %1366 = vmatpush1.msra.mxu0 0.0
    %1367 = vmatprep.subr.mxu0 0.0
    %1368 = vmatpush1.msra.mxu0 0.0
    %1369 = vmatprep.subr.mxu0 0.0
    %1370 = vmatpush1.msra.mxu0 0.0
    %1371 = vmatprep.subr.mxu0 0.0
    %1372 = vmatpush1.msra.mxu0 0.0
    %1373 = vmatprep.subr.mxu0 0.0
    %1374 = vmatpush1.msra.mxu0 0.0
    %1375 = vmatprep.subr.mxu0 0.0
    %1376 = vmatpush1.msra.mxu0 0.0
    %1377 = vmatprep.subr.mxu0 0.0
    %1378 = vmatpush1.msra.mxu0 0.0
    %1379 = vmatprep.subr.mxu0 0.0
    %1380 = vmatpush1.msra.mxu0 0.0
    %1381 = vmatprep.subr.mxu0 0.0
    %1382 = vmatpush1.msra.mxu0 0.0
    %1383 = vmatprep.subr.mxu0 0.0
    %1384 = vmatpush1.msra.mxu0 0.0
    %1385 = vmatprep.subr.mxu0 0.0
    %1386 = vmatpush1.msra.mxu0 0.0
    %1387 = vmatprep.subr.mxu0 0.0
    %1388 = vmatpush1.msra.mxu0 %v355
    %1389 = vmatprep.subr.mxu0 0.0
    %1390 = vmatpush1.msra.mxu0 %v349
    %1391 = vmatprep.subr.mxu0 0.0
    %1392 = vmatpush2.msra.mxu0 0.0
    %1393 = vmatprep.subr.mxu0 0.0
    %1394 = vmatpush2.msra.mxu0 0.0
    %1395 = vmatprep.subr.mxu0 0.0
    %1396 = vmatpush2.msra.mxu0 0.0
    %1397 = vmatprep.subr.mxu0 0.0
    %1398 = vmatpush2.msra.mxu0 0.0
    %1399 = vmatprep.subr.mxu0 0.0
    %1400 = vmatpush2.msra.mxu0 0.0
    %1401 = vmatprep.subr.mxu0 0.0
    %1402 = vmatpush2.msra.mxu0 0.0
    %1403 = vmatprep.subr.mxu0 0.0
    %1404 = vmatpush2.msra.mxu0 0.0
    %1405 = vmatprep.subr.mxu0 0.0
    %1406 = vmatpush2.msra.mxu0 0.0
    %1407 = vmatprep.subr.mxu0 0.0
    %1408 = vmatpush2.msra.mxu0 0.0
    %1409 = vmatprep.subr.mxu0 0.0
    %1410 = vmatpush2.msra.mxu0 0.0
    %1411 = vmatprep.subr.mxu0 0.0
    %1412 = vmatpush2.msra.mxu0 0.0
    %1413 = vmatprep.subr.mxu0 0.0
    %1414 = vmatpush2.msra.mxu0 0.0
    %1415 = vmatprep.subr.mxu0 0.0
    %1416 = vmatpush2.msra.mxu0 0.0
    %1417 = vmatprep.subr.mxu0 0.0
    %1418 = vmatpush2.msra.mxu0 0.0
    %1419 = vmatprep.subr.mxu0 0.0
    %1420 = vmatpush2.msra.mxu0 0.0
    %1421 = vmatprep.subr.mxu0 0.0
    %1422 = vmatpush2.msra.mxu0 0.0
    %1423 = vmatprep.mubr.f32.mxu0 0.0
    %1424 = vmatmul.mubr.f32.gmra.mxu0 %v1357
    %v1425 = vpop.f32.mrf.mxu0
    %v1426 = vadd.f32 0.0, %v1425
    %v1427 = vpop.f32.mrf.mxu0
    %1428 = vdwg.mxu0
    %v1430 = vsel %vm1136, %v1105, 0
    %1432 = vmatprep.subr.mxu0 0.0
    %1433 = vmatpush1.msra.mxu0 0.0
    %1434 = vmatprep.subr.mxu0 0.0
    %1435 = vmatpush1.msra.mxu0 0.0
    %1436 = vmatprep.subr.mxu0 0.0
    %1437 = vmatpush1.msra.mxu0 0.0
    %1438 = vmatprep.subr.mxu0 0.0
    %1439 = vmatpush1.msra.mxu0 0.0
    %1440 = vmatprep.subr.mxu0 0.0
    %1441 = vmatpush1.msra.mxu0 0.0
    %1442 = vmatprep.subr.mxu0 0.0
    %1443 = vmatpush1.msra.mxu0 0.0
    %1444 = vmatprep.subr.mxu0 0.0
    %1445 = vmatpush1.msra.mxu0 0.0
    %1446 = vmatprep.subr.mxu0 0.0
    %1447 = vmatpush1.msra.mxu0 0.0
    %1448 = vmatprep.subr.mxu0 0.0
    %1449 = vmatpush1.msra.mxu0 0.0
    %1450 = vmatprep.subr.mxu0 0.0
    %1451 = vmatpush1.msra.mxu0 0.0
    %1452 = vmatprep.subr.mxu0 0.0
    %1453 = vmatpush1.msra.mxu0 0.0
    %1454 = vmatprep.subr.mxu0 0.0
    %1455 = vmatpush1.msra.mxu0 0.0
    %1456 = vmatprep.subr.mxu0 0.0
    %1457 = vmatpush1.msra.mxu0 0.0
    %1458 = vmatprep.subr.mxu0 0.0
    %1459 = vmatpush1.msra.mxu0 0.0
    %1460 = vmatprep.subr.mxu0 0.0
    %1461 = vmatpush1.msra.mxu0 %v367
    %1462 = vmatprep.subr.mxu0 0.0
    %1463 = vmatpush1.msra.mxu0 %v361
    %1464 = vmatprep.subr.mxu0 0.0
    %1465 = vmatpush2.msra.mxu0 0.0
    %1466 = vmatprep.subr.mxu0 0.0
    %1467 = vmatpush2.msra.mxu0 0.0
    %1468 = vmatprep.subr.mxu0 0.0
    %1469 = vmatpush2.msra.mxu0 0.0
    %1470 = vmatprep.subr.mxu0 0.0
    %1471 = vmatpush2.msra.mxu0 0.0
    %1472 = vmatprep.subr.mxu0 0.0
    %1473 = vmatpush2.msra.mxu0 0.0
    %1474 = vmatprep.subr.mxu0 0.0
    %1475 = vmatpush2.msra.mxu0 0.0
    %1476 = vmatprep.subr.mxu0 0.0
    %1477 = vmatpush2.msra.mxu0 0.0
    %1478 = vmatprep.subr.mxu0 0.0
    %1479 = vmatpush2.msra.mxu0 0.0
    %1480 = vmatprep.subr.mxu0 0.0
    %1481 = vmatpush2.msra.mxu0 0.0
    %1482 = vmatprep.subr.mxu0 0.0
    %1483 = vmatpush2.msra.mxu0 0.0
    %1484 = vmatprep.subr.mxu0 0.0
    %1485 = vmatpush2.msra.mxu0 0.0
    %1486 = vmatprep.subr.mxu0 0.0
    %1487 = vmatpush2.msra.mxu0 0.0
    %1488 = vmatprep.subr.mxu0 0.0
    %1489 = vmatpush2.msra.mxu0 0.0
    %1490 = vmatprep.subr.mxu0 0.0
    %1491 = vmatpush2.msra.mxu0 0.0
    %1492 = vmatprep.subr.mxu0 0.0
    %1493 = vmatpush2.msra.mxu0 0.0
    %1494 = vmatprep.subr.mxu0 0.0
    %1495 = vmatpush2.msra.mxu0 0.0
    %1496 = vmatprep.mubr.f32.mxu0 0.0
    %1497 = vmatmul.mubr.f32.gmra.mxu0 %v1430
    %v1498 = vpop.f32.mrf.mxu0
    %v1499 = vadd.f32 0.0, %v1498
    %v1500 = vpop.f32.mrf.mxu0
    %1501 = vdwg.mxu0
    %v1503 = vsel %vm1136, %v1107, 0
    %1505 = vmatprep.subr.mxu0 0.0
    %1506 = vmatpush1.msra.mxu0 0.0
    %1507 = vmatprep.subr.mxu0 0.0
    %1508 = vmatpush1.msra.mxu0 0.0
    %1509 = vmatprep.subr.mxu0 0.0
    %1510 = vmatpush1.msra.mxu0 0.0
    %1511 = vmatprep.subr.mxu0 0.0
    %1512 = vmatpush1.msra.mxu0 0.0
    %1513 = vmatprep.subr.mxu0 0.0
    %1514 = vmatpush1.msra.mxu0 0.0
    %1515 = vmatprep.subr.mxu0 0.0
    %1516 = vmatpush1.msra.mxu0 0.0
    %1517 = vmatprep.subr.mxu0 0.0
    %1518 = vmatpush1.msra.mxu0 0.0
    %1519 = vmatprep.subr.mxu0 0.0
    %1520 = vmatpush1.msra.mxu0 0.0
    %1521 = vmatprep.subr.mxu0 0.0
    %1522 = vmatpush1.msra.mxu0 0.0
    %1523 = vmatprep.subr.mxu0 0.0
    %1524 = vmatpush1.msra.mxu0 0.0
    %1525 = vmatprep.subr.mxu0 0.0
    %1526 = vmatpush1.msra.mxu0 0.0
    %1527 = vmatprep.subr.mxu0 0.0
    %1528 = vmatpush1.msra.mxu0 0.0
    %1529 = vmatprep.subr.mxu0 0.0
    %1530 = vmatpush1.msra.mxu0 0.0
    %1531 = vmatprep.subr.mxu0 0.0
    %1532 = vmatpush1.msra.mxu0 0.0
    %1533 = vmatprep.subr.mxu0 0.0
    %1534 = vmatpush1.msra.mxu0 %v379
    %1535 = vmatprep.subr.mxu0 0.0
    %1536 = vmatpush1.msra.mxu0 %v373
    %1537 = vmatprep.subr.mxu0 0.0
    %1538 = vmatpush2.msra.mxu0 0.0
    %1539 = vmatprep.subr.mxu0 0.0
    %1540 = vmatpush2.msra.mxu0 0.0
    %1541 = vmatprep.subr.mxu0 0.0
    %1542 = vmatpush2.msra.mxu0 0.0
    %1543 = vmatprep.subr.mxu0 0.0
    %1544 = vmatpush2.msra.mxu0 0.0
    %1545 = vmatprep.subr.mxu0 0.0
    %1546 = vmatpush2.msra.mxu0 0.0
    %1547 = vmatprep.subr.mxu0 0.0
    %1548 = vmatpush2.msra.mxu0 0.0
    %1549 = vmatprep.subr.mxu0 0.0
    %1550 = vmatpush2.msra.mxu0 0.0
    %1551 = vmatprep.subr.mxu0 0.0
    %1552 = vmatpush2.msra.mxu0 0.0
    %1553 = vmatprep.subr.mxu0 0.0
    %1554 = vmatpush2.msra.mxu0 0.0
    %1555 = vmatprep.subr.mxu0 0.0
    %1556 = vmatpush2.msra.mxu0 0.0
    %1557 = vmatprep.subr.mxu0 0.0
    %1558 = vmatpush2.msra.mxu0 0.0
    %1559 = vmatprep.subr.mxu0 0.0
    %1560 = vmatpush2.msra.mxu0 0.0
    %1561 = vmatprep.subr.mxu0 0.0
    %1562 = vmatpush2.msra.mxu0 0.0
    %1563 = vmatprep.subr.mxu0 0.0
    %1564 = vmatpush2.msra.mxu0 0.0
    %1565 = vmatprep.subr.mxu0 0.0
    %1566 = vmatpush2.msra.mxu0 0.0
    %1567 = vmatprep.subr.mxu0 0.0
    %1568 = vmatpush2.msra.mxu0 0.0
    %1569 = vmatprep.mubr.f32.mxu0 0.0
    %1570 = vmatmul.mubr.f32.gmra.mxu0 %v1503
    %v1571 = vpop.f32.mrf.mxu0
    %v1572 = vadd.f32 0.0, %v1571
    %v1573 = vpop.f32.mrf.mxu0
    %1574 = vdwg.mxu0
    %v1576 = vsel %vm1136, %v1109, 0
    %1578 = vmatprep.subr.mxu0 0.0
    %1579 = vmatpush1.msra.mxu0 0.0
    %1580 = vmatprep.subr.mxu0 0.0
    %1581 = vmatpush1.msra.mxu0 0.0
    %1582 = vmatprep.subr.mxu0 0.0
    %1583 = vmatpush1.msra.mxu0 0.0
    %1584 = vmatprep.subr.mxu0 0.0
    %1585 = vmatpush1.msra.mxu0 0.0
    %1586 = vmatprep.subr.mxu0 0.0
    %1587 = vmatpush1.msra.mxu0 0.0
    %1588 = vmatprep.subr.mxu0 0.0
    %1589 = vmatpush1.msra.mxu0 0.0
    %1590 = vmatprep.subr.mxu0 0.0
    %1591 = vmatpush1.msra.mxu0 0.0
    %1592 = vmatprep.subr.mxu0 0.0
    %1593 = vmatpush1.msra.mxu0 0.0
    %1594 = vmatprep.subr.mxu0 0.0
    %1595 = vmatpush1.msra.mxu0 0.0
    %1596 = vmatprep.subr.mxu0 0.0
    %1597 = vmatpush1.msra.mxu0 0.0
    %1598 = vmatprep.subr.mxu0 0.0
    %1599 = vmatpush1.msra.mxu0 0.0
    %1600 = vmatprep.subr.mxu0 0.0
    %1601 = vmatpush1.msra.mxu0 0.0
    %1602 = vmatprep.subr.mxu0 0.0
    %1603 = vmatpush1.msra.mxu0 0.0
    %1604 = vmatprep.subr.mxu0 0.0
    %1605 = vmatpush1.msra.mxu0 0.0
    %1606 = vmatprep.subr.mxu0 0.0
    %1607 = vmatpush1.msra.mxu0 %v391
    %1608 = vmatprep.subr.mxu0 0.0
    %1609 = vmatpush1.msra.mxu0 %v385
    %1610 = vmatprep.subr.mxu0 0.0
    %1611 = vmatpush2.msra.mxu0 0.0
    %1612 = vmatprep.subr.mxu0 0.0
    %1613 = vmatpush2.msra.mxu0 0.0
    %1614 = vmatprep.subr.mxu0 0.0
    %1615 = vmatpush2.msra.mxu0 0.0
    %1616 = vmatprep.subr.mxu0 0.0
    %1617 = vmatpush2.msra.mxu0 0.0
    %1618 = vmatprep.subr.mxu0 0.0
    %1619 = vmatpush2.msra.mxu0 0.0
    %1620 = vmatprep.subr.mxu0 0.0
    %1621 = vmatpush2.msra.mxu0 0.0
    %1622 = vmatprep.subr.mxu0 0.0
    %1623 = vmatpush2.msra.mxu0 0.0
    %1624 = vmatprep.subr.mxu0 0.0
    %1625 = vmatpush2.msra.mxu0 0.0
    %1626 = vmatprep.subr.mxu0 0.0
    %1627 = vmatpush2.msra.mxu0 0.0
    %1628 = vmatprep.subr.mxu0 0.0
    %1629 = vmatpush2.msra.mxu0 0.0
    %1630 = vmatprep.subr.mxu0 0.0
    %1631 = vmatpush2.msra.mxu0 0.0
    %1632 = vmatprep.subr.mxu0 0.0
    %1633 = vmatpush2.msra.mxu0 0.0
    %1634 = vmatprep.subr.mxu0 0.0
    %1635 = vmatpush2.msra.mxu0 0.0
    %1636 = vmatprep.subr.mxu0 0.0
    %1637 = vmatpush2.msra.mxu0 0.0
    %1638 = vmatprep.subr.mxu0 0.0
    %1639 = vmatpush2.msra.mxu0 0.0
    %1640 = vmatprep.subr.mxu0 0.0
    %1641 = vmatpush2.msra.mxu0 0.0
    %1642 = vmatprep.mubr.f32.mxu0 0.0
    %1643 = vmatmul.mubr.f32.gmra.mxu0 %v1576
    %v1644 = vpop.f32.mrf.mxu0
    %v1645 = vadd.f32 0.0, %v1644
    %v1646 = vpop.f32.mrf.mxu0
    %1647 = vdwg.mxu0
    %v1649 = vsel %vm1136, %v1111, 0
    %1651 = vmatprep.subr.mxu0 0.0
    %1652 = vmatpush1.msra.mxu0 0.0
    %1653 = vmatprep.subr.mxu0 0.0
    %1654 = vmatpush1.msra.mxu0 0.0
    %1655 = vmatprep.subr.mxu0 0.0
    %1656 = vmatpush1.msra.mxu0 0.0
    %1657 = vmatprep.subr.mxu0 0.0
    %1658 = vmatpush1.msra.mxu0 0.0
    %1659 = vmatprep.subr.mxu0 0.0
    %1660 = vmatpush1.msra.mxu0 0.0
    %1661 = vmatprep.subr.mxu0 0.0
    %1662 = vmatpush1.msra.mxu0 0.0
    %1663 = vmatprep.subr.mxu0 0.0
    %1664 = vmatpush1.msra.mxu0 0.0
    %1665 = vmatprep.subr.mxu0 0.0
    %1666 = vmatpush1.msra.mxu0 0.0
    %1667 = vmatprep.subr.mxu0 0.0
    %1668 = vmatpush1.msra.mxu0 0.0
    %1669 = vmatprep.subr.mxu0 0.0
    %1670 = vmatpush1.msra.mxu0 0.0
    %1671 = vmatprep.subr.mxu0 0.0
    %1672 = vmatpush1.msra.mxu0 0.0
    %1673 = vmatprep.subr.mxu0 0.0
    %1674 = vmatpush1.msra.mxu0 0.0
    %1675 = vmatprep.subr.mxu0 0.0
    %1676 = vmatpush1.msra.mxu0 0.0
    %1677 = vmatprep.subr.mxu0 0.0
    %1678 = vmatpush1.msra.mxu0 0.0
    %1679 = vmatprep.subr.mxu0 0.0
    %1680 = vmatpush1.msra.mxu0 %v403
    %1681 = vmatprep.subr.mxu0 0.0
    %1682 = vmatpush1.msra.mxu0 %v397
    %1683 = vmatprep.subr.mxu0 0.0
    %1684 = vmatpush2.msra.mxu0 0.0
    %1685 = vmatprep.subr.mxu0 0.0
    %1686 = vmatpush2.msra.mxu0 0.0
    %1687 = vmatprep.subr.mxu0 0.0
    %1688 = vmatpush2.msra.mxu0 0.0
    %1689 = vmatprep.subr.mxu0 0.0
    %1690 = vmatpush2.msra.mxu0 0.0
    %1691 = vmatprep.subr.mxu0 0.0
    %1692 = vmatpush2.msra.mxu0 0.0
    %1693 = vmatprep.subr.mxu0 0.0
    %1694 = vmatpush2.msra.mxu0 0.0
    %1695 = vmatprep.subr.mxu0 0.0
    %1696 = vmatpush2.msra.mxu0 0.0
    %1697 = vmatprep.subr.mxu0 0.0
    %1698 = vmatpush2.msra.mxu0 0.0
    %1699 = vmatprep.subr.mxu0 0.0
    %1700 = vmatpush2.msra.mxu0 0.0
    %1701 = vmatprep.subr.mxu0 0.0
    %1702 = vmatpush2.msra.mxu0 0.0
    %1703 = vmatprep.subr.mxu0 0.0
    %1704 = vmatpush2.msra.mxu0 0.0
    %1705 = vmatprep.subr.mxu0 0.0
    %1706 = vmatpush2.msra.mxu0 0.0
    %1707 = vmatprep.subr.mxu0 0.0
    %1708 = vmatpush2.msra.mxu0 0.0
    %1709 = vmatprep.subr.mxu0 0.0
    %1710 = vmatpush2.msra.mxu0 0.0
    %1711 = vmatprep.subr.mxu0 0.0
    %1712 = vmatpush2.msra.mxu0 0.0
    %1713 = vmatprep.subr.mxu0 0.0
    %1714 = vmatpush2.msra.mxu0 0.0
    %1715 = vmatprep.mubr.f32.mxu0 0.0
    %1716 = vmatmul.mubr.f32.gmra.mxu0 %v1649
    %v1717 = vpop.f32.mrf.mxu0
    %v1718 = vadd.f32 0.0, %v1717
    %v1719 = vpop.f32.mrf.mxu0
    %1720 = vdwg.mxu0
    %v1721 = vrcp.pop %v1114
    %v1722 = vrcp.pop %v1117
    %v1723 = vrcp.pop %v1120
    %v1724 = vrcp.pop %v1123
    %v1725 = vrcp.pop %v1126
    %v1726 = vrcp.pop %v1129
    %v1727 = vrcp.pop %v1132
    %v1728 = vrcp.pop %v1135
    %v1729 = vmul.f32 %v1721, %v95
    %v1730 = vmul.f32 %v1722, %v95
    %v1731 = vmul.f32 %v1723, %v95
    %v1732 = vmul.f32 %v1724, %v95
    %v1733 = vmul.f32 %v1725, %v95
    %v1734 = vmul.f32 %v1726, %v95
    %v1735 = vmul.f32 %v1727, %v95
    %v1736 = vmul.f32 %v1728, %v95
    %v1737 = vmul.f32 %v1207, %v1729
    %v1738 = vmul.f32 %v1280, %v1730
    %v1739 = vmul.f32 %v1353, %v1731
    %v1740 = vmul.f32 %v1426, %v1732
    %v1741 = vmul.f32 %v1499, %v1733
    %v1742 = vmul.f32 %v1572, %v1734
    %v1743 = vmul.f32 %v1645, %v1735
    %v1744 = vmul.f32 %v1718, %v1736
    %vm1745 = vcmask 1043456
    %v1746 = vsel %vm1745, %v1737, 0.0
    %v1747 = vrot.slane %v1746, 4
    %v1748 = vadd.f32 %v1746, %v1747
    %v1749 = vrot.slane %v1748, 2
    %v1750 = vadd.f32 %v1748, %v1749
    %v1751 = vrot.slane %v1750, 1
    %v1752 = vadd.f32 %v1750, %v1751
    %v1753 = vsel %vm1745, %v1738, 0.0
    %v1754 = vrot.slane %v1753, 4
    %v1755 = vadd.f32 %v1753, %v1754
    %v1756 = vrot.slane %v1755, 2
    %v1757 = vadd.f32 %v1755, %v1756
    %v1758 = vrot.slane %v1757, 1
    %v1759 = vadd.f32 %v1757, %v1758
    %v1760 = vsel %vm1745, %v1739, 0.0
    %v1761 = vrot.slane %v1760, 4
    %v1762 = vadd.f32 %v1760, %v1761
    %v1763 = vrot.slane %v1762, 2
    %v1764 = vadd.f32 %v1762, %v1763
    %v1765 = vrot.slane %v1764, 1
    %v1766 = vadd.f32 %v1764, %v1765
    %v1767 = vsel %vm1745, %v1740, 0.0
    %v1768 = vrot.slane %v1767, 4
    %v1769 = vadd.f32 %v1767, %v1768
    %v1770 = vrot.slane %v1769, 2
    %v1771 = vadd.f32 %v1769, %v1770
    %v1772 = vrot.slane %v1771, 1
    %v1773 = vadd.f32 %v1771, %v1772
    %v1774 = vsel %vm1745, %v1741, 0.0
    %v1775 = vrot.slane %v1774, 4
    %v1776 = vadd.f32 %v1774, %v1775
    %v1777 = vrot.slane %v1776, 2
    %v1778 = vadd.f32 %v1776, %v1777
    %v1779 = vrot.slane %v1778, 1
    %v1780 = vadd.f32 %v1778, %v1779
    %v1781 = vsel %vm1745, %v1742, 0.0
    %v1782 = vrot.slane %v1781, 4
    %v1783 = vadd.f32 %v1781, %v1782
    %v1784 = vrot.slane %v1783, 2
    %v1785 = vadd.f32 %v1783, %v1784
    %v1786 = vrot.slane %v1785, 1
    %v1787 = vadd.f32 %v1785, %v1786
    %v1788 = vsel %vm1745, %v1743, 0.0
    %v1789 = vrot.slane %v1788, 4
    %v1790 = vadd.f32 %v1788, %v1789
    %v1791 = vrot.slane %v1790, 2
    %v1792 = vadd.f32 %v1790, %v1791
    %v1793 = vrot.slane %v1792, 1
    %v1794 = vadd.f32 %v1792, %v1793
    %v1795 = vsel %vm1745, %v1744, 0.0
    %v1796 = vrot.slane %v1795, 4
    %v1797 = vadd.f32 %v1795, %v1796
    %v1798 = vrot.slane %v1797, 2
    %v1799 = vadd.f32 %v1797, %v1798
    %v1800 = vrot.slane %v1799, 1
    %v1801 = vadd.f32 %v1799, %v1800
    %v1802 = vld [vmem:[#allocation8] sm:$0xff]
    %v1803 = vld [vmem:[#allocation8 + $0x8] sm:$0xff]
    %v1804 = vld [vmem:[#allocation8 + $0x10] sm:$0xff]
    %v1805 = vld [vmem:[#allocation8 + $0x18] sm:$0xff]
    %v1806 = vld [vmem:[#allocation8 + $0x20] sm:$0xff]
    %v1807 = vld [vmem:[#allocation8 + $0x28] sm:$0xff]
    %v1808 = vld [vmem:[#allocation8 + $0x30] sm:$0xff]
    %v1809 = vld [vmem:[#allocation8 + $0x38] sm:$0xff]
    %v1810 = vld [vmem:[#allocation8 + $0x40] sm:$0xff]
    %v1811 = vld [vmem:[#allocation8 + $0x48] sm:$0xff]
    %v1812 = vld [vmem:[#allocation8 + $0x50] sm:$0xff]
    %v1813 = vld [vmem:[#allocation8 + $0x58] sm:$0xff]
    %v1814 = vld [vmem:[#allocation8 + $0x60] sm:$0xff]
    %v1815 = vld [vmem:[#allocation8 + $0x68] sm:$0xff]
    %v1816 = vld [vmem:[#allocation8 + $0x70] sm:$0xff]
    %v1817 = vld [vmem:[#allocation8 + $0x78] sm:$0xff]
    %v1818 = vld [vmem:[%s4] sm:$0x1]
    %v1820 = vlaneseq
    %v1821 = vshrl.u32 %v1820, 7
    %v1822 = vsub.s32 0, %v1821
    %v1823 = vrot.slane %v1818, %v1822
    %v1833 = vsel %vm121, %v1759, %v1752
    %v1834 = vsel %vm124, %v1766, %v1833
    %v1835 = vsel %vm127, %v1773, %v1834
    %v1836 = vsel %vm130, %v1780, %v1835
    %v1837 = vsel %vm133, %v1787, %v1836
    %v1838 = vsel %vm136, %v1794, %v1837
    %v1839 = vsel %vm139, %v1801, %v1838
    %1841 = vmatprep.subr.mxu0 0.0
    %1842 = vmatpush1.msra.mxu0 %v1817
    %1843 = vmatprep.subr.mxu0 0.0
    %1844 = vmatpush1.msra.mxu0 %v1816
    %1845 = vmatprep.subr.mxu0 0.0
    %1846 = vmatpush1.msra.mxu0 %v1815
    %1847 = vmatprep.subr.mxu0 0.0
    %1848 = vmatpush1.msra.mxu0 %v1814
    %1849 = vmatprep.subr.mxu0 0.0
    %1850 = vmatpush1.msra.mxu0 %v1813
    %1851 = vmatprep.subr.mxu0 0.0
    %1852 = vmatpush1.msra.mxu0 %v1812
    %1853 = vmatprep.subr.mxu0 0.0
    %1854 = vmatpush1.msra.mxu0 %v1811
    %1855 = vmatprep.subr.mxu0 0.0
    %1856 = vmatpush1.msra.mxu0 %v1810
    %1857 = vmatprep.subr.mxu0 0.0
    %1858 = vmatpush1.msra.mxu0 %v1809
    %1859 = vmatprep.subr.mxu0 0.0
    %1860 = vmatpush1.msra.mxu0 %v1808
    %1861 = vmatprep.subr.mxu0 0.0
    %1862 = vmatpush1.msra.mxu0 %v1807
    %1863 = vmatprep.subr.mxu0 0.0
    %1864 = vmatpush1.msra.mxu0 %v1806
    %1865 = vmatprep.subr.mxu0 0.0
    %1866 = vmatpush1.msra.mxu0 %v1805
    %1867 = vmatprep.subr.mxu0 0.0
    %1868 = vmatpush1.msra.mxu0 %v1804
    %1869 = vmatprep.subr.mxu0 0.0
    %1870 = vmatpush1.msra.mxu0 %v1803
    %1871 = vmatprep.subr.mxu0 0.0
    %1872 = vmatpush1.msra.mxu0 %v1802
    %1873 = vmatprep.subr.mxu0 0.0
    %1874 = vmatpush2.msra.mxu0 0.0
    %1875 = vmatprep.subr.mxu0 0.0
    %1876 = vmatpush2.msra.mxu0 0.0
    %1877 = vmatprep.subr.mxu0 0.0
    %1878 = vmatpush2.msra.mxu0 0.0
    %1879 = vmatprep.subr.mxu0 0.0
    %1880 = vmatpush2.msra.mxu0 0.0
    %1881 = vmatprep.subr.mxu0 0.0
    %1882 = vmatpush2.msra.mxu0 0.0
    %1883 = vmatprep.subr.mxu0 0.0
    %1884 = vmatpush2.msra.mxu0 0.0
    %1885 = vmatprep.subr.mxu0 0.0
    %1886 = vmatpush2.msra.mxu0 0.0
    %1887 = vmatprep.subr.mxu0 0.0
    %1888 = vmatpush2.msra.mxu0 0.0
    %1889 = vmatprep.subr.mxu0 0.0
    %1890 = vmatpush2.msra.mxu0 0.0
    %1891 = vmatprep.subr.mxu0 0.0
    %1892 = vmatpush2.msra.mxu0 0.0
    %1893 = vmatprep.subr.mxu0 0.0
    %1894 = vmatpush2.msra.mxu0 0.0
    %1895 = vmatprep.subr.mxu0 0.0
    %1896 = vmatpush2.msra.mxu0 0.0
    %1897 = vmatprep.subr.mxu0 0.0
    %1898 = vmatpush2.msra.mxu0 0.0
    %1899 = vmatprep.subr.mxu0 0.0
    %1900 = vmatpush2.msra.mxu0 0.0
    %1901 = vmatprep.subr.mxu0 0.0
    %1902 = vmatpush2.msra.mxu0 0.0
    %1903 = vmatprep.subr.mxu0 0.0
    %1904 = vmatpush2.msra.mxu0 0.0
    %1905 = vmatprep.mubr.f32.mxu0 0.0
    %1906 = vmatmul.mubr.f32.gmra.mxu0 %v1839
    %v1907 = vpop.f32.mrf.mxu0
    %v1908 = vadd.f32 %v1823, %v1907
    %v1909 = vpop.f32.mrf.mxu0
    %1910 = vdwg.mxu0
    %1911 = vst [vmem:[#allocation10] sm:$0xff] %v1908
    // Predicated region
    $region42: #{tpu_custom_call.1} parent=1 // pred_check
      _
    $region43: #{tpu_custom_call.1} parent=1 // pred_check_branch
      %1913 = sbr.rel (0) target = $region45
    $region44: #{tpu_custom_call.1} parent=1 // pred_region
      %s1915 = ssub.s32 128, 128
      %1916 = vsyncadd [#allocation4], %s1915
      %s1918 = sshll.u32 [#allocation10], 4
      %s1919 = int_to_ptr.vmem [resolvable:$true] %s1918
      %1921 = dma.vmem_to_hbm [thread:$0]  %s1919, 128, %s6, [#allocation4]
    $region45: #{tpu_custom_call.1} parent=1 // pred_fallthru
      _
    // Predicated region
    $region46: #{tpu_custom_call.1} parent=1 // pred_check
      _
    $region47: #{tpu_custom_call.1} parent=1 // pred_check_branch
      %1923 = sbr.rel (0) target = $region49
    $region48: #{tpu_custom_call.1} parent=1 // pred_region
      %1924 = dma.done [#allocation4], 128
    $region49: #{tpu_custom_call.1} parent=1 // pred_fallthru
      _
    %1925 = vsyncpa [#allocation3], 1
    %1926 = vsyncpa [#allocation6], 1
    %1927 = vsyncpa [#allocation9], 1
    %1928 = vsyncpa [#allocation4], 1

// kernel: tpu_custom_call.1
$region0: #{tpu_custom_call.1}
  #allocation0 [shape = 'u32[]', space=smem, size = 0x4, offset = 0x4, fixed_abs, tag = 'smem constant byte address 0x4 - core index']
  #allocation1 [shape = 'u32[144,128]{1,0:T(1,128)}', space=vmem, size = 0x12000, scoped, tag = 'internal scratch']
  %s0 = inlined_call_operand.hbm [shape: f32[8,16,128], index: 0, kind: input, shape index: {}]
  %s1 = inlined_call_operand.hbm [shape: f32[128,128], index: 1, kind: input, shape index: {}]
  %s2 = inlined_call_operand.hbm [shape: f32[128,256], index: 2, kind: input, shape index: {}]
  %s3 = inlined_call_operand.hbm [shape: f32[128,128], index: 3, kind: input, shape index: {}]
  %s4 = inlined_call_operand.vmem [shape: f32[1,128], index: 4, kind: input, shape index: {}]
  %s5 = inlined_call_operand.vmem [shape: f32[4,128], index: 5, kind: input, shape index: {}]
  %s6 = inlined_call_operand.hbm [shape: f32[8,128], index: 6, kind: output, shape index: {}]
  %s7 = sld [smem:[#allocation0]]
  $region50: #{tpu_custom_call.1} parent=0
    _
  %s9 = ssub.s32 1, %s7
  %s10 = scalar_select 0, %s9, %s7
  $region1: #{tpu_custom_call.1} parent=0
    #allocation2 [shape = 'u8[65536]{0}', space=vmem, size = 0x10000, scoped, tag = 'input window, operand 0, single buffered']
    #allocation3 [shape = 's32[1]{0}', space=sflag, size = 0x4, scoped, tag = 'scoped memory for tpu_custom_call.1']
    #allocation4 [shape = 's32[1]{0}', space=sflag, size = 0x4, scoped, tag = 'scoped memory for tpu_custom_call.1']
    #allocation5 [shape = 'u8[65536]{0}', space=vmem, size = 0x10000, scoped, tag = 'input window, operand 1, single buffered']
    #allocation6 [shape = 's32[1]{0}', space=sflag, size = 0x4, scoped, tag = 'scoped memory for tpu_custom_call.1']
    #allocation7 [shape = 'u8[131072]{0}', space=vmem, size = 0x20000, scoped, tag = 'input window, operand 2, single buffered']
    #allocation8 [shape = 'u8[65536]{0}', space=vmem, size = 0x10000, scoped, tag = 'input window, operand 3, single buffered']
    #allocation9 [shape = 's32[1]{0}', space=sflag, size = 0x4, scoped, tag = 'scoped memory for tpu_custom_call.1']
    #allocation10 [shape = 'u8[4096]{0}', space=vmem, size = 0x1000, scoped, tag = 'output window, operand 0, single buffered']
    %11 = vsyncpa [#allocation3], 0
    %12 = vsyncpa [#allocation6], 0
    %13 = vsyncpa [#allocation9], 0
    %14 = vsyncpa [#allocation4], 0
    // Predicated region
    $region2: #{tpu_custom_call.1} parent=1 // pred_check
      _
    $region3: #{tpu_custom_call.1} parent=1 // pred_check_branch
      %16 = sbr.rel (0) target = $region5
    $region4: #{tpu_custom_call.1} parent=1 // pred_region
      %s18 = ssub.s32 2048, 2048
      %19 = vsyncadd [#allocation3], %s18
      %s20 = sshll.u32 [#allocation2], 4
      %s21 = int_to_ptr.vmem [resolvable:$true] %s20
      %26 = dma.hbm_to_vmem [thread:$0]  %s0, 2048, %s21, [#allocation3], 128, 128, 8
    $region5: #{tpu_custom_call.1} parent=1 // pred_fallthru
      _
    // Predicated region
    $region6: #{tpu_custom_call.1} parent=1 // pred_check
      _
    $region7: #{tpu_custom_call.1} parent=1 // pred_check_branch
      %28 = sbr.rel (0) target = $region9
    $region8: #{tpu_custom_call.1} parent=1 // pred_region
      %s30 = ssub.s32 2048, 2048
      %31 = vsyncadd [#allocation6], %s30
      %s32 = sshll.u32 [#allocation5], 4
      %s33 = int_to_ptr.vmem [resolvable:$true] %s32
      %38 = dma.hbm_to_vmem [thread:$0]  %s1, 2048, %s33, [#allocation6], 128, 128, 8
    $region9: #{tpu_custom_call.1} parent=1 // pred_fallthru
      _
    // Predicated region
    $region10: #{tpu_custom_call.1} parent=1 // pred_check
      _
    $region11: #{tpu_custom_call.1} parent=1 // pred_check_branch
      %40 = sbr.rel (0) target = $region13
    $region12: #{tpu_custom_call.1} parent=1 // pred_region
      %s42 = ssub.s32 4096, 4096
      %43 = vsyncadd [#allocation6], %s42
      %s44 = sshll.u32 [#allocation7], 4
      %s45 = int_to_ptr.vmem [resolvable:$true] %s44
      %50 = dma.hbm_to_vmem [thread:$0]  %s2, 4096, %s45, [#allocation6], 256, 256, 16
    $region13: #{tpu_custom_call.1} parent=1 // pred_fallthru
      _
    // Predicated region
    $region14: #{tpu_custom_call.1} parent=1 // pred_check
      _
    $region15: #{tpu_custom_call.1} parent=1 // pred_check_branch
      %52 = sbr.rel (0) target = $region17
    $region16: #{tpu_custom_call.1} parent=1 // pred_region
      %s54 = ssub.s32 2048, 2048
      %55 = vsyncadd [#allocation9], %s54
      %s56 = sshll.u32 [#allocation8], 4
      %s57 = int_to_ptr.vmem [resolvable:$true] %s56
      %62 = dma.hbm_to_vmem [thread:$0]  %s3, 2048, %s57, [#allocation9], 128, 128, 8
    $region17: #{tpu_custom_call.1} parent=1 // pred_fallthru
      _
    // Predicated region
    $region18: #{tpu_custom_call.1} parent=1 // pred_check
      _
    $region19: #{tpu_custom_call.1} parent=1 // pred_check_branch
      %64 = sbr.rel (0) target = $region21
    $region20: #{tpu_custom_call.1} parent=1 // pred_region
      _
    $region21: #{tpu_custom_call.1} parent=1 // pred_fallthru
      _
    // Predicated region
    $region22: #{tpu_custom_call.1} parent=1 // pred_check
      _
    $region23: #{tpu_custom_call.1} parent=1 // pred_check_branch
      %66 = sbr.rel (0) target = $region25
    $region24: #{tpu_custom_call.1} parent=1 // pred_region
      _
    $region25: #{tpu_custom_call.1} parent=1 // pred_fallthru
      _
    // Predicated region
    $region26: #{tpu_custom_call.1} parent=1 // pred_check
      _
    $region27: #{tpu_custom_call.1} parent=1 // pred_check_branch
      %68 = sbr.rel (0) target = $region29
    $region28: #{tpu_custom_call.1} parent=1 // pred_region
      %69 = dma.done [#allocation3], 2048
    $region29: #{tpu_custom_call.1} parent=1 // pred_fallthru
      _
    // Predicated region
    $region30: #{tpu_custom_call.1} parent=1 // pred_check
      _
    $region31: #{tpu_custom_call.1} parent=1 // pred_check_branch
      %71 = sbr.rel (0) target = $region33
    $region32: #{tpu_custom_call.1} parent=1 // pred_region
      %72 = dma.done [#allocation6], 2048
    $region33: #{tpu_custom_call.1} parent=1 // pred_fallthru
      _
    // Predicated region
    $region34: #{tpu_custom_call.1} parent=1 // pred_check
      _
    $region35: #{tpu_custom_call.1} parent=1 // pred_check_branch
      %74 = sbr.rel (0) target = $region37
    $region36: #{tpu_custom_call.1} parent=1 // pred_region
      %75 = dma.done [#allocation6], 4096
    $region37: #{tpu_custom_call.1} parent=1 // pred_fallthru
      _
    // Predicated region
    $region38: #{tpu_custom_call.1} parent=1 // pred_check
      _
    $region39: #{tpu_custom_call.1} parent=1 // pred_check_branch
      %77 = sbr.rel (0) target = $region41
    $region40: #{tpu_custom_call.1} parent=1 // pred_region
      %78 = dma.done [#allocation9], 2048
    $region41: #{tpu_custom_call.1} parent=1 // pred_fallthru
      _
    %v79 = vld [vmem:[#allocation2] sm:$0xff]
    %v80 = vld [vmem:[#allocation2 + $0x8] sm:$0xff]
    %v81 = vld [vmem:[#allocation2 + $0x10] sm:$0xff]
    %v82 = vld [vmem:[#allocation2 + $0x18] sm:$0xff]
    %v83 = vld [vmem:[#allocation2 + $0x20] sm:$0xff]
    %v84 = vld [vmem:[#allocation2 + $0x28] sm:$0xff]
    %v85 = vld [vmem:[#allocation2 + $0x30] sm:$0xff]
    %v86 = vld [vmem:[#allocation2 + $0x38] sm:$0xff]
    %v87 = vld [vmem:[#allocation2 + $0x40] sm:$0xff]
    %v88 = vld [vmem:[#allocation2 + $0x48] sm:$0xff]
    %v89 = vld [vmem:[#allocation2 + $0x50] sm:$0xff]
    %v90 = vld [vmem:[#allocation2 + $0x58] sm:$0xff]
    %v91 = vld [vmem:[#allocation2 + $0x60] sm:$0xff]
    %v92 = vld [vmem:[#allocation2 + $0x68] sm:$0xff]
    %v93 = vld [vmem:[#allocation2 + $0x70] sm:$0xff]
    %v94 = vld [vmem:[#allocation2 + $0x78] sm:$0xff]
    %v95 = vld [vmem:[%s5] sm:$0xf]
    %v96 = vld [vmem:[#allocation5] sm:$0xff]
    %v97 = vld [vmem:[#allocation5 + $0x8] sm:$0xff]
    %v98 = vld [vmem:[#allocation5 + $0x10] sm:$0xff]
    %v99 = vld [vmem:[#allocation5 + $0x18] sm:$0xff]
    %v100 = vld [vmem:[#allocation5 + $0x20] sm:$0xff]
    %v101 = vld [vmem:[#allocation5 + $0x28] sm:$0xff]
    %v102 = vld [vmem:[#allocation5 + $0x30] sm:$0xff]
    %v103 = vld [vmem:[#allocation5 + $0x38] sm:$0xff]
    %v104 = vld [vmem:[#allocation5 + $0x40] sm:$0xff]
    %v105 = vld [vmem:[#allocation5 + $0x48] sm:$0xff]
    %v106 = vld [vmem:[#allocation5 + $0x50] sm:$0xff]
    %v107 = vld [vmem:[#allocation5 + $0x58] sm:$0xff]
    %v108 = vld [vmem:[#allocation5 + $0x60] sm:$0xff]
    %v109 = vld [vmem:[#allocation5 + $0x68] sm:$0xff]
    %v110 = vld [vmem:[#allocation5 + $0x70] sm:$0xff]
    %v111 = vld [vmem:[#allocation5 + $0x78] sm:$0xff]
    %v120 = vrot.slane %v81, 7
    %vm121 = vcmask 1041409
    %v122 = vsel %vm121, %v120, %v79
    %v123 = vrot.slane %v83, 6
    %vm124 = vcmask 1042434
    %v125 = vsel %vm124, %v123, %v122
    %v126 = vrot.slane %v85, 5
    %vm127 = vcmask 1043459
    %v128 = vsel %vm127, %v126, %v125
    %v129 = vrot.slane %v87, 4
    %vm130 = vcmask 1044484
    %v131 = vsel %vm130, %v129, %v128
    %v132 = vrot.slane %v89, 3
    %vm133 = vcmask 1045509
    %v134 = vsel %vm133, %v132, %v131
    %v135 = vrot.slane %v91, 2
    %vm136 = vcmask 1046534
    %v137 = vsel %vm136, %v135, %v134
    %v138 = vrot.slane %v93, 1
    %vm139 = vcmask 1047559
    %v140 = vsel %vm139, %v138, %v137
    %142 = vmatprep.subr.mxu0 0.0
    %143 = vmatpush1.msra.mxu0 %v111
    %144 = vmatprep.subr.mxu0 0.0
    %145 = vmatpush1.msra.mxu0 %v110
    %146 = vmatprep.subr.mxu0 0.0
    %147 = vmatpush1.msra.mxu0 %v109
    %148 = vmatprep.subr.mxu0 0.0
    %149 = vmatpush1.msra.mxu0 %v108
    %150 = vmatprep.subr.mxu0 0.0
    %151 = vmatpush1.msra.mxu0 %v107
    %152 = vmatprep.subr.mxu0 0.0
    %153 = vmatpush1.msra.mxu0 %v106
    %154 = vmatprep.subr.mxu0 0.0
    %155 = vmatpush1.msra.mxu0 %v105
    %156 = vmatprep.subr.mxu0 0.0
    %157 = vmatpush1.msra.mxu0 %v104
    %158 = vmatprep.subr.mxu0 0.0
    %159 = vmatpush1.msra.mxu0 %v103
    %160 = vmatprep.subr.mxu0 0.0
    %161 = vmatpush1.msra.mxu0 %v102
    %162 = vmatprep.subr.mxu0 0.0
    %163 = vmatpush1.msra.mxu0 %v101
    %164 = vmatprep.subr.mxu0 0.0
    %165 = vmatpush1.msra.mxu0 %v100
    %166 = vmatprep.subr.mxu0 0.0
    %167 = vmatpush1.msra.mxu0 %v99
    %168 = vmatprep.subr.mxu0 0.0
    %169 = vmatpush1.msra.mxu0 %v98
    %170 = vmatprep.subr.mxu0 0.0
    %171 = vmatpush1.msra.mxu0 %v97
    %172 = vmatprep.subr.mxu0 0.0
    %173 = vmatpush1.msra.mxu0 %v96
    %174 = vmatprep.subr.mxu0 0.0
    %175 = vmatpush2.msra.mxu0 0.0
    %176 = vmatprep.subr.mxu0 0.0
    %177 = vmatpush2.msra.mxu0 0.0
    %178 = vmatprep.subr.mxu0 0.0
    %179 = vmatpush2.msra.mxu0 0.0
    %180 = vmatprep.subr.mxu0 0.0
    %181 = vmatpush2.msra.mxu0 0.0
    %182 = vmatprep.subr.mxu0 0.0
    %183 = vmatpush2.msra.mxu0 0.0
    %184 = vmatprep.subr.mxu0 0.0
    %185 = vmatpush2.msra.mxu0 0.0
    %186 = vmatprep.subr.mxu0 0.0
    %187 = vmatpush2.msra.mxu0 0.0
    %188 = vmatprep.subr.mxu0 0.0
    %189 = vmatpush2.msra.mxu0 0.0
    %190 = vmatprep.subr.mxu0 0.0
    %191 = vmatpush2.msra.mxu0 0.0
    %192 = vmatprep.subr.mxu0 0.0
    %193 = vmatpush2.msra.mxu0 0.0
    %194 = vmatprep.subr.mxu0 0.0
    %195 = vmatpush2.msra.mxu0 0.0
    %196 = vmatprep.subr.mxu0 0.0
    %197 = vmatpush2.msra.mxu0 0.0
    %198 = vmatprep.subr.mxu0 0.0
    %199 = vmatpush2.msra.mxu0 0.0
    %200 = vmatprep.subr.mxu0 0.0
    %201 = vmatpush2.msra.mxu0 0.0
    %202 = vmatprep.subr.mxu0 0.0
    %203 = vmatpush2.msra.mxu0 0.0
    %204 = vmatprep.subr.mxu0 0.0
    %205 = vmatpush2.msra.mxu0 0.0
    %206 = vmatprep.mubr.f32.mxu0 0.0
    %207 = vmatmul.mubr.f32.gmra.mxu0 %v140
    %v208 = vpop.f32.mrf.mxu0
    %v209 = vadd.f32 0.0, %v208
    %v210 = vpop.f32.mrf.mxu0
    %211 = vdwg.mxu0
    %v212 = vld [vmem:[#allocation7] sm:$0xff]
    %v213 = vld [vmem:[#allocation7 + $0x8] sm:$0xff]
    %v214 = vld [vmem:[#allocation7 + $0x10] sm:$0xff]
    %v215 = vld [vmem:[#allocation7 + $0x18] sm:$0xff]
    %v216 = vld [vmem:[#allocation7 + $0x20] sm:$0xff]
    %v217 = vld [vmem:[#allocation7 + $0x28] sm:$0xff]
    %v218 = vld [vmem:[#allocation7 + $0x30] sm:$0xff]
    %v219 = vld [vmem:[#allocation7 + $0x38] sm:$0xff]
    %v220 = vld [vmem:[#allocation7 + $0x40] sm:$0xff]
    %v221 = vld [vmem:[#allocation7 + $0x48] sm:$0xff]
    %v222 = vld [vmem:[#allocation7 + $0x50] sm:$0xff]
    %v223 = vld [vmem:[#allocation7 + $0x58] sm:$0xff]
    %v224 = vld [vmem:[#allocation7 + $0x60] sm:$0xff]
    %v225 = vld [vmem:[#allocation7 + $0x68] sm:$0xff]
    %v226 = vld [vmem:[#allocation7 + $0x70] sm:$0xff]
    %v227 = vld [vmem:[#allocation7 + $0x78] sm:$0xff]
    %v228 = vld [vmem:[#allocation7 + $0x80] sm:$0xff]
    %v229 = vld [vmem:[#allocation7 + $0x88] sm:$0xff]
    %v230 = vld [vmem:[#allocation7 + $0x90] sm:$0xff]
    %v231 = vld [vmem:[#allocation7 + $0x98] sm:$0xff]
    %v232 = vld [vmem:[#allocation7 + $0xa0] sm:$0xff]
    %v233 = vld [vmem:[#allocation7 + $0xa8] sm:$0xff]
    %v234 = vld [vmem:[#allocation7 + $0xb0] sm:$0xff]
    %v235 = vld [vmem:[#allocation7 + $0xb8] sm:$0xff]
    %v236 = vld [vmem:[#allocation7 + $0xc0] sm:$0xff]
    %v237 = vld [vmem:[#allocation7 + $0xc8] sm:$0xff]
    %v238 = vld [vmem:[#allocation7 + $0xd0] sm:$0xff]
    %v239 = vld [vmem:[#allocation7 + $0xd8] sm:$0xff]
    %v240 = vld [vmem:[#allocation7 + $0xe0] sm:$0xff]
    %v241 = vld [vmem:[#allocation7 + $0xe8] sm:$0xff]
    %v242 = vld [vmem:[#allocation7 + $0xf0] sm:$0xff]
    %v243 = vld [vmem:[#allocation7 + $0xf8] sm:$0xff]
    %244 = vmatprep.subr.mxu0 %v243
    %245 = vmatpush1.msra.mxu0 %v242
    %246 = vmatprep.subr.mxu0 %v241
    %247 = vmatpush1.msra.mxu0 %v240
    %248 = vmatprep.subr.mxu0 %v239
    %249 = vmatpush1.msra.mxu0 %v238
    %250 = vmatprep.subr.mxu0 %v237
    %251 = vmatpush1.msra.mxu0 %v236
    %252 = vmatprep.subr.mxu0 %v235
    %253 = vmatpush1.msra.mxu0 %v234
    %254 = vmatprep.subr.mxu0 %v233
    %255 = vmatpush1.msra.mxu0 %v232
    %256 = vmatprep.subr.mxu0 %v231
    %257 = vmatpush1.msra.mxu0 %v230
    %258 = vmatprep.subr.mxu0 %v229
    %259 = vmatpush1.msra.mxu0 %v228
    %260 = vmatprep.subr.mxu0 %v227
    %261 = vmatpush1.msra.mxu0 %v226
    %262 = vmatprep.subr.mxu0 %v225
    %263 = vmatpush1.msra.mxu0 %v224
    %264 = vmatprep.subr.mxu0 %v223
    %265 = vmatpush1.msra.mxu0 %v222
    %266 = vmatprep.subr.mxu0 %v221
    %267 = vmatpush1.msra.mxu0 %v220
    %268 = vmatprep.subr.mxu0 %v219
    %269 = vmatpush1.msra.mxu0 %v218
    %270 = vmatprep.subr.mxu0 %v217
    %271 = vmatpush1.msra.mxu0 %v216
    %272 = vmatprep.subr.mxu0 %v215
    %273 = vmatpush1.msra.mxu0 %v214
    %274 = vmatprep.subr.mxu0 %v213
    %275 = vmatpush1.msra.mxu0 %v212
    %276 = vmatprep.subr.mxu0 0.0
    %277 = vmatpush2.msra.mxu0 0.0
    %278 = vmatprep.subr.mxu0 0.0
    %279 = vmatpush2.msra.mxu0 0.0
    %280 = vmatprep.subr.mxu0 0.0
    %281 = vmatpush2.msra.mxu0 0.0
    %282 = vmatprep.subr.mxu0 0.0
    %283 = vmatpush2.msra.mxu0 0.0
    %284 = vmatprep.subr.mxu0 0.0
    %285 = vmatpush2.msra.mxu0 0.0
    %286 = vmatprep.subr.mxu0 0.0
    %287 = vmatpush2.msra.mxu0 0.0
    %288 = vmatprep.subr.mxu0 0.0
    %289 = vmatpush2.msra.mxu0 0.0
    %290 = vmatprep.subr.mxu0 0.0
    %291 = vmatpush2.msra.mxu0 0.0
    %292 = vmatprep.subr.mxu0 0.0
    %293 = vmatpush2.msra.mxu0 0.0
    %294 = vmatprep.subr.mxu0 0.0
    %295 = vmatpush2.msra.mxu0 0.0
    %296 = vmatprep.subr.mxu0 0.0
    %297 = vmatpush2.msra.mxu0 0.0
    %298 = vmatprep.subr.mxu0 0.0
    %299 = vmatpush2.msra.mxu0 0.0
    %300 = vmatprep.subr.mxu0 0.0
    %301 = vmatpush2.msra.mxu0 0.0
    %302 = vmatprep.subr.mxu0 0.0
    %303 = vmatpush2.msra.mxu0 0.0
    %304 = vmatprep.subr.mxu0 0.0
    %305 = vmatpush2.msra.mxu0 0.0
    %306 = vmatprep.subr.mxu0 0.0
    %307 = vmatpush2.msra.mxu0 0.0
    %308 = vmatprep.mubr.f32.mxu0 0.0
    %309 = vmatmul.mubr.f32.gmra.mxu0 %v79
    %v310 = vpop.f32.mrf.mxu0
    %v311 = vadd.f32 0.0, %v310
    %v312 = vpop.f32.mrf.mxu0
    %v313 = vadd.f32 0.0, %v312
    %314 = vmatprep.mubr.f32.mxu0 0.0
    %315 = vmatmul.mubr.f32.gmra.mxu0 %v80
    %v316 = vpop.f32.mrf.mxu0
    %v317 = vadd.f32 0.0, %v316
    %v318 = vpop.f32.mrf.mxu0
    %v319 = vadd.f32 0.0, %v318
    %320 = vmatprep.mubr.f32.mxu0 0.0
    %321 = vmatmul.mubr.f32.gmra.mxu0 %v81
    %v322 = vpop.f32.mrf.mxu0
    %v323 = vadd.f32 0.0, %v322
    %v324 = vpop.f32.mrf.mxu0
    %v325 = vadd.f32 0.0, %v324
    %326 = vmatprep.mubr.f32.mxu0 0.0
    %327 = vmatmul.mubr.f32.gmra.mxu0 %v82
    %v328 = vpop.f32.mrf.mxu0
    %v329 = vadd.f32 0.0, %v328
    %v330 = vpop.f32.mrf.mxu0
    %v331 = vadd.f32 0.0, %v330
    %332 = vmatprep.mubr.f32.mxu0 0.0
    %333 = vmatmul.mubr.f32.gmra.mxu0 %v83
    %v334 = vpop.f32.mrf.mxu0
    %v335 = vadd.f32 0.0, %v334
    %v336 = vpop.f32.mrf.mxu0
    %v337 = vadd.f32 0.0, %v336
    %338 = vmatprep.mubr.f32.mxu0 0.0
    %339 = vmatmul.mubr.f32.gmra.mxu0 %v84
    %v340 = vpop.f32.mrf.mxu0
    %v341 = vadd.f32 0.0, %v340
    %v342 = vpop.f32.mrf.mxu0
    %v343 = vadd.f32 0.0, %v342
    %344 = vmatprep.mubr.f32.mxu0 0.0
    %345 = vmatmul.mubr.f32.gmra.mxu0 %v85
    %v346 = vpop.f32.mrf.mxu0
    %v347 = vadd.f32 0.0, %v346
    %v348 = vpop.f32.mrf.mxu0
    %v349 = vadd.f32 0.0, %v348
    %350 = vmatprep.mubr.f32.mxu0 0.0
    %351 = vmatmul.mubr.f32.gmra.mxu0 %v86
    %v352 = vpop.f32.mrf.mxu0
    %v353 = vadd.f32 0.0, %v352
    %v354 = vpop.f32.mrf.mxu0
    %v355 = vadd.f32 0.0, %v354
    %356 = vmatprep.mubr.f32.mxu0 0.0
    %357 = vmatmul.mubr.f32.gmra.mxu0 %v87
    %v358 = vpop.f32.mrf.mxu0
    %v359 = vadd.f32 0.0, %v358
    %v360 = vpop.f32.mrf.mxu0
    %v361 = vadd.f32 0.0, %v360
    %362 = vmatprep.mubr.f32.mxu0 0.0
    %363 = vmatmul.mubr.f32.gmra.mxu0 %v88
    %v364 = vpop.f32.mrf.mxu0
    %v365 = vadd.f32 0.0, %v364
    %v366 = vpop.f32.mrf.mxu0
    %v367 = vadd.f32 0.0, %v366
    %368 = vmatprep.mubr.f32.mxu0 0.0
    %369 = vmatmul.mubr.f32.gmra.mxu0 %v89
    %v370 = vpop.f32.mrf.mxu0
    %v371 = vadd.f32 0.0, %v370
    %v372 = vpop.f32.mrf.mxu0
    %v373 = vadd.f32 0.0, %v372
    %374 = vmatprep.mubr.f32.mxu0 0.0
    %375 = vmatmul.mubr.f32.gmra.mxu0 %v90
    %v376 = vpop.f32.mrf.mxu0
    %v377 = vadd.f32 0.0, %v376
    %v378 = vpop.f32.mrf.mxu0
    %v379 = vadd.f32 0.0, %v378
    %380 = vmatprep.mubr.f32.mxu0 0.0
    %381 = vmatmul.mubr.f32.gmra.mxu0 %v91
    %v382 = vpop.f32.mrf.mxu0
    %v383 = vadd.f32 0.0, %v382
    %v384 = vpop.f32.mrf.mxu0
    %v385 = vadd.f32 0.0, %v384
    %386 = vmatprep.mubr.f32.mxu0 0.0
    %387 = vmatmul.mubr.f32.gmra.mxu0 %v92
    %v388 = vpop.f32.mrf.mxu0
    %v389 = vadd.f32 0.0, %v388
    %v390 = vpop.f32.mrf.mxu0
    %v391 = vadd.f32 0.0, %v390
    %392 = vmatprep.mubr.f32.mxu0 0.0
    %393 = vmatmul.mubr.f32.gmra.mxu0 %v93
    %v394 = vpop.f32.mrf.mxu0
    %v395 = vadd.f32 0.0, %v394
    %v396 = vpop.f32.mrf.mxu0
    %v397 = vadd.f32 0.0, %v396
    %398 = vmatprep.mubr.f32.mxu0 0.0
    %399 = vmatmul.mubr.f32.gmra.mxu0 %v94
    %v400 = vpop.f32.mrf.mxu0
    %v401 = vadd.f32 0.0, %v400
    %v402 = vpop.f32.mrf.mxu0
    %v403 = vadd.f32 0.0, %v402
    %404 = vdwg.mxu0
    %v406 = vcombine.high %v209, %v209
    %v408 = vunpack.c.l.s4 1966171168
    %v409 = vunpack.c.0.s8 %v408
    %v410 = vlaneseq
    %v411 = vshrl.u32 %v410, 7
    %v412 = vsub.s32 %v409, %v411
    %v413 = vrot.slane %v209, %v412
    %v415 = vunpack.c.l.s4 1966171168
    %v416 = vunpack.c.0.s8 %v415
    %v417 = vlaneseq
    %v418 = vshrl.u32 %v417, 7
    %v419 = vsub.s32 %v416, %v418
    %v420 = vrot.slane %v406, %v419
    %v421 = vcombine.high %v413, %v413
    %v422 = vcombine.high %v420, %v420
    %v424 = vunpack.c.l.s4 1966171168
    %v425 = vunpack.c.0.s8 %v424
    %v426 = vlaneseq
    %v427 = vshrl.u32 %v426, 7
    %v428 = vsub.s32 %v425, %v427
    %v429 = vrot.slane %v413, %v428
    %v431 = vunpack.c.l.s4 1966171168
    %v432 = vunpack.c.0.s8 %v431
    %v433 = vlaneseq
    %v434 = vshrl.u32 %v433, 7
    %v435 = vsub.s32 %v432, %v434
    %v436 = vrot.slane %v420, %v435
    %v438 = vunpack.c.l.s4 1966171168
    %v439 = vunpack.c.0.s8 %v438
    %v440 = vlaneseq
    %v441 = vshrl.u32 %v440, 7
    %v442 = vsub.s32 %v439, %v441
    %v443 = vrot.slane %v421, %v442
    %v445 = vunpack.c.l.s4 1966171168
    %v446 = vunpack.c.0.s8 %v445
    %v447 = vlaneseq
    %v448 = vshrl.u32 %v447, 7
    %v449 = vsub.s32 %v446, %v448
    %v450 = vrot.slane %v422, %v449
    %v451 = vcombine.high %v429, %v429
    %v452 = vcombine.high %v436, %v436
    %v453 = vcombine.high %v443, %v443
    %v454 = vcombine.high %v450, %v450
    %v455 = vlaneseq
    %v456 = vshrl.u32 %v455, 7
    %v457 = vsub.s32 0, %v456
    %v458 = vrot.slane %v429, %v457
    %v459 = vlaneseq
    %v460 = vshrl.u32 %v459, 7
    %v461 = vsub.s32 0, %v460
    %v462 = vrot.slane %v443, %v461
    %v463 = vlaneseq
    %v464 = vshrl.u32 %v463, 7
    %v465 = vsub.s32 0, %v464
    %v466 = vrot.slane %v451, %v465
    %v467 = vlaneseq
    %v468 = vshrl.u32 %v467, 7
    %v469 = vsub.s32 0, %v468
    %v470 = vrot.slane %v453, %v469
    %v471 = vlaneseq
    %v472 = vshrl.u32 %v471, 7
    %v473 = vsub.s32 0, %v472
    %v474 = vrot.slane %v436, %v473
    %v475 = vlaneseq
    %v476 = vshrl.u32 %v475, 7
    %v477 = vsub.s32 0, %v476
    %v478 = vrot.slane %v450, %v477
    %v479 = vlaneseq
    %v480 = vshrl.u32 %v479, 7
    %v481 = vsub.s32 0, %v480
    %v482 = vrot.slane %v452, %v481
    %v483 = vlaneseq
    %v484 = vshrl.u32 %v483, 7
    %v485 = vsub.s32 0, %v484
    %v486 = vrot.slane %v454, %v485
    %v495 = vmul.f32 %v458, %v95
    %v496 = vmul.f32 %v462, %v95
    %v497 = vmul.f32 %v466, %v95
    %v498 = vmul.f32 %v470, %v95
    %v499 = vmul.f32 %v474, %v95
    %v500 = vmul.f32 %v478, %v95
    %v501 = vmul.f32 %v482, %v95
    %v502 = vmul.f32 %v486, %v95
    %503 = vmatprep.subr.mxu0 0.0
    %504 = vmatpush1.xpose.msra.mxu0 0.0
    %505 = vmatprep.subr.mxu0 0.0
    %506 = vmatpush1.xpose.msra.mxu0 0.0
    %507 = vmatprep.subr.mxu0 0.0
    %508 = vmatpush1.xpose.msra.mxu0 0.0
    %509 = vmatprep.subr.mxu0 0.0
    %510 = vmatpush1.xpose.msra.mxu0 0.0
    %511 = vmatprep.subr.mxu0 0.0
    %512 = vmatpush1.xpose.msra.mxu0 0.0
    %513 = vmatprep.subr.mxu0 0.0
    %514 = vmatpush1.xpose.msra.mxu0 0.0
    %515 = vmatprep.subr.mxu0 0.0
    %516 = vmatpush1.xpose.msra.mxu0 0.0
    %517 = vmatprep.subr.mxu0 0.0
    %518 = vmatpush1.xpose.msra.mxu0 0.0
    %519 = vmatprep.subr.mxu0 0.0
    %520 = vmatpush1.xpose.msra.mxu0 0.0
    %521 = vmatprep.subr.mxu0 0.0
    %522 = vmatpush1.xpose.msra.mxu0 0.0
    %523 = vmatprep.subr.mxu0 0.0
    %524 = vmatpush1.xpose.msra.mxu0 0.0
    %525 = vmatprep.subr.mxu0 0.0
    %526 = vmatpush1.xpose.msra.mxu0 0.0
    %527 = vmatprep.subr.mxu0 0.0
    %528 = vmatpush1.xpose.msra.mxu0 0.0
    %529 = vmatprep.subr.mxu0 0.0
    %530 = vmatpush1.xpose.msra.mxu0 0.0
    %531 = vmatprep.subr.mxu0 0.0
    %532 = vmatpush1.xpose.msra.mxu0 %v317
    %533 = vmatprep.subr.mxu0 0.0
    %534 = vmatpush1.xpose.msra.mxu0 %v311
    %535 = vmatprep.subr.mxu0 0.0
    %536 = vmatpush2.xpose.msra.mxu0 0.0
    %537 = vmatprep.subr.mxu0 0.0
    %538 = vmatpush2.xpose.msra.mxu0 0.0
    %539 = vmatprep.subr.mxu0 0.0
    %540 = vmatpush2.xpose.msra.mxu0 0.0
    %541 = vmatprep.subr.mxu0 0.0
    %542 = vmatpush2.xpose.msra.mxu0 0.0
    %543 = vmatprep.subr.mxu0 0.0
    %544 = vmatpush2.xpose.msra.mxu0 0.0
    %545 = vmatprep.subr.mxu0 0.0
    %546 = vmatpush2.xpose.msra.mxu0 0.0
    %547 = vmatprep.subr.mxu0 0.0
    %548 = vmatpush2.xpose.msra.mxu0 0.0
    %549 = vmatprep.subr.mxu0 0.0
    %550 = vmatpush2.xpose.msra.mxu0 0.0
    %551 = vmatprep.subr.mxu0 0.0
    %552 = vmatpush2.xpose.msra.mxu0 0.0
    %553 = vmatprep.subr.mxu0 0.0
    %554 = vmatpush2.xpose.msra.mxu0 0.0
    %555 = vmatprep.subr.mxu0 0.0
    %556 = vmatpush2.xpose.msra.mxu0 0.0
    %557 = vmatprep.subr.mxu0 0.0
    %558 = vmatpush2.xpose.msra.mxu0 0.0
    %559 = vmatprep.subr.mxu0 0.0
    %560 = vmatpush2.xpose.msra.mxu0 0.0
    %561 = vmatprep.subr.mxu0 0.0
    %562 = vmatpush2.xpose.msra.mxu0 0.0
    %563 = vmatprep.subr.mxu0 0.0
    %564 = vmatpush2.xpose.msra.mxu0 0.0
    %565 = vmatprep.subr.mxu0 0.0
    %566 = vmatpush2.xpose.msra.mxu0 0.0
    %567 = vmatprep.mubr.f32.mxu0 0.0
    %568 = vmatmul.mubr.f32.gmra.mxu0 %v495
    %v569 = vpop.f32.mrf.mxu0
    %v570 = vadd.f32 0.0, %v569
    %v571 = vpop.f32.mrf.mxu0
    %572 = vdwg.mxu0
    %573 = vmatprep.subr.mxu0 0.0
    %574 = vmatpush1.xpose.msra.mxu0 0.0
    %575 = vmatprep.subr.mxu0 0.0
    %576 = vmatpush1.xpose.msra.mxu0 0.0
    %577 = vmatprep.subr.mxu0 0.0
    %578 = vmatpush1.xpose.msra.mxu0 0.0
    %579 = vmatprep.subr.mxu0 0.0
    %580 = vmatpush1.xpose.msra.mxu0 0.0
    %581 = vmatprep.subr.mxu0 0.0
    %582 = vmatpush1.xpose.msra.mxu0 0.0
    %583 = vmatprep.subr.mxu0 0.0
    %584 = vmatpush1.xpose.msra.mxu0 0.0
    %585 = vmatprep.subr.mxu0 0.0
    %586 = vmatpush1.xpose.msra.mxu0 0.0
    %587 = vmatprep.subr.mxu0 0.0
    %588 = vmatpush1.xpose.msra.mxu0 0.0
    %589 = vmatprep.subr.mxu0 0.0
    %590 = vmatpush1.xpose.msra.mxu0 0.0
    %591 = vmatprep.subr.mxu0 0.0
    %592 = vmatpush1.xpose.msra.mxu0 0.0
    %593 = vmatprep.subr.mxu0 0.0
    %594 = vmatpush1.xpose.msra.mxu0 0.0
    %595 = vmatprep.subr.mxu0 0.0
    %596 = vmatpush1.xpose.msra.mxu0 0.0
    %597 = vmatprep.subr.mxu0 0.0
    %598 = vmatpush1.xpose.msra.mxu0 0.0
    %599 = vmatprep.subr.mxu0 0.0
    %600 = vmatpush1.xpose.msra.mxu0 0.0
    %601 = vmatprep.subr.mxu0 0.0
    %602 = vmatpush1.xpose.msra.mxu0 %v329
    %603 = vmatprep.subr.mxu0 0.0
    %604 = vmatpush1.xpose.msra.mxu0 %v323
    %605 = vmatprep.subr.mxu0 0.0
    %606 = vmatpush2.xpose.msra.mxu0 0.0
    %607 = vmatprep.subr.mxu0 0.0
    %608 = vmatpush2.xpose.msra.mxu0 0.0
    %609 = vmatprep.subr.mxu0 0.0
    %610 = vmatpush2.xpose.msra.mxu0 0.0
    %611 = vmatprep.subr.mxu0 0.0
    %612 = vmatpush2.xpose.msra.mxu0 0.0
    %613 = vmatprep.subr.mxu0 0.0
    %614 = vmatpush2.xpose.msra.mxu0 0.0
    %615 = vmatprep.subr.mxu0 0.0
    %616 = vmatpush2.xpose.msra.mxu0 0.0
    %617 = vmatprep.subr.mxu0 0.0
    %618 = vmatpush2.xpose.msra.mxu0 0.0
    %619 = vmatprep.subr.mxu0 0.0
    %620 = vmatpush2.xpose.msra.mxu0 0.0
    %621 = vmatprep.subr.mxu0 0.0
    %622 = vmatpush2.xpose.msra.mxu0 0.0
    %623 = vmatprep.subr.mxu0 0.0
    %624 = vmatpush2.xpose.msra.mxu0 0.0
    %625 = vmatprep.subr.mxu0 0.0
    %626 = vmatpush2.xpose.msra.mxu0 0.0
    %627 = vmatprep.subr.mxu0 0.0
    %628 = vmatpush2.xpose.msra.mxu0 0.0
    %629 = vmatprep.subr.mxu0 0.0
    %630 = vmatpush2.xpose.msra.mxu0 0.0
    %631 = vmatprep.subr.mxu0 0.0
    %632 = vmatpush2.xpose.msra.mxu0 0.0
    %633 = vmatprep.subr.mxu0 0.0
    %634 = vmatpush2.xpose.msra.mxu0 0.0
    %635 = vmatprep.subr.mxu0 0.0
    %636 = vmatpush2.xpose.msra.mxu0 0.0
    %637 = vmatprep.mubr.f32.mxu0 0.0
    %638 = vmatmul.mubr.f32.gmra.mxu0 %v496
    %v639 = vpop.f32.mrf.mxu0
    %v640 = vadd.f32 0.0, %v639
    %v641 = vpop.f32.mrf.mxu0
    %642 = vdwg.mxu0
    %643 = vmatprep.subr.mxu0 0.0
    %644 = vmatpush1.xpose.msra.mxu0 0.0
    %645 = vmatprep.subr.mxu0 0.0
    %646 = vmatpush1.xpose.msra.mxu0 0.0
    %647 = vmatprep.subr.mxu0 0.0
    %648 = vmatpush1.xpose.msra.mxu0 0.0
    %649 = vmatprep.subr.mxu0 0.0
    %650 = vmatpush1.xpose.msra.mxu0 0.0
    %651 = vmatprep.subr.mxu0 0.0
    %652 = vmatpush1.xpose.msra.mxu0 0.0
    %653 = vmatprep.subr.mxu0 0.0
    %654 = vmatpush1.xpose.msra.mxu0 0.0
    %655 = vmatprep.subr.mxu0 0.0
    %656 = vmatpush1.xpose.msra.mxu0 0.0
    %657 = vmatprep.subr.mxu0 0.0
    %658 = vmatpush1.xpose.msra.mxu0 0.0
    %659 = vmatprep.subr.mxu0 0.0
    %660 = vmatpush1.xpose.msra.mxu0 0.0
    %661 = vmatprep.subr.mxu0 0.0
    %662 = vmatpush1.xpose.msra.mxu0 0.0
    %663 = vmatprep.subr.mxu0 0.0
    %664 = vmatpush1.xpose.msra.mxu0 0.0
    %665 = vmatprep.subr.mxu0 0.0
    %666 = vmatpush1.xpose.msra.mxu0 0.0
    %667 = vmatprep.subr.mxu0 0.0
    %668 = vmatpush1.xpose.msra.mxu0 0.0
    %669 = vmatprep.subr.mxu0 0.0
    %670 = vmatpush1.xpose.msra.mxu0 0.0
    %671 = vmatprep.subr.mxu0 0.0
    %672 = vmatpush1.xpose.msra.mxu0 %v341
    %673 = vmatprep.subr.mxu0 0.0
    %674 = vmatpush1.xpose.msra.mxu0 %v335
    %675 = vmatprep.subr.mxu0 0.0
    %676 = vmatpush2.xpose.msra.mxu0 0.0
    %677 = vmatprep.subr.mxu0 0.0
    %678 = vmatpush2.xpose.msra.mxu0 0.0
    %679 = vmatprep.subr.mxu0 0.0
    %680 = vmatpush2.xpose.msra.mxu0 0.0
    %681 = vmatprep.subr.mxu0 0.0
    %682 = vmatpush2.xpose.msra.mxu0 0.0
    %683 = vmatprep.subr.mxu0 0.0
    %684 = vmatpush2.xpose.msra.mxu0 0.0
    %685 = vmatprep.subr.mxu0 0.0
    %686 = vmatpush2.xpose.msra.mxu0 0.0
    %687 = vmatprep.subr.mxu0 0.0
    %688 = vmatpush2.xpose.msra.mxu0 0.0
    %689 = vmatprep.subr.mxu0 0.0
    %690 = vmatpush2.xpose.msra.mxu0 0.0
    %691 = vmatprep.subr.mxu0 0.0
    %692 = vmatpush2.xpose.msra.mxu0 0.0
    %693 = vmatprep.subr.mxu0 0.0
    %694 = vmatpush2.xpose.msra.mxu0 0.0
    %695 = vmatprep.subr.mxu0 0.0
    %696 = vmatpush2.xpose.msra.mxu0 0.0
    %697 = vmatprep.subr.mxu0 0.0
    %698 = vmatpush2.xpose.msra.mxu0 0.0
    %699 = vmatprep.subr.mxu0 0.0
    %700 = vmatpush2.xpose.msra.mxu0 0.0
    %701 = vmatprep.subr.mxu0 0.0
    %702 = vmatpush2.xpose.msra.mxu0 0.0
    %703 = vmatprep.subr.mxu0 0.0
    %704 = vmatpush2.xpose.msra.mxu0 0.0
    %705 = vmatprep.subr.mxu0 0.0
    %706 = vmatpush2.xpose.msra.mxu0 0.0
    %707 = vmatprep.mubr.f32.mxu0 0.0
    %708 = vmatmul.mubr.f32.gmra.mxu0 %v497
    %v709 = vpop.f32.mrf.mxu0
    %v710 = vadd.f32 0.0, %v709
    %v711 = vpop.f32.mrf.mxu0
    %712 = vdwg.mxu0
    %713 = vmatprep.subr.mxu0 0.0
    %714 = vmatpush1.xpose.msra.mxu0 0.0
    %715 = vmatprep.subr.mxu0 0.0
    %716 = vmatpush1.xpose.msra.mxu0 0.0
    %717 = vmatprep.subr.mxu0 0.0
    %718 = vmatpush1.xpose.msra.mxu0 0.0
    %719 = vmatprep.subr.mxu0 0.0
    %720 = vmatpush1.xpose.msra.mxu0 0.0
    %721 = vmatprep.subr.mxu0 0.0
    %722 = vmatpush1.xpose.msra.mxu0 0.0
    %723 = vmatprep.subr.mxu0 0.0
    %724 = vmatpush1.xpose.msra.mxu0 0.0
    %725 = vmatprep.subr.mxu0 0.0
    %726 = vmatpush1.xpose.msra.mxu0 0.0
    %727 = vmatprep.subr.mxu0 0.0
    %728 = vmatpush1.xpose.msra.mxu0 0.0
    %729 = vmatprep.subr.mxu0 0.0
    %730 = vmatpush1.xpose.msra.mxu0 0.0
    %731 = vmatprep.subr.mxu0 0.0
    %732 = vmatpush1.xpose.msra.mxu0 0.0
    %733 = vmatprep.subr.mxu0 0.0
    %734 = vmatpush1.xpose.msra.mxu0 0.0
    %735 = vmatprep.subr.mxu0 0.0
    %736 = vmatpush1.xpose.msra.mxu0 0.0
    %737 = vmatprep.subr.mxu0 0.0
    %738 = vmatpush1.xpose.msra.mxu0 0.0
    %739 = vmatprep.subr.mxu0 0.0
    %740 = vmatpush1.xpose.msra.mxu0 0.0
    %741 = vmatprep.subr.mxu0 0.0
    %742 = vmatpush1.xpose.msra.mxu0 %v353
    %743 = vmatprep.subr.mxu0 0.0
    %744 = vmatpush1.xpose.msra.mxu0 %v347
    %745 = vmatprep.subr.mxu0 0.0
    %746 = vmatpush2.xpose.msra.mxu0 0.0
    %747 = vmatprep.subr.mxu0 0.0
    %748 = vmatpush2.xpose.msra.mxu0 0.0
    %749 = vmatprep.subr.mxu0 0.0
    %750 = vmatpush2.xpose.msra.mxu0 0.0
    %751 = vmatprep.subr.mxu0 0.0
    %752 = vmatpush2.xpose.msra.mxu0 0.0
    %753 = vmatprep.subr.mxu0 0.0
    %754 = vmatpush2.xpose.msra.mxu0 0.0
    %755 = vmatprep.subr.mxu0 0.0
    %756 = vmatpush2.xpose.msra.mxu0 0.0
    %757 = vmatprep.subr.mxu0 0.0
    %758 = vmatpush2.xpose.msra.mxu0 0.0
    %759 = vmatprep.subr.mxu0 0.0
    %760 = vmatpush2.xpose.msra.mxu0 0.0
    %761 = vmatprep.subr.mxu0 0.0
    %762 = vmatpush2.xpose.msra.mxu0 0.0
    %763 = vmatprep.subr.mxu0 0.0
    %764 = vmatpush2.xpose.msra.mxu0 0.0
    %765 = vmatprep.subr.mxu0 0.0
    %766 = vmatpush2.xpose.msra.mxu0 0.0
    %767 = vmatprep.subr.mxu0 0.0
    %768 = vmatpush2.xpose.msra.mxu0 0.0
    %769 = vmatprep.subr.mxu0 0.0
    %770 = vmatpush2.xpose.msra.mxu0 0.0
    %771 = vmatprep.subr.mxu0 0.0
    %772 = vmatpush2.xpose.msra.mxu0 0.0
    %773 = vmatprep.subr.mxu0 0.0
    %774 = vmatpush2.xpose.msra.mxu0 0.0
    %775 = vmatprep.subr.mxu0 0.0
    %776 = vmatpush2.xpose.msra.mxu0 0.0
    %777 = vmatprep.mubr.f32.mxu0 0.0
    %778 = vmatmul.mubr.f32.gmra.mxu0 %v498
    %v779 = vpop.f32.mrf.mxu0
    %v780 = vadd.f32 0.0, %v779
    %v781 = vpop.f32.mrf.mxu0
    %782 = vdwg.mxu0
    %783 = vmatprep.subr.mxu0 0.0
    %784 = vmatpush1.xpose.msra.mxu0 0.0
    %785 = vmatprep.subr.mxu0 0.0
    %786 = vmatpush1.xpose.msra.mxu0 0.0
    %787 = vmatprep.subr.mxu0 0.0
    %788 = vmatpush1.xpose.msra.mxu0 0.0
    %789 = vmatprep.subr.mxu0 0.0
    %790 = vmatpush1.xpose.msra.mxu0 0.0
    %791 = vmatprep.subr.mxu0 0.0
    %792 = vmatpush1.xpose.msra.mxu0 0.0
    %793 = vmatprep.subr.mxu0 0.0
    %794 = vmatpush1.xpose.msra.mxu0 0.0
    %795 = vmatprep.subr.mxu0 0.0
    %796 = vmatpush1.xpose.msra.mxu0 0.0
    %797 = vmatprep.subr.mxu0 0.0
    %798 = vmatpush1.xpose.msra.mxu0 0.0
    %799 = vmatprep.subr.mxu0 0.0
    %800 = vmatpush1.xpose.msra.mxu0 0.0
    %801 = vmatprep.subr.mxu0 0.0
    %802 = vmatpush1.xpose.msra.mxu0 0.0
    %803 = vmatprep.subr.mxu0 0.0
    %804 = vmatpush1.xpose.msra.mxu0 0.0
    %805 = vmatprep.subr.mxu0 0.0
    %806 = vmatpush1.xpose.msra.mxu0 0.0
    %807 = vmatprep.subr.mxu0 0.0
    %808 = vmatpush1.xpose.msra.mxu0 0.0
    %809 = vmatprep.subr.mxu0 0.0
    %810 = vmatpush1.xpose.msra.mxu0 0.0
    %811 = vmatprep.subr.mxu0 0.0
    %812 = vmatpush1.xpose.msra.mxu0 %v365
    %813 = vmatprep.subr.mxu0 0.0
    %814 = vmatpush1.xpose.msra.mxu0 %v359
    %815 = vmatprep.subr.mxu0 0.0
    %816 = vmatpush2.xpose.msra.mxu0 0.0
    %817 = vmatprep.subr.mxu0 0.0
    %818 = vmatpush2.xpose.msra.mxu0 0.0
    %819 = vmatprep.subr.mxu0 0.0
    %820 = vmatpush2.xpose.msra.mxu0 0.0
    %821 = vmatprep.subr.mxu0 0.0
    %822 = vmatpush2.xpose.msra.mxu0 0.0
    %823 = vmatprep.subr.mxu0 0.0
    %824 = vmatpush2.xpose.msra.mxu0 0.0
    %825 = vmatprep.subr.mxu0 0.0
    %826 = vmatpush2.xpose.msra.mxu0 0.0
    %827 = vmatprep.subr.mxu0 0.0
    %828 = vmatpush2.xpose.msra.mxu0 0.0
    %829 = vmatprep.subr.mxu0 0.0
    %830 = vmatpush2.xpose.msra.mxu0 0.0
    %831 = vmatprep.subr.mxu0 0.0
    %832 = vmatpush2.xpose.msra.mxu0 0.0
    %833 = vmatprep.subr.mxu0 0.0
    %834 = vmatpush2.xpose.msra.mxu0 0.0
    %835 = vmatprep.subr.mxu0 0.0
    %836 = vmatpush2.xpose.msra.mxu0 0.0
    %837 = vmatprep.subr.mxu0 0.0
    %838 = vmatpush2.xpose.msra.mxu0 0.0
    %839 = vmatprep.subr.mxu0 0.0
    %840 = vmatpush2.xpose.msra.mxu0 0.0
    %841 = vmatprep.subr.mxu0 0.0
    %842 = vmatpush2.xpose.msra.mxu0 0.0
    %843 = vmatprep.subr.mxu0 0.0
    %844 = vmatpush2.xpose.msra.mxu0 0.0
    %845 = vmatprep.subr.mxu0 0.0
    %846 = vmatpush2.xpose.msra.mxu0 0.0
    %847 = vmatprep.mubr.f32.mxu0 0.0
    %848 = vmatmul.mubr.f32.gmra.mxu0 %v499
    %v849 = vpop.f32.mrf.mxu0
    %v850 = vadd.f32 0.0, %v849
    %v851 = vpop.f32.mrf.mxu0
    %852 = vdwg.mxu0
    %853 = vmatprep.subr.mxu0 0.0
    %854 = vmatpush1.xpose.msra.mxu0 0.0
    %855 = vmatprep.subr.mxu0 0.0
    %856 = vmatpush1.xpose.msra.mxu0 0.0
    %857 = vmatprep.subr.mxu0 0.0
    %858 = vmatpush1.xpose.msra.mxu0 0.0
    %859 = vmatprep.subr.mxu0 0.0
    %860 = vmatpush1.xpose.msra.mxu0 0.0
    %861 = vmatprep.subr.mxu0 0.0
    %862 = vmatpush1.xpose.msra.mxu0 0.0
    %863 = vmatprep.subr.mxu0 0.0
    %864 = vmatpush1.xpose.msra.mxu0 0.0
    %865 = vmatprep.subr.mxu0 0.0
    %866 = vmatpush1.xpose.msra.mxu0 0.0
    %867 = vmatprep.subr.mxu0 0.0
    %868 = vmatpush1.xpose.msra.mxu0 0.0
    %869 = vmatprep.subr.mxu0 0.0
    %870 = vmatpush1.xpose.msra.mxu0 0.0
    %871 = vmatprep.subr.mxu0 0.0
    %872 = vmatpush1.xpose.msra.mxu0 0.0
    %873 = vmatprep.subr.mxu0 0.0
    %874 = vmatpush1.xpose.msra.mxu0 0.0
    %875 = vmatprep.subr.mxu0 0.0
    %876 = vmatpush1.xpose.msra.mxu0 0.0
    %877 = vmatprep.subr.mxu0 0.0
    %878 = vmatpush1.xpose.msra.mxu0 0.0
    %879 = vmatprep.subr.mxu0 0.0
    %880 = vmatpush1.xpose.msra.mxu0 0.0
    %881 = vmatprep.subr.mxu0 0.0
    %882 = vmatpush1.xpose.msra.mxu0 %v377
    %883 = vmatprep.subr.mxu0 0.0
    %884 = vmatpush1.xpose.msra.mxu0 %v371
    %885 = vmatprep.subr.mxu0 0.0
    %886 = vmatpush2.xpose.msra.mxu0 0.0
    %887 = vmatprep.subr.mxu0 0.0
    %888 = vmatpush2.xpose.msra.mxu0 0.0
    %889 = vmatprep.subr.mxu0 0.0
    %890 = vmatpush2.xpose.msra.mxu0 0.0
    %891 = vmatprep.subr.mxu0 0.0
    %892 = vmatpush2.xpose.msra.mxu0 0.0
    %893 = vmatprep.subr.mxu0 0.0
    %894 = vmatpush2.xpose.msra.mxu0 0.0
    %895 = vmatprep.subr.mxu0 0.0
    %896 = vmatpush2.xpose.msra.mxu0 0.0
    %897 = vmatprep.subr.mxu0 0.0
    %898 = vmatpush2.xpose.msra.mxu0 0.0
    %899 = vmatprep.subr.mxu0 0.0
    %900 = vmatpush2.xpose.msra.mxu0 0.0
    %901 = vmatprep.subr.mxu0 0.0
    %902 = vmatpush2.xpose.msra.mxu0 0.0
    %903 = vmatprep.subr.mxu0 0.0
    %904 = vmatpush2.xpose.msra.mxu0 0.0
    %905 = vmatprep.subr.mxu0 0.0
    %906 = vmatpush2.xpose.msra.mxu0 0.0
    %907 = vmatprep.subr.mxu0 0.0
    %908 = vmatpush2.xpose.msra.mxu0 0.0
    %909 = vmatprep.subr.mxu0 0.0
    %910 = vmatpush2.xpose.msra.mxu0 0.0
    %911 = vmatprep.subr.mxu0 0.0
    %912 = vmatpush2.xpose.msra.mxu0 0.0
    %913 = vmatprep.subr.mxu0 0.0
    %914 = vmatpush2.xpose.msra.mxu0 0.0
    %915 = vmatprep.subr.mxu0 0.0
    %916 = vmatpush2.xpose.msra.mxu0 0.0
    %917 = vmatprep.mubr.f32.mxu0 0.0
    %918 = vmatmul.mubr.f32.gmra.mxu0 %v500
    %v919 = vpop.f32.mrf.mxu0
    %v920 = vadd.f32 0.0, %v919
    %v921 = vpop.f32.mrf.mxu0
    %922 = vdwg.mxu0
    %923 = vmatprep.subr.mxu0 0.0
    %924 = vmatpush1.xpose.msra.mxu0 0.0
    %925 = vmatprep.subr.mxu0 0.0
    %926 = vmatpush1.xpose.msra.mxu0 0.0
    %927 = vmatprep.subr.mxu0 0.0
    %928 = vmatpush1.xpose.msra.mxu0 0.0
    %929 = vmatprep.subr.mxu0 0.0
    %930 = vmatpush1.xpose.msra.mxu0 0.0
    %931 = vmatprep.subr.mxu0 0.0
    %932 = vmatpush1.xpose.msra.mxu0 0.0
    %933 = vmatprep.subr.mxu0 0.0
    %934 = vmatpush1.xpose.msra.mxu0 0.0
    %935 = vmatprep.subr.mxu0 0.0
    %936 = vmatpush1.xpose.msra.mxu0 0.0
    %937 = vmatprep.subr.mxu0 0.0
    %938 = vmatpush1.xpose.msra.mxu0 0.0
    %939 = vmatprep.subr.mxu0 0.0
    %940 = vmatpush1.xpose.msra.mxu0 0.0
    %941 = vmatprep.subr.mxu0 0.0
    %942 = vmatpush1.xpose.msra.mxu0 0.0
    %943 = vmatprep.subr.mxu0 0.0
    %944 = vmatpush1.xpose.msra.mxu0 0.0
    %945 = vmatprep.subr.mxu0 0.0
    %946 = vmatpush1.xpose.msra.mxu0 0.0
    %947 = vmatprep.subr.mxu0 0.0
    %948 = vmatpush1.xpose.msra.mxu0 0.0
    %949 = vmatprep.subr.mxu0 0.0
    %950 = vmatpush1.xpose.msra.mxu0 0.0
    %951 = vmatprep.subr.mxu0 0.0
    %952 = vmatpush1.xpose.msra.mxu0 %v389
    %953 = vmatprep.subr.mxu0 0.0
    %954 = vmatpush1.xpose.msra.mxu0 %v383
    %955 = vmatprep.subr.mxu0 0.0
    %956 = vmatpush2.xpose.msra.mxu0 0.0
    %957 = vmatprep.subr.mxu0 0.0
    %958 = vmatpush2.xpose.msra.mxu0 0.0
    %959 = vmatprep.subr.mxu0 0.0
    %960 = vmatpush2.xpose.msra.mxu0 0.0
    %961 = vmatprep.subr.mxu0 0.0
    %962 = vmatpush2.xpose.msra.mxu0 0.0
    %963 = vmatprep.subr.mxu0 0.0
    %964 = vmatpush2.xpose.msra.mxu0 0.0
    %965 = vmatprep.subr.mxu0 0.0
    %966 = vmatpush2.xpose.msra.mxu0 0.0
    %967 = vmatprep.subr.mxu0 0.0
    %968 = vmatpush2.xpose.msra.mxu0 0.0
    %969 = vmatprep.subr.mxu0 0.0
    %970 = vmatpush2.xpose.msra.mxu0 0.0
    %971 = vmatprep.subr.mxu0 0.0
    %972 = vmatpush2.xpose.msra.mxu0 0.0
    %973 = vmatprep.subr.mxu0 0.0
    %974 = vmatpush2.xpose.msra.mxu0 0.0
    %975 = vmatprep.subr.mxu0 0.0
    %976 = vmatpush2.xpose.msra.mxu0 0.0
    %977 = vmatprep.subr.mxu0 0.0
    %978 = vmatpush2.xpose.msra.mxu0 0.0
    %979 = vmatprep.subr.mxu0 0.0
    %980 = vmatpush2.xpose.msra.mxu0 0.0
    %981 = vmatprep.subr.mxu0 0.0
    %982 = vmatpush2.xpose.msra.mxu0 0.0
    %983 = vmatprep.subr.mxu0 0.0
    %984 = vmatpush2.xpose.msra.mxu0 0.0
    %985 = vmatprep.subr.mxu0 0.0
    %986 = vmatpush2.xpose.msra.mxu0 0.0
    %987 = vmatprep.mubr.f32.mxu0 0.0
    %988 = vmatmul.mubr.f32.gmra.mxu0 %v501
    %v989 = vpop.f32.mrf.mxu0
    %v990 = vadd.f32 0.0, %v989
    %v991 = vpop.f32.mrf.mxu0
    %992 = vdwg.mxu0
    %993 = vmatprep.subr.mxu0 0.0
    %994 = vmatpush1.xpose.msra.mxu0 0.0
    %995 = vmatprep.subr.mxu0 0.0
    %996 = vmatpush1.xpose.msra.mxu0 0.0
    %997 = vmatprep.subr.mxu0 0.0
    %998 = vmatpush1.xpose.msra.mxu0 0.0
    %999 = vmatprep.subr.mxu0 0.0
    %1000 = vmatpush1.xpose.msra.mxu0 0.0
    %1001 = vmatprep.subr.mxu0 0.0
    %1002 = vmatpush1.xpose.msra.mxu0 0.0
    %1003 = vmatprep.subr.mxu0 0.0
    %1004 = vmatpush1.xpose.msra.mxu0 0.0
    %1005 = vmatprep.subr.mxu0 0.0
    %1006 = vmatpush1.xpose.msra.mxu0 0.0
    %1007 = vmatprep.subr.mxu0 0.0
    %1008 = vmatpush1.xpose.msra.mxu0 0.0
    %1009 = vmatprep.subr.mxu0 0.0
    %1010 = vmatpush1.xpose.msra.mxu0 0.0
    %1011 = vmatprep.subr.mxu0 0.0
    %1012 = vmatpush1.xpose.msra.mxu0 0.0
    %1013 = vmatprep.subr.mxu0 0.0
    %1014 = vmatpush1.xpose.msra.mxu0 0.0
    %1015 = vmatprep.subr.mxu0 0.0
    %1016 = vmatpush1.xpose.msra.mxu0 0.0
    %1017 = vmatprep.subr.mxu0 0.0
    %1018 = vmatpush1.xpose.msra.mxu0 0.0
    %1019 = vmatprep.subr.mxu0 0.0
    %1020 = vmatpush1.xpose.msra.mxu0 0.0
    %1021 = vmatprep.subr.mxu0 0.0
    %1022 = vmatpush1.xpose.msra.mxu0 %v401
    %1023 = vmatprep.subr.mxu0 0.0
    %1024 = vmatpush1.xpose.msra.mxu0 %v395
    %1025 = vmatprep.subr.mxu0 0.0
    %1026 = vmatpush2.xpose.msra.mxu0 0.0
    %1027 = vmatprep.subr.mxu0 0.0
    %1028 = vmatpush2.xpose.msra.mxu0 0.0
    %1029 = vmatprep.subr.mxu0 0.0
    %1030 = vmatpush2.xpose.msra.mxu0 0.0
    %1031 = vmatprep.subr.mxu0 0.0
    %1032 = vmatpush2.xpose.msra.mxu0 0.0
    %1033 = vmatprep.subr.mxu0 0.0
    %1034 = vmatpush2.xpose.msra.mxu0 0.0
    %1035 = vmatprep.subr.mxu0 0.0
    %1036 = vmatpush2.xpose.msra.mxu0 0.0
    %1037 = vmatprep.subr.mxu0 0.0
    %1038 = vmatpush2.xpose.msra.mxu0 0.0
    %1039 = vmatprep.subr.mxu0 0.0
    %1040 = vmatpush2.xpose.msra.mxu0 0.0
    %1041 = vmatprep.subr.mxu0 0.0
    %1042 = vmatpush2.xpose.msra.mxu0 0.0
    %1043 = vmatprep.subr.mxu0 0.0
    %1044 = vmatpush2.xpose.msra.mxu0 0.0
    %1045 = vmatprep.subr.mxu0 0.0
    %1046 = vmatpush2.xpose.msra.mxu0 0.0
    %1047 = vmatprep.subr.mxu0 0.0
    %1048 = vmatpush2.xpose.msra.mxu0 0.0
    %1049 = vmatprep.subr.mxu0 0.0
    %1050 = vmatpush2.xpose.msra.mxu0 0.0
    %1051 = vmatprep.subr.mxu0 0.0
    %1052 = vmatpush2.xpose.msra.mxu0 0.0
    %1053 = vmatprep.subr.mxu0 0.0
    %1054 = vmatpush2.xpose.msra.mxu0 0.0
    %1055 = vmatprep.subr.mxu0 0.0
    %1056 = vmatpush2.xpose.msra.mxu0 0.0
    %1057 = vmatprep.mubr.f32.mxu0 0.0
    %1058 = vmatmul.mubr.f32.gmra.mxu0 %v502
    %v1059 = vpop.f32.mrf.mxu0
    %v1060 = vadd.f32 0.0, %v1059
    %v1061 = vpop.f32.mrf.mxu0
    %1062 = vdwg.mxu0
    %vm1063 = vcmask 125952
    %v1064 = vsel %vm1063, %v570, -inf
    %1065 = vmax.xlane.f32.xlu0 %v1064
    %v1066 = vpop.xlane.xlu0 %1065
    %v1067 = vsel %vm1063, %v640, -inf
    %1068 = vmax.xlane.f32.xlu0 %v1067
    %v1069 = vpop.xlane.xlu0 %1068
    %v1070 = vsel %vm1063, %v710, -inf
    %1071 = vmax.xlane.f32.xlu0 %v1070
    %v1072 = vpop.xlane.xlu0 %1071
    %v1073 = vsel %vm1063, %v780, -inf
    %1074 = vmax.xlane.f32.xlu0 %v1073
    %v1075 = vpop.xlane.xlu0 %1074
    %v1076 = vsel %vm1063, %v850, -inf
    %1077 = vmax.xlane.f32.xlu0 %v1076
    %v1078 = vpop.xlane.xlu0 %1077
    %v1079 = vsel %vm1063, %v920, -inf
    %1080 = vmax.xlane.f32.xlu0 %v1079
    %v1081 = vpop.xlane.xlu0 %1080
    %v1082 = vsel %vm1063, %v990, -inf
    %1083 = vmax.xlane.f32.xlu0 %v1082
    %v1084 = vpop.xlane.xlu0 %1083
    %v1085 = vsel %vm1063, %v1060, -inf
    %1086 = vmax.xlane.f32.xlu0 %v1085
    %v1087 = vpop.xlane.xlu0 %1086
    %v1088 = vsub.f32 %v570, %v1066
    %v1089 = vsub.f32 %v640, %v1069
    %v1090 = vsub.f32 %v710, %v1072
    %v1091 = vsub.f32 %v780, %v1075
    %v1092 = vsub.f32 %v850, %v1078
    %v1093 = vsub.f32 %v920, %v1081
    %v1094 = vsub.f32 %v990, %v1084
    %v1095 = vsub.f32 %v1060, %v1087
    %v1096 = vmul.f32 %v1088, 1.442695
    %v1097 = vpow.pop %v1096
    %v1098 = vmul.f32 %v1089, 1.442695
    %v1099 = vpow.pop %v1098
    %v1100 = vmul.f32 %v1090, 1.442695
    %v1101 = vpow.pop %v1100
    %v1102 = vmul.f32 %v1091, 1.442695
    %v1103 = vpow.pop %v1102
    %v1104 = vmul.f32 %v1092, 1.442695
    %v1105 = vpow.pop %v1104
    %v1106 = vmul.f32 %v1093, 1.442695
    %v1107 = vpow.pop %v1106
    %v1108 = vmul.f32 %v1094, 1.442695
    %v1109 = vpow.pop %v1108
    %v1110 = vmul.f32 %v1095, 1.442695
    %v1111 = vpow.pop %v1110
    %v1112 = vsel %vm1063, %v1097, 0.0
    %1113 = vadd.xlane.f32.xlu0 %v1112
    %v1114 = vpop.xlane.xlu0 %1113
    %v1115 = vsel %vm1063, %v1099, 0.0
    %1116 = vadd.xlane.f32.xlu0 %v1115
    %v1117 = vpop.xlane.xlu0 %1116
    %v1118 = vsel %vm1063, %v1101, 0.0
    %1119 = vadd.xlane.f32.xlu0 %v1118
    %v1120 = vpop.xlane.xlu0 %1119
    %v1121 = vsel %vm1063, %v1103, 0.0
    %1122 = vadd.xlane.f32.xlu0 %v1121
    %v1123 = vpop.xlane.xlu0 %1122
    %v1124 = vsel %vm1063, %v1105, 0.0
    %1125 = vadd.xlane.f32.xlu0 %v1124
    %v1126 = vpop.xlane.xlu0 %1125
    %v1127 = vsel %vm1063, %v1107, 0.0
    %1128 = vadd.xlane.f32.xlu0 %v1127
    %v1129 = vpop.xlane.xlu0 %1128
    %v1130 = vsel %vm1063, %v1109, 0.0
    %1131 = vadd.xlane.f32.xlu0 %v1130
    %v1132 = vpop.xlane.xlu0 %1131
    %v1133 = vsel %vm1063, %v1111, 0.0
    %1134 = vadd.xlane.f32.xlu0 %v1133
    %v1135 = vpop.xlane.xlu0 %1134
    %vm1136 = vcmask 130048
    %v1138 = vsel %vm1136, %v1097, 0
    %1140 = vmatprep.subr.mxu0 0.0
    %1141 = vmatpush1.msra.mxu0 0.0
    %1142 = vmatprep.subr.mxu0 0.0
    %1143 = vmatpush1.msra.mxu0 0.0
    %1144 = vmatprep.subr.mxu0 0.0
    %1145 = vmatpush1.msra.mxu0 0.0
    %1146 = vmatprep.subr.mxu0 0.0
    %1147 = vmatpush1.msra.mxu0 0.0
    %1148 = vmatprep.subr.mxu0 0.0
    %1149 = vmatpush1.msra.mxu0 0.0
    %1150 = vmatprep.subr.mxu0 0.0
    %1151 = vmatpush1.msra.mxu0 0.0
    %1152 = vmatprep.subr.mxu0 0.0
    %1153 = vmatpush1.msra.mxu0 0.0
    %1154 = vmatprep.subr.mxu0 0.0
    %1155 = vmatpush1.msra.mxu0 0.0
    %1156 = vmatprep.subr.mxu0 0.0
    %1157 = vmatpush1.msra.mxu0 0.0
    %1158 = vmatprep.subr.mxu0 0.0
    %1159 = vmatpush1.msra.mxu0 0.0
    %1160 = vmatprep.subr.mxu0 0.0
    %1161 = vmatpush1.msra.mxu0 0.0
    %1162 = vmatprep.subr.mxu0 0.0
    %1163 = vmatpush1.msra.mxu0 0.0
    %1164 = vmatprep.subr.mxu0 0.0
    %1165 = vmatpush1.msra.mxu0 0.0
    %1166 = vmatprep.subr.mxu0 0.0
    %1167 = vmatpush1.msra.mxu0 0.0
    %1168 = vmatprep.subr.mxu0 0.0
    %1169 = vmatpush1.msra.mxu0 %v319
    %1170 = vmatprep.subr.mxu0 0.0
    %1171 = vmatpush1.msra.mxu0 %v313
    %1172 = vmatprep.subr.mxu0 0.0
    %1173 = vmatpush2.msra.mxu0 0.0
    %1174 = vmatprep.subr.mxu0 0.0
    %1175 = vmatpush2.msra.mxu0 0.0
    %1176 = vmatprep.subr.mxu0 0.0
    %1177 = vmatpush2.msra.mxu0 0.0
    %1178 = vmatprep.subr.mxu0 0.0
    %1179 = vmatpush2.msra.mxu0 0.0
    %1180 = vmatprep.subr.mxu0 0.0
    %1181 = vmatpush2.msra.mxu0 0.0
    %1182 = vmatprep.subr.mxu0 0.0
    %1183 = vmatpush2.msra.mxu0 0.0
    %1184 = vmatprep.subr.mxu0 0.0
    %1185 = vmatpush2.msra.mxu0 0.0
    %1186 = vmatprep.subr.mxu0 0.0
    %1187 = vmatpush2.msra.mxu0 0.0
    %1188 = vmatprep.subr.mxu0 0.0
    %1189 = vmatpush2.msra.mxu0 0.0
    %1190 = vmatprep.subr.mxu0 0.0
    %1191 = vmatpush2.msra.mxu0 0.0
    %1192 = vmatprep.subr.mxu0 0.0
    %1193 = vmatpush2.msra.mxu0 0.0
    %1194 = vmatprep.subr.mxu0 0.0
    %1195 = vmatpush2.msra.mxu0 0.0
    %1196 = vmatprep.subr.mxu0 0.0
    %1197 = vmatpush2.msra.mxu0 0.0
    %1198 = vmatprep.subr.mxu0 0.0
    %1199 = vmatpush2.msra.mxu0 0.0
    %1200 = vmatprep.subr.mxu0 0.0
    %1201 = vmatpush2.msra.mxu0 0.0
    %1202 = vmatprep.subr.mxu0 0.0
    %1203 = vmatpush2.msra.mxu0 0.0
    %1204 = vmatprep.mubr.f32.mxu0 0.0
    %1205 = vmatmul.mubr.f32.gmra.mxu0 %v1138
    %v1206 = vpop.f32.mrf.mxu0
    %v1207 = vadd.f32 0.0, %v1206
    %v1208 = vpop.f32.mrf.mxu0
    %1209 = vdwg.mxu0
    %v1211 = vsel %vm1136, %v1099, 0
    %1213 = vmatprep.subr.mxu0 0.0
    %1214 = vmatpush1.msra.mxu0 0.0
    %1215 = vmatprep.subr.mxu0 0.0
    %1216 = vmatpush1.msra.mxu0 0.0
    %1217 = vmatprep.subr.mxu0 0.0
    %1218 = vmatpush1.msra.mxu0 0.0
    %1219 = vmatprep.subr.mxu0 0.0
    %1220 = vmatpush1.msra.mxu0 0.0
    %1221 = vmatprep.subr.mxu0 0.0
    %1222 = vmatpush1.msra.mxu0 0.0
    %1223 = vmatprep.subr.mxu0 0.0
    %1224 = vmatpush1.msra.mxu0 0.0
    %1225 = vmatprep.subr.mxu0 0.0
    %1226 = vmatpush1.msra.mxu0 0.0
    %1227 = vmatprep.subr.mxu0 0.0
    %1228 = vmatpush1.msra.mxu0 0.0
    %1229 = vmatprep.subr.mxu0 0.0
    %1230 = vmatpush1.msra.mxu0 0.0
    %1231 = vmatprep.subr.mxu0 0.0
    %1232 = vmatpush1.msra.mxu0 0.0
    %1233 = vmatprep.subr.mxu0 0.0
    %1234 = vmatpush1.msra.mxu0 0.0
    %1235 = vmatprep.subr.mxu0 0.0
    %1236 = vmatpush1.msra.mxu0 0.0
    %1237 = vmatprep.subr.mxu0 0.0
    %1238 = vmatpush1.msra.mxu0 0.0
    %1239 = vmatprep.subr.mxu0 0.0
    %1240 = vmatpush1.msra.mxu0 0.0
    %1241 = vmatprep.subr.mxu0 0.0
    %1242 = vmatpush1.msra.mxu0 %v331
    %1243 = vmatprep.subr.mxu0 0.0
    %1244 = vmatpush1.msra.mxu0 %v325
    %1245 = vmatprep.subr.mxu0 0.0
    %1246 = vmatpush2.msra.mxu0 0.0
    %1247 = vmatprep.subr.mxu0 0.0
    %1248 = vmatpush2.msra.mxu0 0.0
    %1249 = vmatprep.subr.mxu0 0.0
    %1250 = vmatpush2.msra.mxu0 0.0
    %1251 = vmatprep.subr.mxu0 0.0
    %1252 = vmatpush2.msra.mxu0 0.0
    %1253 = vmatprep.subr.mxu0 0.0
    %1254 = vmatpush2.msra.mxu0 0.0
    %1255 = vmatprep.subr.mxu0 0.0
    %1256 = vmatpush2.msra.mxu0 0.0
    %1257 = vmatprep.subr.mxu0 0.0
    %1258 = vmatpush2.msra.mxu0 0.0
    %1259 = vmatprep.subr.mxu0 0.0
    %1260 = vmatpush2.msra.mxu0 0.0
    %1261 = vmatprep.subr.mxu0 0.0
    %1262 = vmatpush2.msra.mxu0 0.0
    %1263 = vmatprep.subr.mxu0 0.0
    %1264 = vmatpush2.msra.mxu0 0.0
    %1265 = vmatprep.subr.mxu0 0.0
    %1266 = vmatpush2.msra.mxu0 0.0
    %1267 = vmatprep.subr.mxu0 0.0
    %1268 = vmatpush2.msra.mxu0 0.0
    %1269 = vmatprep.subr.mxu0 0.0
    %1270 = vmatpush2.msra.mxu0 0.0
    %1271 = vmatprep.subr.mxu0 0.0
    %1272 = vmatpush2.msra.mxu0 0.0
    %1273 = vmatprep.subr.mxu0 0.0
    %1274 = vmatpush2.msra.mxu0 0.0
    %1275 = vmatprep.subr.mxu0 0.0
    %1276 = vmatpush2.msra.mxu0 0.0
    %1277 = vmatprep.mubr.f32.mxu0 0.0
    %1278 = vmatmul.mubr.f32.gmra.mxu0 %v1211
    %v1279 = vpop.f32.mrf.mxu0
    %v1280 = vadd.f32 0.0, %v1279
    %v1281 = vpop.f32.mrf.mxu0
    %1282 = vdwg.mxu0
    %v1284 = vsel %vm1136, %v1101, 0
    %1286 = vmatprep.subr.mxu0 0.0
    %1287 = vmatpush1.msra.mxu0 0.0
    %1288 = vmatprep.subr.mxu0 0.0
    %1289 = vmatpush1.msra.mxu0 0.0
    %1290 = vmatprep.subr.mxu0 0.0
    %1291 = vmatpush1.msra.mxu0 0.0
    %1292 = vmatprep.subr.mxu0 0.0
    %1293 = vmatpush1.msra.mxu0 0.0
    %1294 = vmatprep.subr.mxu0 0.0
    %1295 = vmatpush1.msra.mxu0 0.0
    %1296 = vmatprep.subr.mxu0 0.0
    %1297 = vmatpush1.msra.mxu0 0.0
    %1298 = vmatprep.subr.mxu0 0.0
    %1299 = vmatpush1.msra.mxu0 0.0
    %1300 = vmatprep.subr.mxu0 0.0
    %1301 = vmatpush1.msra.mxu0 0.0
    %1302 = vmatprep.subr.mxu0 0.0
    %1303 = vmatpush1.msra.mxu0 0.0
    %1304 = vmatprep.subr.mxu0 0.0
    %1305 = vmatpush1.msra.mxu0 0.0
    %1306 = vmatprep.subr.mxu0 0.0
    %1307 = vmatpush1.msra.mxu0 0.0
    %1308 = vmatprep.subr.mxu0 0.0
    %1309 = vmatpush1.msra.mxu0 0.0
    %1310 = vmatprep.subr.mxu0 0.0
    %1311 = vmatpush1.msra.mxu0 0.0
    %1312 = vmatprep.subr.mxu0 0.0
    %1313 = vmatpush1.msra.mxu0 0.0
    %1314 = vmatprep.subr.mxu0 0.0
    %1315 = vmatpush1.msra.mxu0 %v343
    %1316 = vmatprep.subr.mxu0 0.0
    %1317 = vmatpush1.msra.mxu0 %v337
    %1318 = vmatprep.subr.mxu0 0.0
    %1319 = vmatpush2.msra.mxu0 0.0
    %1320 = vmatprep.subr.mxu0 0.0
    %1321 = vmatpush2.msra.mxu0 0.0
    %1322 = vmatprep.subr.mxu0 0.0
    %1323 = vmatpush2.msra.mxu0 0.0
    %1324 = vmatprep.subr.mxu0 0.0
    %1325 = vmatpush2.msra.mxu0 0.0
    %1326 = vmatprep.subr.mxu0 0.0
    %1327 = vmatpush2.msra.mxu0 0.0
    %1328 = vmatprep.subr.mxu0 0.0
    %1329 = vmatpush2.msra.mxu0 0.0
    %1330 = vmatprep.subr.mxu0 0.0
    %1331 = vmatpush2.msra.mxu0 0.0
    %1332 = vmatprep.subr.mxu0 0.0
    %1333 = vmatpush2.msra.mxu0 0.0
    %1334 = vmatprep.subr.mxu0 0.0
    %1335 = vmatpush2.msra.mxu0 0.0
    %1336 = vmatprep.subr.mxu0 0.0
    %1337 = vmatpush2.msra.mxu0 0.0
    %1338 = vmatprep.subr.mxu0 0.0
    %1339 = vmatpush2.msra.mxu0 0.0
    %1340 = vmatprep.subr.mxu0 0.0
    %1341 = vmatpush2.msra.mxu0 0.0
    %1342 = vmatprep.subr.mxu0 0.0
    %1343 = vmatpush2.msra.mxu0 0.0
    %1344 = vmatprep.subr.mxu0 0.0
    %1345 = vmatpush2.msra.mxu0 0.0
    %1346 = vmatprep.subr.mxu0 0.0
    %1347 = vmatpush2.msra.mxu0 0.0
    %1348 = vmatprep.subr.mxu0 0.0
    %1349 = vmatpush2.msra.mxu0 0.0
    %1350 = vmatprep.mubr.f32.mxu0 0.0
    %1351 = vmatmul.mubr.f32.gmra.mxu0 %v1284
    %v1352 = vpop.f32.mrf.mxu0
    %v1353 = vadd.f32 0.0, %v1352
    %v1354 = vpop.f32.mrf.mxu0
    %1355 = vdwg.mxu0
    %v1357 = vsel %vm1136, %v1103, 0
    %1359 = vmatprep.subr.mxu0 0.0
    %1360 = vmatpush1.msra.mxu0 0.0
    %1361 = vmatprep.subr.mxu0 0.0
    %1362 = vmatpush1.msra.mxu0 0.0
    %1363 = vmatprep.subr.mxu0 0.0
    %1364 = vmatpush1.msra.mxu0 0.0
    %1365 = vmatprep.subr.mxu0 0.0
    %1366 = vmatpush1.msra.mxu0 0.0
    %1367 = vmatprep.subr.mxu0 0.0
    %1368 = vmatpush1.msra.mxu0 0.0
    %1369 = vmatprep.subr.mxu0 0.0
    %1370 = vmatpush1.msra.mxu0 0.0
    %1371 = vmatprep.subr.mxu0 0.0
    %1372 = vmatpush1.msra.mxu0 0.0
    %1373 = vmatprep.subr.mxu0 0.0
    %1374 = vmatpush1.msra.mxu0 0.0
    %1375 = vmatprep.subr.mxu0 0.0
    %1376 = vmatpush1.msra.mxu0 0.0
    %1377 = vmatprep.subr.mxu0 0.0
    %1378 = vmatpush1.msra.mxu0 0.0
    %1379 = vmatprep.subr.mxu0 0.0
    %1380 = vmatpush1.msra.mxu0 0.0
    %1381 = vmatprep.subr.mxu0 0.0
    %1382 = vmatpush1.msra.mxu0 0.0
    %1383 = vmatprep.subr.mxu0 0.0
    %1384 = vmatpush1.msra.mxu0 0.0
    %1385 = vmatprep.subr.mxu0 0.0
    %1386 = vmatpush1.msra.mxu0 0.0
    %1387 = vmatprep.subr.mxu0 0.0
    %1388 = vmatpush1.msra.mxu0 %v355
    %1389 = vmatprep.subr.mxu0 0.0
    %1390 = vmatpush1.msra.mxu0 %v349
    %1391 = vmatprep.subr.mxu0 0.0
    %1392 = vmatpush2.msra.mxu0 0.0
    %1393 = vmatprep.subr.mxu0 0.0
    %1394 = vmatpush2.msra.mxu0 0.0
    %1395 = vmatprep.subr.mxu0 0.0
    %1396 = vmatpush2.msra.mxu0 0.0
    %1397 = vmatprep.subr.mxu0 0.0
    %1398 = vmatpush2.msra.mxu0 0.0
    %1399 = vmatprep.subr.mxu0 0.0
    %1400 = vmatpush2.msra.mxu0 0.0
    %1401 = vmatprep.subr.mxu0 0.0
    %1402 = vmatpush2.msra.mxu0 0.0
    %1403 = vmatprep.subr.mxu0 0.0
    %1404 = vmatpush2.msra.mxu0 0.0
    %1405 = vmatprep.subr.mxu0 0.0
    %1406 = vmatpush2.msra.mxu0 0.0
    %1407 = vmatprep.subr.mxu0 0.0
    %1408 = vmatpush2.msra.mxu0 0.0
    %1409 = vmatprep.subr.mxu0 0.0
    %1410 = vmatpush2.msra.mxu0 0.0
    %1411 = vmatprep.subr.mxu0 0.0
    %1412 = vmatpush2.msra.mxu0 0.0
    %1413 = vmatprep.subr.mxu0 0.0
    %1414 = vmatpush2.msra.mxu0 0.0
    %1415 = vmatprep.subr.mxu0 0.0
    %1416 = vmatpush2.msra.mxu0 0.0
    %1417 = vmatprep.subr.mxu0 0.0
    %1418 = vmatpush2.msra.mxu0 0.0
    %1419 = vmatprep.subr.mxu0 0.0
    %1420 = vmatpush2.msra.mxu0 0.0
    %1421 = vmatprep.subr.mxu0 0.0
    %1422 = vmatpush2.msra.mxu0 0.0
    %1423 = vmatprep.mubr.f32.mxu0 0.0
    %1424 = vmatmul.mubr.f32.gmra.mxu0 %v1357
    %v1425 = vpop.f32.mrf.mxu0
    %v1426 = vadd.f32 0.0, %v1425
    %v1427 = vpop.f32.mrf.mxu0
    %1428 = vdwg.mxu0
    %v1430 = vsel %vm1136, %v1105, 0
    %1432 = vmatprep.subr.mxu0 0.0
    %1433 = vmatpush1.msra.mxu0 0.0
    %1434 = vmatprep.subr.mxu0 0.0
    %1435 = vmatpush1.msra.mxu0 0.0
    %1436 = vmatprep.subr.mxu0 0.0
    %1437 = vmatpush1.msra.mxu0 0.0
    %1438 = vmatprep.subr.mxu0 0.0
    %1439 = vmatpush1.msra.mxu0 0.0
    %1440 = vmatprep.subr.mxu0 0.0
    %1441 = vmatpush1.msra.mxu0 0.0
    %1442 = vmatprep.subr.mxu0 0.0
    %1443 = vmatpush1.msra.mxu0 0.0
    %1444 = vmatprep.subr.mxu0 0.0
    %1445 = vmatpush1.msra.mxu0 0.0
    %1446 = vmatprep.subr.mxu0 0.0
    %1447 = vmatpush1.msra.mxu0 0.0
    %1448 = vmatprep.subr.mxu0 0.0
    %1449 = vmatpush1.msra.mxu0 0.0
    %1450 = vmatprep.subr.mxu0 0.0
    %1451 = vmatpush1.msra.mxu0 0.0
    %1452 = vmatprep.subr.mxu0 0.0
    %1453 = vmatpush1.msra.mxu0 0.0
    %1454 = vmatprep.subr.mxu0 0.0
    %1455 = vmatpush1.msra.mxu0 0.0
    %1456 = vmatprep.subr.mxu0 0.0
    %1457 = vmatpush1.msra.mxu0 0.0
    %1458 = vmatprep.subr.mxu0 0.0
    %1459 = vmatpush1.msra.mxu0 0.0
    %1460 = vmatprep.subr.mxu0 0.0
    %1461 = vmatpush1.msra.mxu0 %v367
    %1462 = vmatprep.subr.mxu0 0.0
    %1463 = vmatpush1.msra.mxu0 %v361
    %1464 = vmatprep.subr.mxu0 0.0
    %1465 = vmatpush2.msra.mxu0 0.0
    %1466 = vmatprep.subr.mxu0 0.0
    %1467 = vmatpush2.msra.mxu0 0.0
    %1468 = vmatprep.subr.mxu0 0.0
    %1469 = vmatpush2.msra.mxu0 0.0
    %1470 = vmatprep.subr.mxu0 0.0
    %1471 = vmatpush2.msra.mxu0 0.0
    %1472 = vmatprep.subr.mxu0 0.0
    %1473 = vmatpush2.msra.mxu0 0.0
    %1474 = vmatprep.subr.mxu0 0.0
    %1475 = vmatpush2.msra.mxu0 0.0
    %1476 = vmatprep.subr.mxu0 0.0
    %1477 = vmatpush2.msra.mxu0 0.0
    %1478 = vmatprep.subr.mxu0 0.0
    %1479 = vmatpush2.msra.mxu0 0.0
    %1480 = vmatprep.subr.mxu0 0.0
    %1481 = vmatpush2.msra.mxu0 0.0
    %1482 = vmatprep.subr.mxu0 0.0
    %1483 = vmatpush2.msra.mxu0 0.0
    %1484 = vmatprep.subr.mxu0 0.0
    %1485 = vmatpush2.msra.mxu0 0.0
    %1486 = vmatprep.subr.mxu0 0.0
    %1487 = vmatpush2.msra.mxu0 0.0
    %1488 = vmatprep.subr.mxu0 0.0
    %1489 = vmatpush2.msra.mxu0 0.0
    %1490 = vmatprep.subr.mxu0 0.0
    %1491 = vmatpush2.msra.mxu0 0.0
    %1492 = vmatprep.subr.mxu0 0.0
    %1493 = vmatpush2.msra.mxu0 0.0
    %1494 = vmatprep.subr.mxu0 0.0
    %1495 = vmatpush2.msra.mxu0 0.0
    %1496 = vmatprep.mubr.f32.mxu0 0.0
    %1497 = vmatmul.mubr.f32.gmra.mxu0 %v1430
    %v1498 = vpop.f32.mrf.mxu0
    %v1499 = vadd.f32 0.0, %v1498
    %v1500 = vpop.f32.mrf.mxu0
    %1501 = vdwg.mxu0
    %v1503 = vsel %vm1136, %v1107, 0
    %1505 = vmatprep.subr.mxu0 0.0
    %1506 = vmatpush1.msra.mxu0 0.0
    %1507 = vmatprep.subr.mxu0 0.0
    %1508 = vmatpush1.msra.mxu0 0.0
    %1509 = vmatprep.subr.mxu0 0.0
    %1510 = vmatpush1.msra.mxu0 0.0
    %1511 = vmatprep.subr.mxu0 0.0
    %1512 = vmatpush1.msra.mxu0 0.0
    %1513 = vmatprep.subr.mxu0 0.0
    %1514 = vmatpush1.msra.mxu0 0.0
    %1515 = vmatprep.subr.mxu0 0.0
    %1516 = vmatpush1.msra.mxu0 0.0
    %1517 = vmatprep.subr.mxu0 0.0
    %1518 = vmatpush1.msra.mxu0 0.0
    %1519 = vmatprep.subr.mxu0 0.0
    %1520 = vmatpush1.msra.mxu0 0.0
    %1521 = vmatprep.subr.mxu0 0.0
    %1522 = vmatpush1.msra.mxu0 0.0
    %1523 = vmatprep.subr.mxu0 0.0
    %1524 = vmatpush1.msra.mxu0 0.0
    %1525 = vmatprep.subr.mxu0 0.0
    %1526 = vmatpush1.msra.mxu0 0.0
    %1527 = vmatprep.subr.mxu0 0.0
    %1528 = vmatpush1.msra.mxu0 0.0
    %1529 = vmatprep.subr.mxu0 0.0
    %1530 = vmatpush1.msra.mxu0 0.0
    %1531 = vmatprep.subr.mxu0 0.0
    %1532 = vmatpush1.msra.mxu0 0.0
    %1533 = vmatprep.subr.mxu0 0.0
    %1534 = vmatpush1.msra.mxu0 %v379
    %1535 = vmatprep.subr.mxu0 0.0
    %1536 = vmatpush1.msra.mxu0 %v373
    %1537 = vmatprep.subr.mxu0 0.0
    %1538 = vmatpush2.msra.mxu0 0.0
    %1539 = vmatprep.subr.mxu0 0.0
    %1540 = vmatpush2.msra.mxu0 0.0
    %1541 = vmatprep.subr.mxu0 0.0
    %1542 = vmatpush2.msra.mxu0 0.0
    %1543 = vmatprep.subr.mxu0 0.0
    %1544 = vmatpush2.msra.mxu0 0.0
    %1545 = vmatprep.subr.mxu0 0.0
    %1546 = vmatpush2.msra.mxu0 0.0
    %1547 = vmatprep.subr.mxu0 0.0
    %1548 = vmatpush2.msra.mxu0 0.0
    %1549 = vmatprep.subr.mxu0 0.0
    %1550 = vmatpush2.msra.mxu0 0.0
    %1551 = vmatprep.subr.mxu0 0.0
    %1552 = vmatpush2.msra.mxu0 0.0
    %1553 = vmatprep.subr.mxu0 0.0
    %1554 = vmatpush2.msra.mxu0 0.0
    %1555 = vmatprep.subr.mxu0 0.0
    %1556 = vmatpush2.msra.mxu0 0.0
    %1557 = vmatprep.subr.mxu0 0.0
    %1558 = vmatpush2.msra.mxu0 0.0
    %1559 = vmatprep.subr.mxu0 0.0
    %1560 = vmatpush2.msra.mxu0 0.0
    %1561 = vmatprep.subr.mxu0 0.0
    %1562 = vmatpush2.msra.mxu0 0.0
    %1563 = vmatprep.subr.mxu0 0.0
    %1564 = vmatpush2.msra.mxu0 0.0
    %1565 = vmatprep.subr.mxu0 0.0
    %1566 = vmatpush2.msra.mxu0 0.0
    %1567 = vmatprep.subr.mxu0 0.0
    %1568 = vmatpush2.msra.mxu0 0.0
    %1569 = vmatprep.mubr.f32.mxu0 0.0
    %1570 = vmatmul.mubr.f32.gmra.mxu0 %v1503
    %v1571 = vpop.f32.mrf.mxu0
    %v1572 = vadd.f32 0.0, %v1571
    %v1573 = vpop.f32.mrf.mxu0
    %1574 = vdwg.mxu0
    %v1576 = vsel %vm1136, %v1109, 0
    %1578 = vmatprep.subr.mxu0 0.0
    %1579 = vmatpush1.msra.mxu0 0.0
    %1580 = vmatprep.subr.mxu0 0.0
    %1581 = vmatpush1.msra.mxu0 0.0
    %1582 = vmatprep.subr.mxu0 0.0
    %1583 = vmatpush1.msra.mxu0 0.0
    %1584 = vmatprep.subr.mxu0 0.0
    %1585 = vmatpush1.msra.mxu0 0.0
    %1586 = vmatprep.subr.mxu0 0.0
    %1587 = vmatpush1.msra.mxu0 0.0
    %1588 = vmatprep.subr.mxu0 0.0
    %1589 = vmatpush1.msra.mxu0 0.0
    %1590 = vmatprep.subr.mxu0 0.0
    %1591 = vmatpush1.msra.mxu0 0.0
    %1592 = vmatprep.subr.mxu0 0.0
    %1593 = vmatpush1.msra.mxu0 0.0
    %1594 = vmatprep.subr.mxu0 0.0
    %1595 = vmatpush1.msra.mxu0 0.0
    %1596 = vmatprep.subr.mxu0 0.0
    %1597 = vmatpush1.msra.mxu0 0.0
    %1598 = vmatprep.subr.mxu0 0.0
    %1599 = vmatpush1.msra.mxu0 0.0
    %1600 = vmatprep.subr.mxu0 0.0
    %1601 = vmatpush1.msra.mxu0 0.0
    %1602 = vmatprep.subr.mxu0 0.0
    %1603 = vmatpush1.msra.mxu0 0.0
    %1604 = vmatprep.subr.mxu0 0.0
    %1605 = vmatpush1.msra.mxu0 0.0
    %1606 = vmatprep.subr.mxu0 0.0
    %1607 = vmatpush1.msra.mxu0 %v391
    %1608 = vmatprep.subr.mxu0 0.0
    %1609 = vmatpush1.msra.mxu0 %v385
    %1610 = vmatprep.subr.mxu0 0.0
    %1611 = vmatpush2.msra.mxu0 0.0
    %1612 = vmatprep.subr.mxu0 0.0
    %1613 = vmatpush2.msra.mxu0 0.0
    %1614 = vmatprep.subr.mxu0 0.0
    %1615 = vmatpush2.msra.mxu0 0.0
    %1616 = vmatprep.subr.mxu0 0.0
    %1617 = vmatpush2.msra.mxu0 0.0
    %1618 = vmatprep.subr.mxu0 0.0
    %1619 = vmatpush2.msra.mxu0 0.0
    %1620 = vmatprep.subr.mxu0 0.0
    %1621 = vmatpush2.msra.mxu0 0.0
    %1622 = vmatprep.subr.mxu0 0.0
    %1623 = vmatpush2.msra.mxu0 0.0
    %1624 = vmatprep.subr.mxu0 0.0
    %1625 = vmatpush2.msra.mxu0 0.0
    %1626 = vmatprep.subr.mxu0 0.0
    %1627 = vmatpush2.msra.mxu0 0.0
    %1628 = vmatprep.subr.mxu0 0.0
    %1629 = vmatpush2.msra.mxu0 0.0
    %1630 = vmatprep.subr.mxu0 0.0
    %1631 = vmatpush2.msra.mxu0 0.0
    %1632 = vmatprep.subr.mxu0 0.0
    %1633 = vmatpush2.msra.mxu0 0.0
    %1634 = vmatprep.subr.mxu0 0.0
    %1635 = vmatpush2.msra.mxu0 0.0
    %1636 = vmatprep.subr.mxu0 0.0
    %1637 = vmatpush2.msra.mxu0 0.0
    %1638 = vmatprep.subr.mxu0 0.0
    %1639 = vmatpush2.msra.mxu0 0.0
    %1640 = vmatprep.subr.mxu0 0.0
    %1641 = vmatpush2.msra.mxu0 0.0
    %1642 = vmatprep.mubr.f32.mxu0 0.0
    %1643 = vmatmul.mubr.f32.gmra.mxu0 %v1576
    %v1644 = vpop.f32.mrf.mxu0
    %v1645 = vadd.f32 0.0, %v1644
    %v1646 = vpop.f32.mrf.mxu0
    %1647 = vdwg.mxu0
    %v1649 = vsel %vm1136, %v1111, 0
    %1651 = vmatprep.subr.mxu0 0.0
    %1652 = vmatpush1.msra.mxu0 0.0
    %1653 = vmatprep.subr.mxu0 0.0
    %1654 = vmatpush1.msra.mxu0 0.0
    %1655 = vmatprep.subr.mxu0 0.0
    %1656 = vmatpush1.msra.mxu0 0.0
    %1657 = vmatprep.subr.mxu0 0.0
    %1658 = vmatpush1.msra.mxu0 0.0
    %1659 = vmatprep.subr.mxu0 0.0
    %1660 = vmatpush1.msra.mxu0 0.0
    %1661 = vmatprep.subr.mxu0 0.0
    %1662 = vmatpush1.msra.mxu0 0.0
    %1663 = vmatprep.subr.mxu0 0.0
    %1664 = vmatpush1.msra.mxu0 0.0
    %1665 = vmatprep.subr.mxu0 0.0
    %1666 = vmatpush1.msra.mxu0 0.0
    %1667 = vmatprep.subr.mxu0 0.0
    %1668 = vmatpush1.msra.mxu0 0.0
    %1669 = vmatprep.subr.mxu0 0.0
    %1670 = vmatpush1.msra.mxu0 0.0
    %1671 = vmatprep.subr.mxu0 0.0
    %1672 = vmatpush1.msra.mxu0 0.0
    %1673 = vmatprep.subr.mxu0 0.0
    %1674 = vmatpush1.msra.mxu0 0.0
    %1675 = vmatprep.subr.mxu0 0.0
    %1676 = vmatpush1.msra.mxu0 0.0
    %1677 = vmatprep.subr.mxu0 0.0
    %1678 = vmatpush1.msra.mxu0 0.0
    %1679 = vmatprep.subr.mxu0 0.0
    %1680 = vmatpush1.msra.mxu0 %v403
    %1681 = vmatprep.subr.mxu0 0.0
    %1682 = vmatpush1.msra.mxu0 %v397
    %1683 = vmatprep.subr.mxu0 0.0
    %1684 = vmatpush2.msra.mxu0 0.0
    %1685 = vmatprep.subr.mxu0 0.0
    %1686 = vmatpush2.msra.mxu0 0.0
    %1687 = vmatprep.subr.mxu0 0.0
    %1688 = vmatpush2.msra.mxu0 0.0
    %1689 = vmatprep.subr.mxu0 0.0
    %1690 = vmatpush2.msra.mxu0 0.0
    %1691 = vmatprep.subr.mxu0 0.0
    %1692 = vmatpush2.msra.mxu0 0.0
    %1693 = vmatprep.subr.mxu0 0.0
    %1694 = vmatpush2.msra.mxu0 0.0
    %1695 = vmatprep.subr.mxu0 0.0
    %1696 = vmatpush2.msra.mxu0 0.0
    %1697 = vmatprep.subr.mxu0 0.0
    %1698 = vmatpush2.msra.mxu0 0.0
    %1699 = vmatprep.subr.mxu0 0.0
    %1700 = vmatpush2.msra.mxu0 0.0
    %1701 = vmatprep.subr.mxu0 0.0
    %1702 = vmatpush2.msra.mxu0 0.0
    %1703 = vmatprep.subr.mxu0 0.0
    %1704 = vmatpush2.msra.mxu0 0.0
    %1705 = vmatprep.subr.mxu0 0.0
    %1706 = vmatpush2.msra.mxu0 0.0
    %1707 = vmatprep.subr.mxu0 0.0
    %1708 = vmatpush2.msra.mxu0 0.0
    %1709 = vmatprep.subr.mxu0 0.0
    %1710 = vmatpush2.msra.mxu0 0.0
    %1711 = vmatprep.subr.mxu0 0.0
    %1712 = vmatpush2.msra.mxu0 0.0
    %1713 = vmatprep.subr.mxu0 0.0
    %1714 = vmatpush2.msra.mxu0 0.0
    %1715 = vmatprep.mubr.f32.mxu0 0.0
    %1716 = vmatmul.mubr.f32.gmra.mxu0 %v1649
    %v1717 = vpop.f32.mrf.mxu0
    %v1718 = vadd.f32 0.0, %v1717
    %v1719 = vpop.f32.mrf.mxu0
    %1720 = vdwg.mxu0
    %v1721 = vrcp.pop %v1114
    %v1722 = vrcp.pop %v1117
    %v1723 = vrcp.pop %v1120
    %v1724 = vrcp.pop %v1123
    %v1725 = vrcp.pop %v1126
    %v1726 = vrcp.pop %v1129
    %v1727 = vrcp.pop %v1132
    %v1728 = vrcp.pop %v1135
    %v1729 = vmul.f32 %v1721, %v95
    %v1730 = vmul.f32 %v1722, %v95
    %v1731 = vmul.f32 %v1723, %v95
    %v1732 = vmul.f32 %v1724, %v95
    %v1733 = vmul.f32 %v1725, %v95
    %v1734 = vmul.f32 %v1726, %v95
    %v1735 = vmul.f32 %v1727, %v95
    %v1736 = vmul.f32 %v1728, %v95
    %v1737 = vmul.f32 %v1207, %v1729
    %v1738 = vmul.f32 %v1280, %v1730
    %v1739 = vmul.f32 %v1353, %v1731
    %v1740 = vmul.f32 %v1426, %v1732
    %v1741 = vmul.f32 %v1499, %v1733
    %v1742 = vmul.f32 %v1572, %v1734
    %v1743 = vmul.f32 %v1645, %v1735
    %v1744 = vmul.f32 %v1718, %v1736
    %vm1745 = vcmask 1043456
    %v1746 = vsel %vm1745, %v1737, 0.0
    %v1747 = vrot.slane %v1746, 4
    %v1748 = vadd.f32 %v1746, %v1747
    %v1749 = vrot.slane %v1748, 2
    %v1750 = vadd.f32 %v1748, %v1749
    %v1751 = vrot.slane %v1750, 1
    %v1752 = vadd.f32 %v1750, %v1751
    %v1753 = vsel %vm1745, %v1738, 0.0
    %v1754 = vrot.slane %v1753, 4
    %v1755 = vadd.f32 %v1753, %v1754
    %v1756 = vrot.slane %v1755, 2
    %v1757 = vadd.f32 %v1755, %v1756
    %v1758 = vrot.slane %v1757, 1
    %v1759 = vadd.f32 %v1757, %v1758
    %v1760 = vsel %vm1745, %v1739, 0.0
    %v1761 = vrot.slane %v1760, 4
    %v1762 = vadd.f32 %v1760, %v1761
    %v1763 = vrot.slane %v1762, 2
    %v1764 = vadd.f32 %v1762, %v1763
    %v1765 = vrot.slane %v1764, 1
    %v1766 = vadd.f32 %v1764, %v1765
    %v1767 = vsel %vm1745, %v1740, 0.0
    %v1768 = vrot.slane %v1767, 4
    %v1769 = vadd.f32 %v1767, %v1768
    %v1770 = vrot.slane %v1769, 2
    %v1771 = vadd.f32 %v1769, %v1770
    %v1772 = vrot.slane %v1771, 1
    %v1773 = vadd.f32 %v1771, %v1772
    %v1774 = vsel %vm1745, %v1741, 0.0
    %v1775 = vrot.slane %v1774, 4
    %v1776 = vadd.f32 %v1774, %v1775
    %v1777 = vrot.slane %v1776, 2
    %v1778 = vadd.f32 %v1776, %v1777
    %v1779 = vrot.slane %v1778, 1
    %v1780 = vadd.f32 %v1778, %v1779
    %v1781 = vsel %vm1745, %v1742, 0.0
    %v1782 = vrot.slane %v1781, 4
    %v1783 = vadd.f32 %v1781, %v1782
    %v1784 = vrot.slane %v1783, 2
    %v1785 = vadd.f32 %v1783, %v1784
    %v1786 = vrot.slane %v1785, 1
    %v1787 = vadd.f32 %v1785, %v1786
    %v1788 = vsel %vm1745, %v1743, 0.0
    %v1789 = vrot.slane %v1788, 4
    %v1790 = vadd.f32 %v1788, %v1789
    %v1791 = vrot.slane %v1790, 2
    %v1792 = vadd.f32 %v1790, %v1791
    %v1793 = vrot.slane %v1792, 1
    %v1794 = vadd.f32 %v1792, %v1793
    %v1795 = vsel %vm1745, %v1744, 0.0
    %v1796 = vrot.slane %v1795, 4
    %v1797 = vadd.f32 %v1795, %v1796
    %v1798 = vrot.slane %v1797, 2
    %v1799 = vadd.f32 %v1797, %v1798
    %v1800 = vrot.slane %v1799, 1
    %v1801 = vadd.f32 %v1799, %v1800
    %v1802 = vld [vmem:[#allocation8] sm:$0xff]
    %v1803 = vld [vmem:[#allocation8 + $0x8] sm:$0xff]
    %v1804 = vld [vmem:[#allocation8 + $0x10] sm:$0xff]
    %v1805 = vld [vmem:[#allocation8 + $0x18] sm:$0xff]
    %v1806 = vld [vmem:[#allocation8 + $0x20] sm:$0xff]
    %v1807 = vld [vmem:[#allocation8 + $0x28] sm:$0xff]
    %v1808 = vld [vmem:[#allocation8 + $0x30] sm:$0xff]
    %v1809 = vld [vmem:[#allocation8 + $0x38] sm:$0xff]
    %v1810 = vld [vmem:[#allocation8 + $0x40] sm:$0xff]
    %v1811 = vld [vmem:[#allocation8 + $0x48] sm:$0xff]
    %v1812 = vld [vmem:[#allocation8 + $0x50] sm:$0xff]
    %v1813 = vld [vmem:[#allocation8 + $0x58] sm:$0xff]
    %v1814 = vld [vmem:[#allocation8 + $0x60] sm:$0xff]
    %v1815 = vld [vmem:[#allocation8 + $0x68] sm:$0xff]
    %v1816 = vld [vmem:[#allocation8 + $0x70] sm:$0xff]
    %v1817 = vld [vmem:[#allocation8 + $0x78] sm:$0xff]
    %v1818 = vld [vmem:[%s4] sm:$0x1]
    %v1820 = vlaneseq
    %v1821 = vshrl.u32 %v1820, 7
    %v1822 = vsub.s32 0, %v1821
    %v1823 = vrot.slane %v1818, %v1822
    %v1833 = vsel %vm121, %v1759, %v1752
    %v1834 = vsel %vm124, %v1766, %v1833
    %v1835 = vsel %vm127, %v1773, %v1834
    %v1836 = vsel %vm130, %v1780, %v1835
    %v1837 = vsel %vm133, %v1787, %v1836
    %v1838 = vsel %vm136, %v1794, %v1837
    %v1839 = vsel %vm139, %v1801, %v1838
    %1841 = vmatprep.subr.mxu0 0.0
    %1842 = vmatpush1.msra.mxu0 %v1817
    %1843 = vmatprep.subr.mxu0 0.0
    %1844 = vmatpush1.msra.mxu0 %v1816
    %1845 = vmatprep.subr.mxu0 0.0
    %1846 = vmatpush1.msra.mxu0 %v1815
    %1847 = vmatprep.subr.mxu0 0.0
    %1848 = vmatpush1.msra.mxu0 %v1814
    %1849 = vmatprep.subr.mxu0 0.0
    %1850 = vmatpush1.msra.mxu0 %v1813
    %1851 = vmatprep.subr.mxu0 0.0
    %1852 = vmatpush1.msra.mxu0 %v1812
    %1853 = vmatprep.subr.mxu0 0.0
    %1854 = vmatpush1.msra.mxu0 %v1811
    %1855 = vmatprep.subr.mxu0 0.0
    %1856 = vmatpush1.msra.mxu0 %v1810
    %1857 = vmatprep.subr.mxu0 0.0
    %1858 = vmatpush1.msra.mxu0 %v1809
    %1859 = vmatprep.subr.mxu0 0.0
    %1860 = vmatpush1.msra.mxu0 %v1808
    %1861 = vmatprep.subr.mxu0 0.0
    %1862 = vmatpush1.msra.mxu0 %v1807
    %1863 = vmatprep.subr.mxu0 0.0
    %1864 = vmatpush1.msra.mxu0 %v1806
    %1865 = vmatprep.subr.mxu0 0.0
    %1866 = vmatpush1.msra.mxu0 %v1805
    %1867 = vmatprep.subr.mxu0 0.0
    %1868 = vmatpush1.msra.mxu0 %v1804
    %1869 = vmatprep.subr.mxu0 0.0
    %1870 = vmatpush1.msra.mxu0 %v1803
    %1871 = vmatprep.subr.mxu0 0.0
    %1872 = vmatpush1.msra.mxu0 %v1802
    %1873 = vmatprep.subr.mxu0 0.0
    %1874 = vmatpush2.msra.mxu0 0.0
    %1875 = vmatprep.subr.mxu0 0.0
    %1876 = vmatpush2.msra.mxu0 0.0
    %1877 = vmatprep.subr.mxu0 0.0
    %1878 = vmatpush2.msra.mxu0 0.0
    %1879 = vmatprep.subr.mxu0 0.0
    %1880 = vmatpush2.msra.mxu0 0.0
    %1881 = vmatprep.subr.mxu0 0.0
    %1882 = vmatpush2.msra.mxu0 0.0
    %1883 = vmatprep.subr.mxu0 0.0
    %1884 = vmatpush2.msra.mxu0 0.0
    %1885 = vmatprep.subr.mxu0 0.0
    %1886 = vmatpush2.msra.mxu0 0.0
    %1887 = vmatprep.subr.mxu0 0.0
    %1888 = vmatpush2.msra.mxu0 0.0
    %1889 = vmatprep.subr.mxu0 0.0
    %1890 = vmatpush2.msra.mxu0 0.0
    %1891 = vmatprep.subr.mxu0 0.0
    %1892 = vmatpush2.msra.mxu0 0.0
    %1893 = vmatprep.subr.mxu0 0.0
    %1894 = vmatpush2.msra.mxu0 0.0
    %1895 = vmatprep.subr.mxu0 0.0
    %1896 = vmatpush2.msra.mxu0 0.0
    %1897 = vmatprep.subr.mxu0 0.0
    %1898 = vmatpush2.msra.mxu0 0.0
    %1899 = vmatprep.subr.mxu0 0.0
    %1900 = vmatpush2.msra.mxu0 0.0
    %1901 = vmatprep.subr.mxu0 0.0
    %1902 = vmatpush2.msra.mxu0 0.0
    %1903 = vmatprep.subr.mxu0 0.0
    %1904 = vmatpush2.msra.mxu0 0.0
    %1905 = vmatprep.mubr.f32.mxu0 0.0
    %1906 = vmatmul.mubr.f32.gmra.mxu0 %v1839
    %v1907 = vpop.f32.mrf.mxu0
    %v1908 = vadd.f32 %v1823, %v1907
    %v1909 = vpop.f32.mrf.mxu0
    %1910 = vdwg.mxu0
    %1911 = vst [vmem:[#allocation10] sm:$0xff] %v1908
    // Predicated region
    $region42: #{tpu_custom_call.1} parent=1 // pred_check
      _
    $region43: #{tpu_custom_call.1} parent=1 // pred_check_branch
      %1913 = sbr.rel (0) target = $region45
    $region44: #{tpu_custom_call.1} parent=1 // pred_region
      %s1915 = ssub.s32 128, 128
      %1916 = vsyncadd [#allocation4], %s1915
      %s1918 = sshll.u32 [#allocation10], 4
      %s1919 = int_to_ptr.vmem [resolvable:$true] %s1918
      %1921 = dma.vmem_to_hbm [thread:$0]  %s1919, 128, %s6, [#allocation4]
    $region45: #{tpu_custom_call.1} parent=1 // pred_fallthru
      _
    // Predicated region
    $region46: #{tpu_custom_call.1} parent=1 // pred_check
      _
    $region47: #{tpu_custom_call.1} parent=1 // pred_check_branch
      %1923 = sbr.rel (0) target = $region49
    $region48: #{tpu_custom_call.1} parent=1 // pred_region
      %1924 = dma.done [#allocation4], 128
    $region49: #{tpu_custom_call.1} parent=1 // pred_fallthru
      _
    %1925 = vsyncpa [#allocation3], 1
    %1926 = vsyncpa [#allocation6], 1
    %1927 = vsyncpa [#allocation9], 1
    %1928 = vsyncpa [#allocation4], 1

</llo_original>
